<compile_context>
chip_gen: v5e
topology: v5e:2x2
jax: 0.10.0
libtpu: 0.0.40
codegen_flags: <defaults>
</compile_context>

<pallas_src>
import functools

import jax
import jax.numpy as jnp
from jax import lax
from jax.experimental import pallas as pl
from jax.experimental.pallas import tpu as pltpu

GROUPS = 32
EPS = 1e-6


def _silu(x):
    # exp and the approximate reciprocal both run on the EUP slot, freeing VALU slots.
    return x * pl.reciprocal(1.0 + jnp.exp(-x), approx=True)


def _resnet_block_kernel(has_shortcut, W, pad_rows,
                         x_ref, gn1_g_ref, gn1_b_ref, grp1_ref, w1_ref, cb1_ref,
                         gn2_g_ref, gn2_b_ref, grp2_ref, w2_ref, cb2_ref,
                         *rest):
    if has_shortcut:
        ws_ref, sb_ref, o_ref, hpad_ref = rest
    else:
        o_ref, hpad_ref = rest

    Cin = x_ref.shape[1]
    HW = x_ref.shape[2]
    Cout = w1_ref.shape[1]
    inv_hw = 1.0 / HW

    # NCHW block arrives as (Cin, HW); relayout to channels-on-lanes in VMEM (no HBM cost).
    x = jnp.transpose(x_ref[0].astype(jnp.float32))                    # (HW, Cin) f32

    # ---- GroupNorm1 (affine) + SiLU --------------------------------------------------
    # Per-channel spatial sums, then a single (2,C)x(C,C) "group averaging" matmul gives
    # [group mean ; group E[x^2]] per channel.
    # NOTE: var = E[x^2]-E[x]^2 in f32 (cancellation-prone if magnitudes grow a lot).
    st = jnp.concatenate([jnp.sum(x, axis=0, keepdims=True),
                          jnp.sum(x * x, axis=0, keepdims=True)], axis=0) * inv_hw
    st = jnp.dot(st, grp1_ref[...], preferred_element_type=jnp.float32)    # (2, Cin)
    mean1 = st[0:1, :]
    rstd1 = lax.rsqrt(st[1:2, :] - mean1 * mean1 + EPS)
    h = _silu((x - mean1) * rstd1 * gn1_g_ref[...] + gn1_b_ref[...])

    # ---- conv1: 1x1 conv == (HW,Cin)x(Cin,Cout) matmul, bf16 in / f32 acc -------------
    h = jnp.dot(h.astype(jnp.bfloat16), w1_ref[...],
                preferred_element_type=jnp.float32) + cb1_ref[...]         # (HW, Cout)

    # ---- GroupNorm2 (affine) + SiLU   (Dropout is identity at inference) --------------
    # TODO(synk): training-mode dropout (RNG mask) not implemented; eval semantics only.
    st = jnp.concatenate([jnp.sum(h, axis=0, keepdims=True),
                          jnp.sum(h * h, axis=0, keepdims=True)], axis=0) * inv_hw
    st = jnp.dot(st, grp2_ref[...], preferred_element_type=jnp.float32)
    mean2 = st[0:1, :]
    rstd2 = lax.rsqrt(st[1:2, :] - mean2 * mean2 + EPS)
    h = _silu((h - mean2) * rstd2 * gn2_g_ref[...] + gn2_b_ref[...])       # (HW, Cout) f32

    # ---- conv2: 3x3, stride 1, pad 1 as ONE im2col matmul (K = 9*Cout) ----------------
    # Flat layout: pad_rows zero rows above and below the HW pixel rows.  Tap (kh,kw)
    # is then a row-shifted slice; vertical out-of-image reads land in the zero rows,
    # only the W-boundary columns of the kw=0 / kw=2 taps need masking.
    # (Pad zeroing is done every grid step on purpose: with "parallel" semantics each
    #  TensorCore has its own scratch, so a first-step-only zero would be wrong.)
    hpad_ref[0:pad_rows, :] = jnp.zeros((pad_rows, Cout), jnp.float32)
    hpad_ref[pad_rows + HW:pad_rows + HW + pad_rows, :] = (
        jnp.zeros((pad_rows, Cout), jnp.float32))
    hpad_ref[pad_rows:pad_rows + HW, :] = h

    col = lax.broadcasted_iota(jnp.int32, (HW, 1), 0) % W
    not_left = col != 0
    not_right = col != (W - 1)

    taps = []
    for kh in range(3):
        for kw in range(3):
            start = pad_rows + (kh - 1) * W + (kw - 1)
            t = hpad_ref[start:start + HW, :]
            if kw == 0:
                t = jnp.where(not_left, t, 0.0)
            elif kw == 2:
                t = jnp.where(not_right, t, 0.0)
            taps.append(t.astype(jnp.bfloat16))
    slab = jnp.concatenate(taps, axis=1)                                   # (HW, 9*Cout)
    h = jnp.dot(slab, w2_ref[...], preferred_element_type=jnp.float32)     # (HW, Cout)

    # ---- shortcut + residual (conv2 bias added once; no materialized accumulator) -----
    if has_shortcut:
        xs = jnp.dot(x.astype(jnp.bfloat16), ws_ref[...],
                     preferred_element_type=jnp.float32) + sb_ref[...]
    else:
        xs = x                                                             # Cin == Cout
    out = xs + h + cb2_ref[...]
    o_ref[0] = jnp.transpose(out).astype(o_ref.dtype)                      # (Cout, HW)


def _group_matrix(C, groups=GROUPS):
    """M[i,j] = 1/g if channels i and j share a GroupNorm group, else 0."""
    g = C // groups
    gid = jnp.arange(C) // g
    return (gid[:, None] == gid[None, :]).astype(jnp.float32) / float(g)


def project_resnet_block_forward(x_nchw, params):
    """NCHW in -> NCHW out (output dtype follows the input dtype).

    Matches ProjectResnetBlock._forward in eval mode.  params use JAX layouts:
      gn1_gamma/gn1_beta: (Cin,)   w1: (Cin, Cout)          cb1: (Cout,)
      gn2_gamma/gn2_beta: (Cout,)  w2: (3, 3, Cout, Cout)   cb2: (Cout,)
      optional ws: (Cin, Cout), sb: (Cout,)  -- nin_shortcut, used when Cin != Cout.
    """
    N, Cin, H, W = x_nchw.shape
    Cout = params["w1"].shape[-1]
    HW = H * W
    has_shortcut = "ws" in params            # nin_shortcut (1x1) when Cin != Cout
    # TODO(synk): conv_shortcut=True (3x3 shortcut) variant not implemented (default False).
    pad_rows = -(-(W + 1) // 8) * 8          # zero rows above/below the flat image, 8-aligned

    x_flat = x_nchw.reshape(N, Cin, HW)      # free view; no HBM relayout
    itemsize = jnp.dtype(x_nchw.dtype).itemsize

    def row(v):
        return v.reshape(1, -1).astype(jnp.float32)

    w2_flat = params["w2"].reshape(9 * Cout, Cout).astype(jnp.bfloat16)

    args = [
        x_flat,
        row(params["gn1_gamma"]), row(params["gn1_beta"]), _group_matrix(Cin),
        params["w1"].astype(jnp.bfloat16), row(params["cb1"]),
        row(params["gn2_gamma"]), row(params["gn2_beta"]), _group_matrix(Cout),
        w2_flat, row(params["cb2"]),
    ]

    def const(shape):
        return pl.BlockSpec(shape, lambda n: (0,) * len(shape))

    in_specs = [
        pl.BlockSpec((1, Cin, HW), lambda n: (n, 0, 0)),
        const((1, Cin)), const((1, Cin)), const((Cin, Cin)),
        const((Cin, Cout)), const((1, Cout)),
        const((1, Cout)), const((1, Cout)), const((Cout, Cout)),
        const((9 * Cout, Cout)), const((1, Cout)),
    ]
    if has_shortcut:
        args += [params["ws"].astype(jnp.bfloat16), row(params["sb"])]
        in_specs += [const((Cin, Cout)), const((1, Cout))]

    # Cost hint so XLA schedules surrounding ops around the custom call sensibly.
    mm_flops = 2 * HW * (Cin * Cout + 9 * Cout * Cout)
    if has_shortcut:
        mm_flops += 2 * HW * Cin * Cout
    cost = pl.CostEstimate(
        flops=N * mm_flops,
        transcendentals=2 * N * HW * (Cin + Cout),
        bytes_accessed=N * HW * (Cin + Cout) * itemsize
        + (9 * Cout * Cout + 2 * Cin * Cout) * 2,
    )

    # Explicit VMEM budget: double-buffered in/out blocks + bf16 weights + pad scratch
    # + live intermediates, clamped so it never exceeds v7x's 64 MiB physical VMEM.
    # TODO(synk): production shapes on v7x need spatial band tiling + two-pass GroupNorm;
    # whole-image-per-grid-step tiling here is sized for small/medium images.
    est = (2 * (Cin + Cout) * HW * itemsize
           + 2 * (9 * Cout * Cout + 2 * Cin * Cout) * 2
           + 2 * (Cin * Cin + Cout * Cout) * 4
           + (HW + 2 * pad_rows) * Cout * 4
           + HW * 9 * Cout * 2
           + HW * (Cin + 3 * Cout) * 4)
    vmem_limit = int(min(max(2 * est, 32 * 1024 * 1024), 64 * 1024 * 1024))

    out_flat = pl.pallas_call(
        functools.partial(_resnet_block_kernel, has_shortcut, W, pad_rows),
        out_shape=jax.ShapeDtypeStruct((N, Cout, HW), x_nchw.dtype),
        grid=(N,),
        in_specs=in_specs,
        out_specs=pl.BlockSpec((1, Cout, HW), lambda n: (n, 0, 0)),
        scratch_shapes=[pltpu.VMEM((HW + 2 * pad_rows, Cout), jnp.float32)],
        compiler_params=pltpu.CompilerParams(
            dimension_semantics=("parallel",),
            vmem_limit_bytes=vmem_limit),
        cost_estimate=cost,
    )(*args)
    return out_flat.reshape(N, Cout, H, W)


# -----------------------------------------------------------------------------------
# Pure-JAX reference (correctness check only).
# -----------------------------------------------------------------------------------
def _reference(x_nchw, params):
    x = jnp.transpose(x_nchw, (0, 2, 3, 1)).astype(jnp.float32)    # NHWC

    def group_norm(t, gamma, beta):
        Nn, Hh, Ww, C = t.shape
        g = C // GROUPS
        tr = t.reshape(Nn, Hh, Ww, GROUPS, g)
        mean = tr.mean(axis=(1, 2, 4), keepdims=True)
        var = ((tr - mean) ** 2).mean(axis=(1, 2, 4), keepdims=True)
        tn = ((tr - mean) / jnp.sqrt(var + EPS)).reshape(Nn, Hh, Ww, C)
        return tn * gamma[None, None, None, :] + beta[None, None, None, :]

    def silu(t):
        return t * jax.nn.sigmoid(t)

    h = silu(group_norm(x, params["gn1_gamma"], params["gn1_beta"]))
    h = jnp.einsum("nhwc,cd->nhwd", h, params["w1"]) + params["cb1"]
    h = silu(group_norm(h, params["gn2_gamma"], params["gn2_beta"]))
    h = lax.conv_general_dilated(
        h, params["w2"], window_strides=(1, 1), padding="SAME",
        dimension_numbers=("NHWC", "HWIO", "NHWC")) + params["cb2"]
    if "ws" in params:
        xs = jnp.einsum("nhwc,cd->nhwd", x, params["ws"]) + params["sb"]
    else:
        xs = x
    return jnp.transpose(xs + h, (0, 3, 1, 2))


if __name__ == "__main__":
    key = jax.random.PRNGKey(0)
    keys = jax.random.split(key, 12)

    # GroupNorm(32, C) requires C % 32 == 0, so the smallest sensible channels are 32/64.
    N, Cin, Cout, H, W = 2, 32, 64, 16, 16
    x = jax.random.normal(keys[0], (N, Cin, H, W), dtype=jnp.float32)

    params = {
        "gn1_gamma": 1.0 + 0.1 * jax.random.normal(keys[1], (Cin,), jnp.float32),
        "gn1_beta": 0.1 * jax.random.normal(keys[2], (Cin,), jnp.float32),
        "w1": 0.1 * jax.random.normal(keys[3], (Cin, Cout), jnp.float32),
        "cb1": 0.1 * jax.random.normal(keys[4], (Cout,), jnp.float32),
        "gn2_gamma": 1.0 + 0.1 * jax.random.normal(keys[5], (Cout,), jnp.float32),
        "gn2_beta": 0.1 * jax.random.normal(keys[6], (Cout,), jnp.float32),
        "w2": 0.05 * jax.random.normal(keys[7], (3, 3, Cout, Cout), jnp.float32),
        "cb2": 0.1 * jax.random.normal(keys[8], (Cout,), jnp.float32),
        "ws": 0.1 * jax.random.normal(keys[9], (Cin, Cout), jnp.float32),   # nin_shortcut
        "sb": 0.1 * jax.random.normal(keys[10], (Cout,), jnp.float32),
    }

    # 1) in_channels != out_channels  (nin_shortcut path), f32 activations
    out = jax.block_until_ready(project_resnet_block_forward(x, params))
    ref = _reference(x, params)
    assert out.shape == (N, Cout, H, W) and out.dtype == x.dtype
    assert jnp.allclose(out, ref, rtol=5e-2, atol=5e-2), \
        float(jnp.max(jnp.abs(out - ref)))

    # 2) in_channels == out_channels  (identity shortcut path)
    params_id = {k: v for k, v in params.items() if k not in ("ws", "sb")}
    params_id["w1"] = 0.1 * jax.random.normal(keys[11], (Cin, Cin), jnp.float32)
    params_id["cb1"] = params["cb1"][:Cin]
    params_id["gn2_gamma"] = params["gn2_gamma"][:Cin]
    params_id["gn2_beta"] = params["gn2_beta"][:Cin]
    params_id["w2"] = params["w2"][:, :, :Cin, :Cin]
    params_id["cb2"] = params["cb2"][:Cin]
    out_id = jax.block_until_ready(project_resnet_block_forward(x, params_id))
    ref_id = _reference(x, params_id)
    assert out_id.shape == (N, Cin, H, W)
    assert jnp.allclose(out_id, ref_id, rtol=5e-2, atol=5e-2), \
        float(jnp.max(jnp.abs(out_id - ref_id)))

    # 3) bf16 activations across the pallas_call boundary (dtype passthrough, bf16 I/O)
    out_bf = jax.block_until_ready(
        project_resnet_block_forward(x.astype(jnp.bfloat16), params))
    assert out_bf.shape == (N, Cout, H, W) and out_bf.dtype == jnp.bfloat16
    assert jnp.allclose(out_bf.astype(jnp.float32), ref, rtol=1e-1, atol=1e-1), \
        float(jnp.max(jnp.abs(out_bf.astype(jnp.float32) - ref)))

    print("KERNEL_OK")
</pallas_src>

<mosaic_0001>
module attributes {stable_mosaic.version = 11 : i64} {
  func.func @_resnet_block_kernel(%arg0: i32, %arg1: memref<1x32x256xf32, #tpu.memory_space<vmem>>, %arg2: memref<1x32xf32, #tpu.memory_space<vmem>>, %arg3: memref<1x32xf32, #tpu.memory_space<vmem>>, %arg4: memref<32x32xf32, #tpu.memory_space<vmem>>, %arg5: memref<32x64xbf16, #tpu.memory_space<vmem>>, %arg6: memref<1x64xf32, #tpu.memory_space<vmem>>, %arg7: memref<1x64xf32, #tpu.memory_space<vmem>>, %arg8: memref<1x64xf32, #tpu.memory_space<vmem>>, %arg9: memref<64x64xf32, #tpu.memory_space<vmem>>, %arg10: memref<576x64xbf16, #tpu.memory_space<vmem>>, %arg11: memref<1x64xf32, #tpu.memory_space<vmem>>, %arg12: memref<32x64xbf16, #tpu.memory_space<vmem>>, %arg13: memref<1x64xf32, #tpu.memory_space<vmem>>, %arg14: memref<1x64x256xf32, #tpu.memory_space<vmem>>, %arg15: memref<304x64xf32, #tpu.memory_space<vmem>>) attributes {dimension_semantics = [#tpu.dimension_semantics<parallel>], iteration_bounds = array<i64: 2>, scalar_prefetch = 0 : i64, scratch_operands = 1 : i64, tpu.core_type = #tpu.core_type<tc>, window_params = [{transform_indices = @transform_0, window_bounds = array<i64: 1, 32, 256>}, {pipeline_mode = #tpu.pipeline_mode<synchronous>, transform_indices = @transform_1, window_bounds = array<i64: 1, 32>}, {pipeline_mode = #tpu.pipeline_mode<synchronous>, transform_indices = @transform_2, window_bounds = array<i64: 1, 32>}, {pipeline_mode = #tpu.pipeline_mode<synchronous>, transform_indices = @transform_3, window_bounds = array<i64: 32, 32>}, {pipeline_mode = #tpu.pipeline_mode<synchronous>, transform_indices = @transform_4, window_bounds = array<i64: 32, 64>}, {pipeline_mode = #tpu.pipeline_mode<synchronous>, transform_indices = @transform_5, window_bounds = array<i64: 1, 64>}, {pipeline_mode = #tpu.pipeline_mode<synchronous>, transform_indices = @transform_6, window_bounds = array<i64: 1, 64>}, {pipeline_mode = #tpu.pipeline_mode<synchronous>, transform_indices = @transform_7, window_bounds = array<i64: 1, 64>}, {pipeline_mode = #tpu.pipeline_mode<synchronous>, transform_indices = @transform_8, window_bounds = array<i64: 64, 64>}, {pipeline_mode = #tpu.pipeline_mode<synchronous>, transform_indices = @transform_9, window_bounds = array<i64: 576, 64>}, {pipeline_mode = #tpu.pipeline_mode<synchronous>, transform_indices = @transform_10, window_bounds = array<i64: 1, 64>}, {pipeline_mode = #tpu.pipeline_mode<synchronous>, transform_indices = @transform_11, window_bounds = array<i64: 32, 64>}, {pipeline_mode = #tpu.pipeline_mode<synchronous>, transform_indices = @transform_12, window_bounds = array<i64: 1, 64>}, {transform_indices = @transform_13, window_bounds = array<i64: 1, 64, 256>}]} {
    %c0 = arith.constant 0 : index
    %c0_0 = arith.constant 0 : index
    %c0_1 = arith.constant 0 : index
    %0 = vector.load %arg1[%c0, %c0_0, %c0_1] : memref<1x32x256xf32, #tpu.memory_space<vmem>>, vector<1x32x256xf32>
    %1 = vector.shape_cast %0 : vector<1x32x256xf32> to vector<32x256xf32>
    %2 = tpu.transpose %1, [1, 0] : vector<32x256xf32> -> vector<256x32xf32>
    %cst = arith.constant dense<0.000000e+00> : vector<32xf32>
    %3 = vector.multi_reduction <add>, %2, %cst [0] : vector<256x32xf32> to vector<32xf32>
    %4 = vector.shape_cast %3 : vector<32xf32> to vector<1x32xf32>
    %5 = arith.mulf %2, %2 : vector<256x32xf32>
    %cst_2 = arith.constant dense<0.000000e+00> : vector<32xf32>
    %6 = vector.multi_reduction <add>, %5, %cst_2 [0] : vector<256x32xf32> to vector<32xf32>
    %7 = vector.shape_cast %6 : vector<32xf32> to vector<1x32xf32>
    %8 = tpu.concatenate %4, %7 in 0 : vector<1x32xf32>, vector<1x32xf32> -> vector<2x32xf32>
    %cst_3 = arith.constant 3.906250e-03 : f32
    %9 = vector.broadcast %cst_3 : f32 to vector<2x32xf32>
    %10 = arith.mulf %8, %9 : vector<2x32xf32>
    %c0_4 = arith.constant 0 : index
    %c0_5 = arith.constant 0 : index
    %11 = vector.load %arg4[%c0_4, %c0_5] : memref<32x32xf32, #tpu.memory_space<vmem>>, vector<32x32xf32>
    %cst_6 = arith.constant dense<0.000000e+00> : vector<2x32xf32>
    %12 = tpu.matmul %10, %11, %cst_6 {dimension_numbers = #tpu.dot_dimension_numbers<[1], [0], [0], [1], [0, 0, 1, 1], [], []>} : vector<2x32xf32>, vector<32x32xf32>, vector<2x32xf32> -> vector<2x32xf32>
    %13 = vector.extract_strided_slice %12 {offsets = [0, 0], sizes = [1, 32], strides = [1, 1]} : vector<2x32xf32> to vector<1x32xf32>
    %14 = vector.extract_strided_slice %12 {offsets = [1, 0], sizes = [1, 32], strides = [1, 1]} : vector<2x32xf32> to vector<1x32xf32>
    %15 = arith.mulf %13, %13 : vector<1x32xf32>
    %16 = arith.subf %14, %15 : vector<1x32xf32>
    %cst_7 = arith.constant 9.99999997E-7 : f32
    %17 = vector.broadcast %cst_7 : f32 to vector<1x32xf32>
    %18 = arith.addf %16, %17 : vector<1x32xf32>
    %19 = math.rsqrt %18 : vector<1x32xf32>
    %20 = vector.broadcast %13 : vector<1x32xf32> to vector<256x32xf32>
    %21 = arith.subf %2, %20 : vector<256x32xf32>
    %22 = vector.broadcast %19 : vector<1x32xf32> to vector<256x32xf32>
    %23 = arith.mulf %21, %22 : vector<256x32xf32>
    %c0_8 = arith.constant 0 : index
    %c0_9 = arith.constant 0 : index
    %24 = vector.load %arg2[%c0_8, %c0_9] : memref<1x32xf32, #tpu.memory_space<vmem>>, vector<1x32xf32>
    %25 = vector.broadcast %24 : vector<1x32xf32> to vector<256x32xf32>
    %26 = arith.mulf %23, %25 : vector<256x32xf32>
    %c0_10 = arith.constant 0 : index
    %c0_11 = arith.constant 0 : index
    %27 = vector.load %arg3[%c0_10, %c0_11] : memref<1x32xf32, #tpu.memory_space<vmem>>, vector<1x32xf32>
    %28 = vector.broadcast %27 : vector<1x32xf32> to vector<256x32xf32>
    %29 = arith.addf %26, %28 : vector<256x32xf32>
    %cst_12 = arith.constant 0.000000e+00 : f32
    %30 = vector.broadcast %cst_12 : f32 to vector<256x32xf32>
    %31 = arith.subf %30, %29 : vector<256x32xf32>
    %32 = math.exp %31 : vector<256x32xf32>
    %cst_13 = arith.constant 1.000000e+00 : f32
    %33 = vector.broadcast %cst_13 : f32 to vector<256x32xf32>
    %34 = arith.addf %33, %32 : vector<256x32xf32>
    %35 = tpu.reciprocal %34 {approx = true} : vector<256x32xf32> -> vector<256x32xf32>
    %36 = arith.mulf %29, %35 : vector<256x32xf32>
    %37 = arith.truncf %36 : vector<256x32xf32> to vector<256x32xbf16>
    %c0_14 = arith.constant 0 : index
    %c0_15 = arith.constant 0 : index
    %38 = vector.load %arg5[%c0_14, %c0_15] : memref<32x64xbf16, #tpu.memory_space<vmem>>, vector<32x64xbf16>
    %cst_16 = arith.constant dense<0.000000e+00> : vector<256x64xf32>
    %39 = tpu.matmul %37, %38, %cst_16 {dimension_numbers = #tpu.dot_dimension_numbers<[1], [0], [0], [1], [0, 0, 1, 1], [], []>} : vector<256x32xbf16>, vector<32x64xbf16>, vector<256x64xf32> -> vector<256x64xf32>
    %c0_17 = arith.constant 0 : index
    %c0_18 = arith.constant 0 : index
    %40 = vector.load %arg6[%c0_17, %c0_18] : memref<1x64xf32, #tpu.memory_space<vmem>>, vector<1x64xf32>
    %41 = vector.broadcast %40 : vector<1x64xf32> to vector<256x64xf32>
    %42 = arith.addf %39, %41 : vector<256x64xf32>
    %cst_19 = arith.constant dense<0.000000e+00> : vector<64xf32>
    %43 = vector.multi_reduction <add>, %42, %cst_19 [0] : vector<256x64xf32> to vector<64xf32>
    %44 = vector.shape_cast %43 : vector<64xf32> to vector<1x64xf32>
    %45 = arith.mulf %42, %42 : vector<256x64xf32>
    %cst_20 = arith.constant dense<0.000000e+00> : vector<64xf32>
    %46 = vector.multi_reduction <add>, %45, %cst_20 [0] : vector<256x64xf32> to vector<64xf32>
    %47 = vector.shape_cast %46 : vector<64xf32> to vector<1x64xf32>
    %48 = tpu.concatenate %44, %47 in 0 : vector<1x64xf32>, vector<1x64xf32> -> vector<2x64xf32>
    %cst_21 = arith.constant 3.906250e-03 : f32
    %49 = vector.broadcast %cst_21 : f32 to vector<2x64xf32>
    %50 = arith.mulf %48, %49 : vector<2x64xf32>
    %c0_22 = arith.constant 0 : index
    %c0_23 = arith.constant 0 : index
    %51 = vector.load %arg9[%c0_22, %c0_23] : memref<64x64xf32, #tpu.memory_space<vmem>>, vector<64x64xf32>
    %cst_24 = arith.constant dense<0.000000e+00> : vector<2x64xf32>
    %52 = tpu.matmul %50, %51, %cst_24 {dimension_numbers = #tpu.dot_dimension_numbers<[1], [0], [0], [1], [0, 0, 1, 1], [], []>} : vector<2x64xf32>, vector<64x64xf32>, vector<2x64xf32> -> vector<2x64xf32>
    %53 = vector.extract_strided_slice %52 {offsets = [0, 0], sizes = [1, 64], strides = [1, 1]} : vector<2x64xf32> to vector<1x64xf32>
    %54 = vector.extract_strided_slice %52 {offsets = [1, 0], sizes = [1, 64], strides = [1, 1]} : vector<2x64xf32> to vector<1x64xf32>
    %55 = arith.mulf %53, %53 : vector<1x64xf32>
    %56 = arith.subf %54, %55 : vector<1x64xf32>
    %cst_25 = arith.constant 9.99999997E-7 : f32
    %57 = vector.broadcast %cst_25 : f32 to vector<1x64xf32>
    %58 = arith.addf %56, %57 : vector<1x64xf32>
    %59 = math.rsqrt %58 : vector<1x64xf32>
    %60 = vector.broadcast %53 : vector<1x64xf32> to vector<256x64xf32>
    %61 = arith.subf %42, %60 : vector<256x64xf32>
    %62 = vector.broadcast %59 : vector<1x64xf32> to vector<256x64xf32>
    %63 = arith.mulf %61, %62 : vector<256x64xf32>
    %c0_26 = arith.constant 0 : index
    %c0_27 = arith.constant 0 : index
    %64 = vector.load %arg7[%c0_26, %c0_27] : memref<1x64xf32, #tpu.memory_space<vmem>>, vector<1x64xf32>
    %65 = vector.broadcast %64 : vector<1x64xf32> to vector<256x64xf32>
    %66 = arith.mulf %63, %65 : vector<256x64xf32>
    %c0_28 = arith.constant 0 : index
    %c0_29 = arith.constant 0 : index
    %67 = vector.load %arg8[%c0_28, %c0_29] : memref<1x64xf32, #tpu.memory_space<vmem>>, vector<1x64xf32>
    %68 = vector.broadcast %67 : vector<1x64xf32> to vector<256x64xf32>
    %69 = arith.addf %66, %68 : vector<256x64xf32>
    %cst_30 = arith.constant 0.000000e+00 : f32
    %70 = vector.broadcast %cst_30 : f32 to vector<256x64xf32>
    %71 = arith.subf %70, %69 : vector<256x64xf32>
    %72 = math.exp %71 : vector<256x64xf32>
    %cst_31 = arith.constant 1.000000e+00 : f32
    %73 = vector.broadcast %cst_31 : f32 to vector<256x64xf32>
    %74 = arith.addf %73, %72 : vector<256x64xf32>
    %75 = tpu.reciprocal %74 {approx = true} : vector<256x64xf32> -> vector<256x64xf32>
    %76 = arith.mulf %69, %75 : vector<256x64xf32>
    %cst_32 = arith.constant 0.000000e+00 : f32
    %77 = vector.broadcast %cst_32 : f32 to vector<24x64xf32>
    %c0_33 = arith.constant 0 : index
    %c0_34 = arith.constant 0 : index
    %78 = vector.load %arg15[%c0_33, %c0_34] : memref<304x64xf32, #tpu.memory_space<vmem>>, vector<24x64xf32>
    tpu.vector_store %arg15[%c0_33, %c0_34], %77 {strides = array<i32>} : memref<304x64xf32, #tpu.memory_space<vmem>>, vector<24x64xf32>,
    %cst_35 = arith.constant 0.000000e+00 : f32
    %79 = vector.broadcast %cst_35 : f32 to vector<24x64xf32>
    %c280 = arith.constant 280 : index
    %c0_36 = arith.constant 0 : index
    %80 = vector.load %arg15[%c280, %c0_36] : memref<304x64xf32, #tpu.memory_space<vmem>>, vector<24x64xf32>
    tpu.vector_store %arg15[%c280, %c0_36], %79 {strides = array<i32>} : memref<304x64xf32, #tpu.memory_space<vmem>>, vector<24x64xf32>,
    %c24 = arith.constant 24 : index
    %c0_37 = arith.constant 0 : index
    %81 = vector.load %arg15[%c24, %c0_37] : memref<304x64xf32, #tpu.memory_space<vmem>>, vector<256x64xf32>
    tpu.vector_store %arg15[%c24, %c0_37], %76 {strides = array<i32>} : memref<304x64xf32, #tpu.memory_space<vmem>>, vector<256x64xf32>,
    %82 = tpu.iota {dimensions = array<i32: 0>} : vector<256x1xi32>
    %c16_i32 = arith.constant 16 : i32
    %c0_i32 = arith.constant 0 : i32
    %83 = arith.cmpi eq, %c16_i32, %c0_i32 : i32
    %c1_i32 = arith.constant 1 : i32
    %84 = arith.select %83, %c1_i32, %c16_i32 : i32
    %85 = vector.broadcast %84 : i32 to vector<256x1xi32>
    %86 = arith.remsi %82, %85 : vector<256x1xi32>
    %c0_i32_38 = arith.constant 0 : i32
    %87 = vector.broadcast %c0_i32_38 : i32 to vector<256x1xi32>
    %88 = arith.cmpi ne, %86, %87 : vector<256x1xi32>
    %c0_i32_39 = arith.constant 0 : i32
    %89 = vector.broadcast %c0_i32_39 : i32 to vector<256x1xi32>
    %90 = arith.cmpi slt, %86, %89 : vector<256x1xi32>
    %c0_i32_40 = arith.constant 0 : i32
    %91 = arith.cmpi slt, %84, %c0_i32_40 : i32
    %92 = vector.broadcast %91 : i1 to vector<256x1xi1>
    %93 = vector.broadcast %92 : vector<256x1xi1> to vector<256x1xi1>
    %94 = arith.xori %90, %93 : vector<256x1xi1>
    %95 = arith.andi %94, %88 : vector<256x1xi1>
    %96 = vector.broadcast %84 : i32 to vector<256x1xi32>
    %97 = arith.addi %86, %96 : vector<256x1xi32>
    %98 = arith.select %95, %97, %86 : vector<256x1xi1>, vector<256x1xi32>
    %c0_i32_41 = arith.constant 0 : i32
    %99 = vector.broadcast %c0_i32_41 : i32 to vector<256x1xi32>
    %100 = arith.cmpi ne, %98, %99 : vector<256x1xi32>
    %c15_i32 = arith.constant 15 : i32
    %101 = vector.broadcast %c15_i32 : i32 to vector<256x1xi32>
    %102 = arith.cmpi ne, %98, %101 : vector<256x1xi32>
    %c7 = arith.constant 7 : index
    %c0_42 = arith.constant 0 : index
    %103 = vector.load %arg15[%c7, %c0_42] : memref<304x64xf32, #tpu.memory_space<vmem>>, vector<256x64xf32>
    %cst_43 = arith.constant 0.000000e+00 : f32
    %104 = vector.shape_cast %100 : vector<256x1xi1> to vector<256x1xi1>
    %105 = vector.broadcast %104 : vector<256x1xi1> to vector<256x64xi1>
    %106 = vector.broadcast %cst_43 : f32 to vector<256x64xf32>
    %107 = arith.select %105, %103, %106 : vector<256x64xi1>, vector<256x64xf32>
    %108 = arith.truncf %107 : vector<256x64xf32> to vector<256x64xbf16>
    %c8 = arith.constant 8 : index
    %c0_44 = arith.constant 0 : index
    %109 = vector.load %arg15[%c8, %c0_44] : memref<304x64xf32, #tpu.memory_space<vmem>>, vector<256x64xf32>
    %110 = arith.truncf %109 : vector<256x64xf32> to vector<256x64xbf16>
    %c9 = arith.constant 9 : index
    %c0_45 = arith.constant 0 : index
    %111 = vector.load %arg15[%c9, %c0_45] : memref<304x64xf32, #tpu.memory_space<vmem>>, vector<256x64xf32>
    %cst_46 = arith.constant 0.000000e+00 : f32
    %112 = vector.shape_cast %102 : vector<256x1xi1> to vector<256x1xi1>
    %113 = vector.broadcast %112 : vector<256x1xi1> to vector<256x64xi1>
    %114 = vector.broadcast %cst_46 : f32 to vector<256x64xf32>
    %115 = arith.select %113, %111, %114 : vector<256x64xi1>, vector<256x64xf32>
    %116 = arith.truncf %115 : vector<256x64xf32> to vector<256x64xbf16>
    %c23 = arith.constant 23 : index
    %c0_47 = arith.constant 0 : index
    %117 = vector.load %arg15[%c23, %c0_47] : memref<304x64xf32, #tpu.memory_space<vmem>>, vector<256x64xf32>
    %cst_48 = arith.constant 0.000000e+00 : f32
    %118 = vector.shape_cast %100 : vector<256x1xi1> to vector<256x1xi1>
    %119 = vector.broadcast %118 : vector<256x1xi1> to vector<256x64xi1>
    %120 = vector.broadcast %cst_48 : f32 to vector<256x64xf32>
    %121 = arith.select %119, %117, %120 : vector<256x64xi1>, vector<256x64xf32>
    %122 = arith.truncf %121 : vector<256x64xf32> to vector<256x64xbf16>
    %c24_49 = arith.constant 24 : index
    %c0_50 = arith.constant 0 : index
    %123 = vector.load %arg15[%c24_49, %c0_50] : memref<304x64xf32, #tpu.memory_space<vmem>>, vector<256x64xf32>
    %124 = arith.truncf %123 : vector<256x64xf32> to vector<256x64xbf16>
    %c25 = arith.constant 25 : index
    %c0_51 = arith.constant 0 : index
    %125 = vector.load %arg15[%c25, %c0_51] : memref<304x64xf32, #tpu.memory_space<vmem>>, vector<256x64xf32>
    %cst_52 = arith.constant 0.000000e+00 : f32
    %126 = vector.shape_cast %102 : vector<256x1xi1> to vector<256x1xi1>
    %127 = vector.broadcast %126 : vector<256x1xi1> to vector<256x64xi1>
    %128 = vector.broadcast %cst_52 : f32 to vector<256x64xf32>
    %129 = arith.select %127, %125, %128 : vector<256x64xi1>, vector<256x64xf32>
    %130 = arith.truncf %129 : vector<256x64xf32> to vector<256x64xbf16>
    %c39 = arith.constant 39 : index
    %c0_53 = arith.constant 0 : index
    %131 = vector.load %arg15[%c39, %c0_53] : memref<304x64xf32, #tpu.memory_space<vmem>>, vector<256x64xf32>
    %cst_54 = arith.constant 0.000000e+00 : f32
    %132 = vector.shape_cast %100 : vector<256x1xi1> to vector<256x1xi1>
    %133 = vector.broadcast %132 : vector<256x1xi1> to vector<256x64xi1>
    %134 = vector.broadcast %cst_54 : f32 to vector<256x64xf32>
    %135 = arith.select %133, %131, %134 : vector<256x64xi1>, vector<256x64xf32>
    %136 = arith.truncf %135 : vector<256x64xf32> to vector<256x64xbf16>
    %c40 = arith.constant 40 : index
    %c0_55 = arith.constant 0 : index
    %137 = vector.load %arg15[%c40, %c0_55] : memref<304x64xf32, #tpu.memory_space<vmem>>, vector<256x64xf32>
    %138 = arith.truncf %137 : vector<256x64xf32> to vector<256x64xbf16>
    %c41 = arith.constant 41 : index
    %c0_56 = arith.constant 0 : index
    %139 = vector.load %arg15[%c41, %c0_56] : memref<304x64xf32, #tpu.memory_space<vmem>>, vector<256x64xf32>
    %cst_57 = arith.constant 0.000000e+00 : f32
    %140 = vector.shape_cast %102 : vector<256x1xi1> to vector<256x1xi1>
    %141 = vector.broadcast %140 : vector<256x1xi1> to vector<256x64xi1>
    %142 = vector.broadcast %cst_57 : f32 to vector<256x64xf32>
    %143 = arith.select %141, %139, %142 : vector<256x64xi1>, vector<256x64xf32>
    %144 = arith.truncf %143 : vector<256x64xf32> to vector<256x64xbf16>
    %145 = tpu.concatenate %108, %110, %116, %122, %124, %130, %136, %138, %144 in 1 : vector<256x64xbf16>, vector<256x64xbf16>, vector<256x64xbf16>, vector<256x64xbf16>, vector<256x64xbf16>, vector<256x64xbf16>, vector<256x64xbf16>, vector<256x64xbf16>, vector<256x64xbf16> -> vector<256x576xbf16>
    %c0_58 = arith.constant 0 : index
    %c0_59 = arith.constant 0 : index
    %146 = vector.load %arg10[%c0_58, %c0_59] : memref<576x64xbf16, #tpu.memory_space<vmem>>, vector<576x64xbf16>
    %cst_60 = arith.constant dense<0.000000e+00> : vector<256x64xf32>
    %147 = tpu.matmul %145, %146, %cst_60 {dimension_numbers = #tpu.dot_dimension_numbers<[1], [0], [0], [1], [0, 0, 1, 1], [], []>} : vector<256x576xbf16>, vector<576x64xbf16>, vector<256x64xf32> -> vector<256x64xf32>
    %148 = arith.truncf %2 : vector<256x32xf32> to vector<256x32xbf16>
    %c0_61 = arith.constant 0 : index
    %c0_62 = arith.constant 0 : index
    %149 = vector.load %arg12[%c0_61, %c0_62] : memref<32x64xbf16, #tpu.memory_space<vmem>>, vector<32x64xbf16>
    %cst_63 = arith.constant dense<0.000000e+00> : vector<256x64xf32>
    %150 = tpu.matmul %148, %149, %cst_63 {dimension_numbers = #tpu.dot_dimension_numbers<[1], [0], [0], [1], [0, 0, 1, 1], [], []>} : vector<256x32xbf16>, vector<32x64xbf16>, vector<256x64xf32> -> vector<256x64xf32>
    %c0_64 = arith.constant 0 : index
    %c0_65 = arith.constant 0 : index
    %151 = vector.load %arg13[%c0_64, %c0_65] : memref<1x64xf32, #tpu.memory_space<vmem>>, vector<1x64xf32>
    %152 = vector.broadcast %151 : vector<1x64xf32> to vector<256x64xf32>
    %153 = arith.addf %150, %152 : vector<256x64xf32>
    %154 = arith.addf %153, %147 : vector<256x64xf32>
    %c0_66 = arith.constant 0 : index
    %c0_67 = arith.constant 0 : index
    %155 = vector.load %arg11[%c0_66, %c0_67] : memref<1x64xf32, #tpu.memory_space<vmem>>, vector<1x64xf32>
    %156 = vector.broadcast %155 : vector<1x64xf32> to vector<256x64xf32>
    %157 = arith.addf %154, %156 : vector<256x64xf32>
    %158 = tpu.transpose %157, [1, 0] : vector<256x64xf32> -> vector<64x256xf32>
    %c0_68 = arith.constant 0 : index
    %c0_69 = arith.constant 0 : index
    %c0_70 = arith.constant 0 : index
    %159 = vector.load %arg14[%c0_68, %c0_69, %c0_70] : memref<1x64x256xf32, #tpu.memory_space<vmem>>, vector<1x64x256xf32>
    %160 = vector.shape_cast %159 : vector<1x64x256xf32> to vector<64x256xf32>
    %161 = vector.shape_cast %158 : vector<64x256xf32> to vector<1x64x256xf32>
    tpu.vector_store %arg14[%c0_68, %c0_69, %c0_70], %161 {strides = array<i32>} : memref<1x64x256xf32, #tpu.memory_space<vmem>>, vector<1x64x256xf32>,
    return
  }
  func.func @transform_0(%arg0: i32) -> (i32, i32, i32) {
    %c0_i32 = arith.constant 0 : i32
    %c0_i32_0 = arith.constant 0 : i32
    %c0_i32_1 = arith.constant 0 : i32
    return %arg0, %c0_i32, %c0_i32_0 : i32, i32, i32
  }
  func.func @transform_1(%arg0: i32) -> (i32, i32) {
    %c0_i32 = arith.constant 0 : i32
    %c0_i32_0 = arith.constant 0 : i32
    %c0_i32_1 = arith.constant 0 : i32
    return %c0_i32, %c0_i32_0 : i32, i32
  }
  func.func @transform_2(%arg0: i32) -> (i32, i32) {
    %c0_i32 = arith.constant 0 : i32
    %c0_i32_0 = arith.constant 0 : i32
    %c0_i32_1 = arith.constant 0 : i32
    return %c0_i32, %c0_i32_0 : i32, i32
  }
  func.func @transform_3(%arg0: i32) -> (i32, i32) {
    %c0_i32 = arith.constant 0 : i32
    %c0_i32_0 = arith.constant 0 : i32
    %c0_i32_1 = arith.constant 0 : i32
    return %c0_i32, %c0_i32_0 : i32, i32
  }
  func.func @transform_4(%arg0: i32) -> (i32, i32) {
    %c0_i32 = arith.constant 0 : i32
    %c0_i32_0 = arith.constant 0 : i32
    %c0_i32_1 = arith.constant 0 : i32
    return %c0_i32, %c0_i32_0 : i32, i32
  }
  func.func @transform_5(%arg0: i32) -> (i32, i32) {
    %c0_i32 = arith.constant 0 : i32
    %c0_i32_0 = arith.constant 0 : i32
    %c0_i32_1 = arith.constant 0 : i32
    return %c0_i32, %c0_i32_0 : i32, i32
  }
  func.func @transform_6(%arg0: i32) -> (i32, i32) {
    %c0_i32 = arith.constant 0 : i32
    %c0_i32_0 = arith.constant 0 : i32
    %c0_i32_1 = arith.constant 0 : i32
    return %c0_i32, %c0_i32_0 : i32, i32
  }
  func.func @transform_7(%arg0: i32) -> (i32, i32) {
    %c0_i32 = arith.constant 0 : i32
    %c0_i32_0 = arith.constant 0 : i32
    %c0_i32_1 = arith.constant 0 : i32
    return %c0_i32, %c0_i32_0 : i32, i32
  }
  func.func @transform_8(%arg0: i32) -> (i32, i32) {
    %c0_i32 = arith.constant 0 : i32
    %c0_i32_0 = arith.constant 0 : i32
    %c0_i32_1 = arith.constant 0 : i32
    return %c0_i32, %c0_i32_0 : i32, i32
  }
  func.func @transform_9(%arg0: i32) -> (i32, i32) {
    %c0_i32 = arith.constant 0 : i32
    %c0_i32_0 = arith.constant 0 : i32
    %c0_i32_1 = arith.constant 0 : i32
    return %c0_i32, %c0_i32_0 : i32, i32
  }
  func.func @transform_10(%arg0: i32) -> (i32, i32) {
    %c0_i32 = arith.constant 0 : i32
    %c0_i32_0 = arith.constant 0 : i32
    %c0_i32_1 = arith.constant 0 : i32
    return %c0_i32, %c0_i32_0 : i32, i32
  }
  func.func @transform_11(%arg0: i32) -> (i32, i32) {
    %c0_i32 = arith.constant 0 : i32
    %c0_i32_0 = arith.constant 0 : i32
    %c0_i32_1 = arith.constant 0 : i32
    return %c0_i32, %c0_i32_0 : i32, i32
  }
  func.func @transform_12(%arg0: i32) -> (i32, i32) {
    %c0_i32 = arith.constant 0 : i32
    %c0_i32_0 = arith.constant 0 : i32
    %c0_i32_1 = arith.constant 0 : i32
    return %c0_i32, %c0_i32_0 : i32, i32
  }
  func.func @transform_13(%arg0: i32) -> (i32, i32, i32) {
    %c0_i32 = arith.constant 0 : i32
    %c0_i32_0 = arith.constant 0 : i32
    %c0_i32_1 = arith.constant 0 : i32
    return %arg0, %c0_i32, %c0_i32_0 : i32, i32, i32
  }
}

</mosaic_0001>

<llo_original>
// kernel: tpu_custom_call.1
$region0: #{tpu_custom_call.1}
  #allocation0 [shape = 'u32[]', space=smem, size = 0x4, offset = 0x4, fixed_abs, tag = 'smem constant byte address 0x4 - core index']
  #allocation1 [shape = 'u32[72,128]{1,0:T(1,128)}', space=vmem, size = 0x9000, scoped, tag = 'internal scratch']
  #allocation2 [shape = 'f32[304,64]{1,0:T(8,128)}', space=vmem, size = 0x26000, scoped, tag = 'scratch operand']
  %s0 = inlined_call_operand.vmem [shape: f32[2,32,256], index: 0, kind: input, shape index: {}]
  %s1 = inlined_call_operand.vmem [shape: f32[1,32], index: 1, kind: input, shape index: {}]
  %s2 = inlined_call_operand.vmem [shape: f32[1,32], index: 2, kind: input, shape index: {}]
  %s3 = inlined_call_operand.vmem [shape: f32[32,32], index: 3, kind: input, shape index: {}]
  %s4 = inlined_call_operand.vmem [shape: bf16[32,64], index: 4, kind: input, shape index: {}]
  %s5 = inlined_call_operand.vmem [shape: f32[1,64], index: 5, kind: input, shape index: {}]
  %s6 = inlined_call_operand.vmem [shape: f32[1,64], index: 6, kind: input, shape index: {}]
  %s7 = inlined_call_operand.vmem [shape: f32[1,64], index: 7, kind: input, shape index: {}]
  %s8 = inlined_call_operand.vmem [shape: f32[64,64], index: 8, kind: input, shape index: {}]
  %s9 = inlined_call_operand.vmem [shape: bf16[576,64], index: 9, kind: input, shape index: {}]
  %s10 = inlined_call_operand.vmem [shape: f32[1,64], index: 10, kind: input, shape index: {}]
  %s11 = inlined_call_operand.vmem [shape: bf16[32,64], index: 11, kind: input, shape index: {}]
  %s12 = inlined_call_operand.vmem [shape: f32[1,64], index: 12, kind: input, shape index: {}]
  %s13 = inlined_call_operand.hbm [shape: f32[2,64,256], index: 13, kind: output, shape index: {}]
  %s14 = sld [smem:[#allocation0]]
  $region85: #{tpu_custom_call.1} parent=0
    _
  %s16 = ssub.s32 1, %s14
  %s17 = scalar_select 0, %s16, %s14
  $region1: #{tpu_custom_call.1} parent=0
    #allocation3 [shape = 'u8[131072]{0}', space=vmem, size = 0x20000, scoped, tag = 'output window, operand 0']
    #allocation4 [shape = 's32[2]{0}', space=sflag, size = 0x8, scoped, tag = 'scoped memory for tpu_custom_call.1']
    %18 = vsyncpa [#allocation4], 0
    %s19 = scalar_lea.sflag [#allocation4], 1
    %20 = vsyncpa %s19, 0
    loop: start=0, step=1, limit=4
    $region2: #{tpu_custom_call.1} parent=1 // loop_pre_header
      _
    $region3: #{tpu_custom_call.1} parent=1 // loop_header
      %s22 = sphi 0, %s26
      %p23 = scmp.ge.s32.totalorder %s22, 4
      %s32 = sphi 0, %s34
      %s35 = sphi 0, %s32
      %s36 = sphi 0, %s35
      %s52 = sphi 0, %s36
      %s56 = sphi 0, %s56
      %s58 = sphi 0, %s56
      %s59 = sphi 0, %s58
      %s73 = sphi 0, %s59
      %s77 = sphi 0, %s77
      %s79 = sphi 0, %s77
      %s80 = sphi 0, %s79
      %s94 = sphi 0, %s80
      %s98 = sphi 0, %s98
      %s100 = sphi 0, %s98
      %s101 = sphi 0, %s100
      %s115 = sphi 0, %s101
      %s119 = sphi 0, %s119
      %s121 = sphi 0, %s119
      %s122 = sphi 0, %s121
      %s136 = sphi 0, %s122
      %s140 = sphi 0, %s140
      %s142 = sphi 0, %s140
      %s143 = sphi 0, %s142
      %s157 = sphi 0, %s143
      %s161 = sphi 0, %s161
      %s163 = sphi 0, %s161
      %s164 = sphi 0, %s163
      %s178 = sphi 0, %s164
      %s182 = sphi 0, %s182
      %s184 = sphi 0, %s182
      %s185 = sphi 0, %s184
      %s199 = sphi 0, %s185
      %s203 = sphi 0, %s203
      %s205 = sphi 0, %s203
      %s206 = sphi 0, %s205
      %s220 = sphi 0, %s206
      %s224 = sphi 0, %s224
      %s226 = sphi 0, %s224
      %s227 = sphi 0, %s226
      %s241 = sphi 0, %s227
      %s245 = sphi 0, %s245
      %s247 = sphi 0, %s245
      %s248 = sphi 0, %s247
      %s262 = sphi 0, %s248
      %s266 = sphi 0, %s266
      %s268 = sphi 0, %s266
      %s269 = sphi 0, %s268
      %s283 = sphi 0, %s269
      %s287 = sphi 0, %s287
      %s289 = sphi 0, %s287
      %s290 = sphi 0, %s289
      %s304 = sphi 0, %s290
      %s310 = sphi 0, %s312
      %s313 = sphi 0, %s310
      %s314 = sphi 0, %s313
      %s330 = sphi 0, %s314
    $region4: #{tpu_custom_call.1} parent=1 // loop_header_branch
      %25 = sbr.rel (%p23) target = $region8
    $region5: #{tpu_custom_call.1} parent=1 // loop_body
      %s27 = ssub.s32 %s22, 1
      %s28 = ssub.s32 %s22, 2
      %s29 = sadd.s32 %s22, 1
      %s30 = ssub.s32 %s22, %s29
      %p31 = scmp.eq.s32.totalorder %s30, 0
      %s33 = sadd.s32 %s32, 1
      %s34 = scalar_select %p31, %s32, %s33
      %p37 = pneg %p31
      %p38 = scmp.eq.s32.totalorder %s22, 1
      %p39 = por %p37, %p38
      %p40 = scmp.ne.s32.totalorder %s32, %s35
      %p41 = scmp.eq.s32.totalorder %s22, 0
      %p42 = por %p40, %p41
      %p43 = scmp.ne.s32.totalorder %s32, %s35
      %p44 = scmp.eq.s32.totalorder %s27, 1
      %p45 = por %p43, %p44
      %p46 = scmp.ne.s32.totalorder %s35, %s36
      %p47 = scmp.eq.s32.totalorder %s27, 0
      %p48 = por %p46, %p47
      %p49 = scmp.ne.s32.totalorder %s35, %s36
      %p50 = scmp.eq.s32.totalorder %s28, 1
      %p51 = por %p49, %p50
      %p53 = scmp.ne.s32.totalorder %s36, %s52
      %p54 = scmp.eq.s32.totalorder %s28, 0
      %p55 = por %p53, %p54
      %s57 = sadd.s32 %s56, 1
      %p60 = scmp.eq.s32.totalorder %s22, 1
      %p61 = scmp.ne.s32.totalorder %s56, %s58
      %p62 = scmp.eq.s32.totalorder %s22, 0
      %p63 = por %p61, %p62
      %p64 = scmp.ne.s32.totalorder %s56, %s58
      %p65 = scmp.eq.s32.totalorder %s27, 1
      %p66 = por %p64, %p65
      %p67 = scmp.ne.s32.totalorder %s58, %s59
      %p68 = scmp.eq.s32.totalorder %s27, 0
      %p69 = por %p67, %p68
      %p70 = scmp.ne.s32.totalorder %s58, %s59
      %p71 = scmp.eq.s32.totalorder %s28, 1
      %p72 = por %p70, %p71
      %p74 = scmp.ne.s32.totalorder %s59, %s73
      %p75 = scmp.eq.s32.totalorder %s28, 0
      %p76 = por %p74, %p75
      %s78 = sadd.s32 %s77, 1
      %p81 = scmp.eq.s32.totalorder %s22, 1
      %p82 = scmp.ne.s32.totalorder %s77, %s79
      %p83 = scmp.eq.s32.totalorder %s22, 0
      %p84 = por %p82, %p83
      %p85 = scmp.ne.s32.totalorder %s77, %s79
      %p86 = scmp.eq.s32.totalorder %s27, 1
      %p87 = por %p85, %p86
      %p88 = scmp.ne.s32.totalorder %s79, %s80
      %p89 = scmp.eq.s32.totalorder %s27, 0
      %p90 = por %p88, %p89
      %p91 = scmp.ne.s32.totalorder %s79, %s80
      %p92 = scmp.eq.s32.totalorder %s28, 1
      %p93 = por %p91, %p92
      %p95 = scmp.ne.s32.totalorder %s80, %s94
      %p96 = scmp.eq.s32.totalorder %s28, 0
      %p97 = por %p95, %p96
      %s99 = sadd.s32 %s98, 1
      %p102 = scmp.eq.s32.totalorder %s22, 1
      %p103 = scmp.ne.s32.totalorder %s98, %s100
      %p104 = scmp.eq.s32.totalorder %s22, 0
      %p105 = por %p103, %p104
      %p106 = scmp.ne.s32.totalorder %s98, %s100
      %p107 = scmp.eq.s32.totalorder %s27, 1
      %p108 = por %p106, %p107
      %p109 = scmp.ne.s32.totalorder %s100, %s101
      %p110 = scmp.eq.s32.totalorder %s27, 0
      %p111 = por %p109, %p110
      %p112 = scmp.ne.s32.totalorder %s100, %s101
      %p113 = scmp.eq.s32.totalorder %s28, 1
      %p114 = por %p112, %p113
      %p116 = scmp.ne.s32.totalorder %s101, %s115
      %p117 = scmp.eq.s32.totalorder %s28, 0
      %p118 = por %p116, %p117
      %s120 = sadd.s32 %s119, 1
      %p123 = scmp.eq.s32.totalorder %s22, 1
      %p124 = scmp.ne.s32.totalorder %s119, %s121
      %p125 = scmp.eq.s32.totalorder %s22, 0
      %p126 = por %p124, %p125
      %p127 = scmp.ne.s32.totalorder %s119, %s121
      %p128 = scmp.eq.s32.totalorder %s27, 1
      %p129 = por %p127, %p128
      %p130 = scmp.ne.s32.totalorder %s121, %s122
      %p131 = scmp.eq.s32.totalorder %s27, 0
      %p132 = por %p130, %p131
      %p133 = scmp.ne.s32.totalorder %s121, %s122
      %p134 = scmp.eq.s32.totalorder %s28, 1
      %p135 = por %p133, %p134
      %p137 = scmp.ne.s32.totalorder %s122, %s136
      %p138 = scmp.eq.s32.totalorder %s28, 0
      %p139 = por %p137, %p138
      %s141 = sadd.s32 %s140, 1
      %p144 = scmp.eq.s32.totalorder %s22, 1
      %p145 = scmp.ne.s32.totalorder %s140, %s142
      %p146 = scmp.eq.s32.totalorder %s22, 0
      %p147 = por %p145, %p146
      %p148 = scmp.ne.s32.totalorder %s140, %s142
      %p149 = scmp.eq.s32.totalorder %s27, 1
      %p150 = por %p148, %p149
      %p151 = scmp.ne.s32.totalorder %s142, %s143
      %p152 = scmp.eq.s32.totalorder %s27, 0
      %p153 = por %p151, %p152
      %p154 = scmp.ne.s32.totalorder %s142, %s143
      %p155 = scmp.eq.s32.totalorder %s28, 1
      %p156 = por %p154, %p155
      %p158 = scmp.ne.s32.totalorder %s143, %s157
      %p159 = scmp.eq.s32.totalorder %s28, 0
      %p160 = por %p158, %p159
      %s162 = sadd.s32 %s161, 1
      %p165 = scmp.eq.s32.totalorder %s22, 1
      %p166 = scmp.ne.s32.totalorder %s161, %s163
      %p167 = scmp.eq.s32.totalorder %s22, 0
      %p168 = por %p166, %p167
      %p169 = scmp.ne.s32.totalorder %s161, %s163
      %p170 = scmp.eq.s32.totalorder %s27, 1
      %p171 = por %p169, %p170
      %p172 = scmp.ne.s32.totalorder %s163, %s164
      %p173 = scmp.eq.s32.totalorder %s27, 0
      %p174 = por %p172, %p173
      %p175 = scmp.ne.s32.totalorder %s163, %s164
      %p176 = scmp.eq.s32.totalorder %s28, 1
      %p177 = por %p175, %p176
      %p179 = scmp.ne.s32.totalorder %s164, %s178
      %p180 = scmp.eq.s32.totalorder %s28, 0
      %p181 = por %p179, %p180
      %s183 = sadd.s32 %s182, 1
      %p186 = scmp.eq.s32.totalorder %s22, 1
      %p187 = scmp.ne.s32.totalorder %s182, %s184
      %p188 = scmp.eq.s32.totalorder %s22, 0
      %p189 = por %p187, %p188
      %p190 = scmp.ne.s32.totalorder %s182, %s184
      %p191 = scmp.eq.s32.totalorder %s27, 1
      %p192 = por %p190, %p191
      %p193 = scmp.ne.s32.totalorder %s184, %s185
      %p194 = scmp.eq.s32.totalorder %s27, 0
      %p195 = por %p193, %p194
      %p196 = scmp.ne.s32.totalorder %s184, %s185
      %p197 = scmp.eq.s32.totalorder %s28, 1
      %p198 = por %p196, %p197
      %p200 = scmp.ne.s32.totalorder %s185, %s199
      %p201 = scmp.eq.s32.totalorder %s28, 0
      %p202 = por %p200, %p201
      %s204 = sadd.s32 %s203, 1
      %p207 = scmp.eq.s32.totalorder %s22, 1
      %p208 = scmp.ne.s32.totalorder %s203, %s205
      %p209 = scmp.eq.s32.totalorder %s22, 0
      %p210 = por %p208, %p209
      %p211 = scmp.ne.s32.totalorder %s203, %s205
      %p212 = scmp.eq.s32.totalorder %s27, 1
      %p213 = por %p211, %p212
      %p214 = scmp.ne.s32.totalorder %s205, %s206
      %p215 = scmp.eq.s32.totalorder %s27, 0
      %p216 = por %p214, %p215
      %p217 = scmp.ne.s32.totalorder %s205, %s206
      %p218 = scmp.eq.s32.totalorder %s28, 1
      %p219 = por %p217, %p218
      %p221 = scmp.ne.s32.totalorder %s206, %s220
      %p222 = scmp.eq.s32.totalorder %s28, 0
      %p223 = por %p221, %p222
      %s225 = sadd.s32 %s224, 1
      %p228 = scmp.eq.s32.totalorder %s22, 1
      %p229 = scmp.ne.s32.totalorder %s224, %s226
      %p230 = scmp.eq.s32.totalorder %s22, 0
      %p231 = por %p229, %p230
      %p232 = scmp.ne.s32.totalorder %s224, %s226
      %p233 = scmp.eq.s32.totalorder %s27, 1
      %p234 = por %p232, %p233
      %p235 = scmp.ne.s32.totalorder %s226, %s227
      %p236 = scmp.eq.s32.totalorder %s27, 0
      %p237 = por %p235, %p236
      %p238 = scmp.ne.s32.totalorder %s226, %s227
      %p239 = scmp.eq.s32.totalorder %s28, 1
      %p240 = por %p238, %p239
      %p242 = scmp.ne.s32.totalorder %s227, %s241
      %p243 = scmp.eq.s32.totalorder %s28, 0
      %p244 = por %p242, %p243
      %s246 = sadd.s32 %s245, 1
      %p249 = scmp.eq.s32.totalorder %s22, 1
      %p250 = scmp.ne.s32.totalorder %s245, %s247
      %p251 = scmp.eq.s32.totalorder %s22, 0
      %p252 = por %p250, %p251
      %p253 = scmp.ne.s32.totalorder %s245, %s247
      %p254 = scmp.eq.s32.totalorder %s27, 1
      %p255 = por %p253, %p254
      %p256 = scmp.ne.s32.totalorder %s247, %s248
      %p257 = scmp.eq.s32.totalorder %s27, 0
      %p258 = por %p256, %p257
      %p259 = scmp.ne.s32.totalorder %s247, %s248
      %p260 = scmp.eq.s32.totalorder %s28, 1
      %p261 = por %p259, %p260
      %p263 = scmp.ne.s32.totalorder %s248, %s262
      %p264 = scmp.eq.s32.totalorder %s28, 0
      %p265 = por %p263, %p264
      %s267 = sadd.s32 %s266, 1
      %p270 = scmp.eq.s32.totalorder %s22, 1
      %p271 = scmp.ne.s32.totalorder %s266, %s268
      %p272 = scmp.eq.s32.totalorder %s22, 0
      %p273 = por %p271, %p272
      %p274 = scmp.ne.s32.totalorder %s266, %s268
      %p275 = scmp.eq.s32.totalorder %s27, 1
      %p276 = por %p274, %p275
      %p277 = scmp.ne.s32.totalorder %s268, %s269
      %p278 = scmp.eq.s32.totalorder %s27, 0
      %p279 = por %p277, %p278
      %p280 = scmp.ne.s32.totalorder %s268, %s269
      %p281 = scmp.eq.s32.totalorder %s28, 1
      %p282 = por %p280, %p281
      %p284 = scmp.ne.s32.totalorder %s269, %s283
      %p285 = scmp.eq.s32.totalorder %s28, 0
      %p286 = por %p284, %p285
      %s288 = sadd.s32 %s287, 1
      %p291 = scmp.eq.s32.totalorder %s22, 1
      %p292 = scmp.ne.s32.totalorder %s287, %s289
      %p293 = scmp.eq.s32.totalorder %s22, 0
      %p294 = por %p292, %p293
      %p295 = scmp.ne.s32.totalorder %s287, %s289
      %p296 = scmp.eq.s32.totalorder %s27, 1
      %p297 = por %p295, %p296
      %p298 = scmp.ne.s32.totalorder %s289, %s290
      %p299 = scmp.eq.s32.totalorder %s27, 0
      %p300 = por %p298, %p299
      %p301 = scmp.ne.s32.totalorder %s289, %s290
      %p302 = scmp.eq.s32.totalorder %s28, 1
      %p303 = por %p301, %p302
      %p305 = scmp.ne.s32.totalorder %s290, %s304
      %p306 = scmp.eq.s32.totalorder %s28, 0
      %p307 = por %p305, %p306
      %s308 = ssub.s32 %s22, %s29
      %p309 = scmp.eq.s32.totalorder %s308, 0
      %s311 = sadd.s32 %s310, 1
      %s312 = scalar_select %p309, %s310, %s311
      %p315 = pneg %p309
      %p316 = scmp.eq.s32.totalorder %s22, 1
      %p317 = por %p315, %p316
      %p318 = scmp.ne.s32.totalorder %s310, %s313
      %p319 = scmp.eq.s32.totalorder %s22, 0
      %p320 = por %p318, %p319
      %p321 = scmp.ne.s32.totalorder %s310, %s313
      %p322 = scmp.eq.s32.totalorder %s27, 1
      %p323 = por %p321, %p322
      %p324 = scmp.ne.s32.totalorder %s313, %s314
      %p325 = scmp.eq.s32.totalorder %s27, 0
      %p326 = por %p324, %p325
      %p327 = scmp.ne.s32.totalorder %s313, %s314
      %p328 = scmp.eq.s32.totalorder %s28, 1
      %p329 = por %p327, %p328
      %p331 = scmp.ne.s32.totalorder %s314, %s330
      %p332 = scmp.eq.s32.totalorder %s28, 0
      %p333 = por %p331, %p332
      %p334 = scmp.le.s32.totalorder 1, %s22
      %p335 = scmp.lt.s32.totalorder %s22, 3
      %p336 = pnand %p334, %p335
      %p337 = pneg %p336
      // Predicated region
      $region9: #{tpu_custom_call.1} parent=5 // pred_check
        _
      $region10: #{tpu_custom_call.1} parent=5 // pred_check_branch
        %339 = sbr.rel (%p336) target = $region12
      $region11: #{tpu_custom_call.1} parent=5 // pred_region
        %s340 = ssub.s32 %s22, 1
        // Predicated region
        $region13: #{tpu_custom_call.1} parent=11 // pred_check
          %p341 = pneg %p69
        $region14: #{tpu_custom_call.1} parent=11 // pred_check_branch
          %343 = sbr.rel (%p341) target = $region16
        $region15: #{tpu_custom_call.1} parent=11 // pred_region
          _
        $region16: #{tpu_custom_call.1} parent=11 // pred_fallthru
          _
        // Predicated region
        $region17: #{tpu_custom_call.1} parent=11 // pred_check
          %p344 = pneg %p90
        $region18: #{tpu_custom_call.1} parent=11 // pred_check_branch
          %346 = sbr.rel (%p344) target = $region20
        $region19: #{tpu_custom_call.1} parent=11 // pred_region
          _
        $region20: #{tpu_custom_call.1} parent=11 // pred_fallthru
          _
        // Predicated region
        $region21: #{tpu_custom_call.1} parent=11 // pred_check
          %p347 = pneg %p111
        $region22: #{tpu_custom_call.1} parent=11 // pred_check_branch
          %349 = sbr.rel (%p347) target = $region24
        $region23: #{tpu_custom_call.1} parent=11 // pred_region
          _
        $region24: #{tpu_custom_call.1} parent=11 // pred_fallthru
          _
        // Predicated region
        $region25: #{tpu_custom_call.1} parent=11 // pred_check
          %p350 = pneg %p132
        $region26: #{tpu_custom_call.1} parent=11 // pred_check_branch
          %352 = sbr.rel (%p350) target = $region28
        $region27: #{tpu_custom_call.1} parent=11 // pred_region
          _
        $region28: #{tpu_custom_call.1} parent=11 // pred_fallthru
          _
        // Predicated region
        $region29: #{tpu_custom_call.1} parent=11 // pred_check
          %p353 = pneg %p153
        $region30: #{tpu_custom_call.1} parent=11 // pred_check_branch
          %355 = sbr.rel (%p353) target = $region32
        $region31: #{tpu_custom_call.1} parent=11 // pred_region
          _
        $region32: #{tpu_custom_call.1} parent=11 // pred_fallthru
          _
        // Predicated region
        $region33: #{tpu_custom_call.1} parent=11 // pred_check
          %p356 = pneg %p174
        $region34: #{tpu_custom_call.1} parent=11 // pred_check_branch
          %358 = sbr.rel (%p356) target = $region36
        $region35: #{tpu_custom_call.1} parent=11 // pred_region
          _
        $region36: #{tpu_custom_call.1} parent=11 // pred_fallthru
          _
        // Predicated region
        $region37: #{tpu_custom_call.1} parent=11 // pred_check
          %p359 = pneg %p195
        $region38: #{tpu_custom_call.1} parent=11 // pred_check_branch
          %361 = sbr.rel (%p359) target = $region40
        $region39: #{tpu_custom_call.1} parent=11 // pred_region
          _
        $region40: #{tpu_custom_call.1} parent=11 // pred_fallthru
          _
        // Predicated region
        $region41: #{tpu_custom_call.1} parent=11 // pred_check
          %p362 = pneg %p216
        $region42: #{tpu_custom_call.1} parent=11 // pred_check_branch
          %364 = sbr.rel (%p362) target = $region44
        $region43: #{tpu_custom_call.1} parent=11 // pred_region
          _
        $region44: #{tpu_custom_call.1} parent=11 // pred_fallthru
          _
        // Predicated region
        $region45: #{tpu_custom_call.1} parent=11 // pred_check
          %p365 = pneg %p237
        $region46: #{tpu_custom_call.1} parent=11 // pred_check_branch
          %367 = sbr.rel (%p365) target = $region48
        $region47: #{tpu_custom_call.1} parent=11 // pred_region
          _
        $region48: #{tpu_custom_call.1} parent=11 // pred_fallthru
          _
        // Predicated region
        $region49: #{tpu_custom_call.1} parent=11 // pred_check
          %p368 = pneg %p258
        $region50: #{tpu_custom_call.1} parent=11 // pred_check_branch
          %370 = sbr.rel (%p368) target = $region52
        $region51: #{tpu_custom_call.1} parent=11 // pred_region
          _
        $region52: #{tpu_custom_call.1} parent=11 // pred_fallthru
          _
        // Predicated region
        $region53: #{tpu_custom_call.1} parent=11 // pred_check
          %p371 = pneg %p279
        $region54: #{tpu_custom_call.1} parent=11 // pred_check_branch
          %373 = sbr.rel (%p371) target = $region56
        $region55: #{tpu_custom_call.1} parent=11 // pred_region
          _
        $region56: #{tpu_custom_call.1} parent=11 // pred_fallthru
          _
        // Predicated region
        $region57: #{tpu_custom_call.1} parent=11 // pred_check
          %p374 = pneg %p300
        $region58: #{tpu_custom_call.1} parent=11 // pred_check_branch
          %376 = sbr.rel (%p374) target = $region60
        $region59: #{tpu_custom_call.1} parent=11 // pred_region
          _
        $region60: #{tpu_custom_call.1} parent=11 // pred_fallthru
          _
      $region12: #{tpu_custom_call.1} parent=5 // pred_fallthru
        _
      %p377 = scmp.lt.s32.totalorder %s22, 2
      // Predicated region
      $region61: #{tpu_custom_call.1} parent=5 // pred_check
        %p378 = pneg %p377
      $region62: #{tpu_custom_call.1} parent=5 // pred_check_branch
        %380 = sbr.rel (%p378) target = $region64
      $region63: #{tpu_custom_call.1} parent=5 // pred_region
        // Predicated region
        $region65: #{tpu_custom_call.1} parent=63 // pred_check
          %p381 = pneg %p42
        $region66: #{tpu_custom_call.1} parent=63 // pred_check_branch
          %383 = sbr.rel (%p381) target = $region68
        $region67: #{tpu_custom_call.1} parent=63 // pred_region
          %p384 = scmp.lt.s32.totalorder %s22, 1
          %s385 = scalar_select %p384, %s22, 1
          %s386 = smul.addr %s385, 8
          %s387 = smul.addr %s386, 8
          %s388 = scalar_lea.vmem %s0, %s387
        $region68: #{tpu_custom_call.1} parent=63 // pred_fallthru
          _
      $region64: #{tpu_custom_call.1} parent=5 // pred_fallthru
        _
      %p389 = scmp.le.s32.totalorder 1, %s22
      %p390 = scmp.lt.s32.totalorder %s22, 3
      %p391 = pnand %p389, %p390
      %p392 = pneg %p391
      // Predicated region
      $region69: #{tpu_custom_call.1} parent=5 // pred_check
        _
      $region70: #{tpu_custom_call.1} parent=5 // pred_check_branch
        %394 = sbr.rel (%p391) target = $region72
      $region71: #{tpu_custom_call.1} parent=5 // pred_region
        %s395 = ssub.s32 %s22, 1
        %p396 = scmp.lt.s32.totalorder %s27, 1
        %s397 = scalar_select %p396, %s27, 1
        %s398 = smul.addr %s397, 8
        %s399 = smul.addr %s398, 8
        %s400 = scalar_lea.vmem %s0, %s399
        %p401 = pneg %p48
        %p402 = pneg %p45
        %p403 = pneg %p69
        %p404 = pneg %p66
        %p405 = pneg %p90
        %p406 = pneg %p87
        %p407 = pneg %p111
        %p408 = pneg %p108
        %p409 = pneg %p132
        %p410 = pneg %p129
        %p411 = pneg %p153
        %p412 = pneg %p150
        %p413 = pneg %p174
        %p414 = pneg %p171
        %p415 = pneg %p195
        %p416 = pneg %p192
        %p417 = pneg %p216
        %p418 = pneg %p213
        %p419 = pneg %p237
        %p420 = pneg %p234
        %p421 = pneg %p258
        %p422 = pneg %p255
        %p423 = pneg %p279
        %p424 = pneg %p276
        %p425 = pneg %p300
        %p426 = pneg %p297
        %p427 = pneg %p326
        %p428 = pneg %p323
        %s429 = sand.u32 %s313, 1
        %s430 = scalar_lea.sflag [#allocation4], %s429
        %s431 = sand.u32 %s313, 1
        %s432 = smul.addr %s431, 128
        %s433 = scalar_lea.vmem [#allocation3], %s432
        %p434 = scmp.lt.s32.totalorder %s27, 1
        %s435 = scalar_select %p434, %s27, 1
        %s436 = smul.addr %s435, 8
        %s437 = smul.addr %s436, 8
        %s438 = scalar_lea.vmem %s0, %s437
        %v440 = vld [vmem:[%s438] sm:$0xff]
        %v441 = vld [vmem:[%s438 + $0x8] sm:$0xff]
        %v442 = vld [vmem:[%s438 + $0x10] sm:$0xff]
        %v443 = vld [vmem:[%s438 + $0x18] sm:$0xff]
        %v444 = vld [vmem:[%s438 + $0x20] sm:$0xff]
        %v445 = vld [vmem:[%s438 + $0x28] sm:$0xff]
        %v446 = vld [vmem:[%s438 + $0x30] sm:$0xff]
        %v447 = vld [vmem:[%s438 + $0x38] sm:$0xff]
        %448 = vxpose.xlu0.b32.start [1/16] %v440, 128
        %449 = vxpose.xlu0.b32.cont [2/16] %v442, 128
        %450 = vxpose.xlu0.b32.cont [3/16] %v444, 128
        %451 = vxpose.xlu0.b32.cont [4/16] %v446, 128
        %452 = vxpose.xlu0.b32.cont [5/16] 0.0, 128
        %453 = vxpose.xlu0.b32.cont [6/16] 0.0, 128
        %454 = vxpose.xlu0.b32.cont [7/16] 0.0, 128
        %455 = vxpose.xlu0.b32.cont [8/16] 0.0, 128
        %456 = vxpose.xlu0.b32.cont [9/16] 0.0, 128
        %457 = vxpose.xlu0.b32.cont [10/16] 0.0, 128
        %458 = vxpose.xlu0.b32.cont [11/16] 0.0, 128
        %459 = vxpose.xlu0.b32.cont [12/16] 0.0, 128
        %460 = vxpose.xlu0.b32.cont [13/16] 0.0, 128
        %461 = vxpose.xlu0.b32.cont [14/16] 0.0, 128
        %462 = vxpose.xlu0.b32.cont [15/16] 0.0, 128
        %463 = vxpose.xlu0.b32.end [16/16] 0.0, 128
        %v464 = vpop.trf.xlu0
        %v465 = vpop.trf.xlu0
        %v466 = vpop.trf.xlu0
        %v467 = vpop.trf.xlu0
        %v468 = vpop.trf.xlu0
        %v469 = vpop.trf.xlu0
        %v470 = vpop.trf.xlu0
        %v471 = vpop.trf.xlu0
        %v472 = vpop.trf.xlu0
        %v473 = vpop.trf.xlu0
        %v474 = vpop.trf.xlu0
        %v475 = vpop.trf.xlu0
        %v476 = vpop.trf.xlu0
        %v477 = vpop.trf.xlu0
        %v478 = vpop.trf.xlu0
        %v479 = vpop.trf.xlu0
        %480 = vxpose.xlu0.b32.start [1/16] %v441, 128
        %481 = vxpose.xlu0.b32.cont [2/16] %v443, 128
        %482 = vxpose.xlu0.b32.cont [3/16] %v445, 128
        %483 = vxpose.xlu0.b32.cont [4/16] %v447, 128
        %484 = vxpose.xlu0.b32.cont [5/16] 0.0, 128
        %485 = vxpose.xlu0.b32.cont [6/16] 0.0, 128
        %486 = vxpose.xlu0.b32.cont [7/16] 0.0, 128
        %487 = vxpose.xlu0.b32.cont [8/16] 0.0, 128
        %488 = vxpose.xlu0.b32.cont [9/16] 0.0, 128
        %489 = vxpose.xlu0.b32.cont [10/16] 0.0, 128
        %490 = vxpose.xlu0.b32.cont [11/16] 0.0, 128
        %491 = vxpose.xlu0.b32.cont [12/16] 0.0, 128
        %492 = vxpose.xlu0.b32.cont [13/16] 0.0, 128
        %493 = vxpose.xlu0.b32.cont [14/16] 0.0, 128
        %494 = vxpose.xlu0.b32.cont [15/16] 0.0, 128
        %495 = vxpose.xlu0.b32.end [16/16] 0.0, 128
        %v496 = vpop.trf.xlu0
        %v497 = vpop.trf.xlu0
        %v498 = vpop.trf.xlu0
        %v499 = vpop.trf.xlu0
        %v500 = vpop.trf.xlu0
        %v501 = vpop.trf.xlu0
        %v502 = vpop.trf.xlu0
        %v503 = vpop.trf.xlu0
        %v504 = vpop.trf.xlu0
        %v505 = vpop.trf.xlu0
        %v506 = vpop.trf.xlu0
        %v507 = vpop.trf.xlu0
        %v508 = vpop.trf.xlu0
        %v509 = vpop.trf.xlu0
        %v510 = vpop.trf.xlu0
        %v511 = vpop.trf.xlu0
        %vm512 = vcmask 261120
        %v513 = vsel %vm512, %v464, 0.0
        %v514 = vsel %vm512, %v465, 0.0
        %v515 = vadd.f32 %v513, %v514
        %v516 = vsel %vm512, %v466, 0.0
        %v517 = vadd.f32 %v515, %v516
        %v518 = vsel %vm512, %v467, 0.0
        %v519 = vadd.f32 %v517, %v518
        %v520 = vsel %vm512, %v468, 0.0
        %v521 = vadd.f32 %v519, %v520
        %v522 = vsel %vm512, %v469, 0.0
        %v523 = vadd.f32 %v521, %v522
        %v524 = vsel %vm512, %v470, 0.0
        %v525 = vadd.f32 %v523, %v524
        %v526 = vsel %vm512, %v471, 0.0
        %v527 = vadd.f32 %v525, %v526
        %v528 = vsel %vm512, %v472, 0.0
        %v529 = vadd.f32 %v527, %v528
        %v530 = vsel %vm512, %v473, 0.0
        %v531 = vadd.f32 %v529, %v530
        %v532 = vsel %vm512, %v474, 0.0
        %v533 = vadd.f32 %v531, %v532
        %v534 = vsel %vm512, %v475, 0.0
        %v535 = vadd.f32 %v533, %v534
        %v536 = vsel %vm512, %v476, 0.0
        %v537 = vadd.f32 %v535, %v536
        %v538 = vsel %vm512, %v477, 0.0
        %v539 = vadd.f32 %v537, %v538
        %v540 = vsel %vm512, %v478, 0.0
        %v541 = vadd.f32 %v539, %v540
        %v542 = vsel %vm512, %v479, 0.0
        %v543 = vadd.f32 %v541, %v542
        %v544 = vsel %vm512, %v496, 0.0
        %v545 = vadd.f32 %v543, %v544
        %v546 = vsel %vm512, %v497, 0.0
        %v547 = vadd.f32 %v545, %v546
        %v548 = vsel %vm512, %v498, 0.0
        %v549 = vadd.f32 %v547, %v548
        %v550 = vsel %vm512, %v499, 0.0
        %v551 = vadd.f32 %v549, %v550
        %v552 = vsel %vm512, %v500, 0.0
        %v553 = vadd.f32 %v551, %v552
        %v554 = vsel %vm512, %v501, 0.0
        %v555 = vadd.f32 %v553, %v554
        %v556 = vsel %vm512, %v502, 0.0
        %v557 = vadd.f32 %v555, %v556
        %v558 = vsel %vm512, %v503, 0.0
        %v559 = vadd.f32 %v557, %v558
        %v560 = vsel %vm512, %v504, 0.0
        %v561 = vadd.f32 %v559, %v560
        %v562 = vsel %vm512, %v505, 0.0
        %v563 = vadd.f32 %v561, %v562
        %v564 = vsel %vm512, %v506, 0.0
        %v565 = vadd.f32 %v563, %v564
        %v566 = vsel %vm512, %v507, 0.0
        %v567 = vadd.f32 %v565, %v566
        %v568 = vsel %vm512, %v508, 0.0
        %v569 = vadd.f32 %v567, %v568
        %v570 = vsel %vm512, %v509, 0.0
        %v571 = vadd.f32 %v569, %v570
        %v572 = vsel %vm512, %v510, 0.0
        %v573 = vadd.f32 %v571, %v572
        %v574 = vsel %vm512, %v511, 0.0
        %v575 = vadd.f32 %v573, %v574
        %v576 = vrot.slane %v575, 4
        %v577 = vadd.f32 %v575, %v576
        %v578 = vrot.slane %v577, 2
        %v579 = vadd.f32 %v577, %v578
        %v580 = vrot.slane %v579, 1
        %v581 = vadd.f32 %v579, %v580
        %v582 = vmul.f32 %v464, %v464
        %v583 = vmul.f32 %v465, %v465
        %v584 = vmul.f32 %v466, %v466
        %v585 = vmul.f32 %v467, %v467
        %v586 = vmul.f32 %v468, %v468
        %v587 = vmul.f32 %v469, %v469
        %v588 = vmul.f32 %v470, %v470
        %v589 = vmul.f32 %v471, %v471
        %v590 = vmul.f32 %v472, %v472
        %v591 = vmul.f32 %v473, %v473
        %v592 = vmul.f32 %v474, %v474
        %v593 = vmul.f32 %v475, %v475
        %v594 = vmul.f32 %v476, %v476
        %v595 = vmul.f32 %v477, %v477
        %v596 = vmul.f32 %v478, %v478
        %v597 = vmul.f32 %v479, %v479
        %v598 = vmul.f32 %v496, %v496
        %v599 = vmul.f32 %v497, %v497
        %v600 = vmul.f32 %v498, %v498
        %v601 = vmul.f32 %v499, %v499
        %v602 = vmul.f32 %v500, %v500
        %v603 = vmul.f32 %v501, %v501
        %v604 = vmul.f32 %v502, %v502
        %v605 = vmul.f32 %v503, %v503
        %v606 = vmul.f32 %v504, %v504
        %v607 = vmul.f32 %v505, %v505
        %v608 = vmul.f32 %v506, %v506
        %v609 = vmul.f32 %v507, %v507
        %v610 = vmul.f32 %v508, %v508
        %v611 = vmul.f32 %v509, %v509
        %v612 = vmul.f32 %v510, %v510
        %v613 = vmul.f32 %v511, %v511
        %v614 = vsel %vm512, %v582, 0.0
        %v615 = vsel %vm512, %v583, 0.0
        %v616 = vadd.f32 %v614, %v615
        %v617 = vsel %vm512, %v584, 0.0
        %v618 = vadd.f32 %v616, %v617
        %v619 = vsel %vm512, %v585, 0.0
        %v620 = vadd.f32 %v618, %v619
        %v621 = vsel %vm512, %v586, 0.0
        %v622 = vadd.f32 %v620, %v621
        %v623 = vsel %vm512, %v587, 0.0
        %v624 = vadd.f32 %v622, %v623
        %v625 = vsel %vm512, %v588, 0.0
        %v626 = vadd.f32 %v624, %v625
        %v627 = vsel %vm512, %v589, 0.0
        %v628 = vadd.f32 %v626, %v627
        %v629 = vsel %vm512, %v590, 0.0
        %v630 = vadd.f32 %v628, %v629
        %v631 = vsel %vm512, %v591, 0.0
        %v632 = vadd.f32 %v630, %v631
        %v633 = vsel %vm512, %v592, 0.0
        %v634 = vadd.f32 %v632, %v633
        %v635 = vsel %vm512, %v593, 0.0
        %v636 = vadd.f32 %v634, %v635
        %v637 = vsel %vm512, %v594, 0.0
        %v638 = vadd.f32 %v636, %v637
        %v639 = vsel %vm512, %v595, 0.0
        %v640 = vadd.f32 %v638, %v639
        %v641 = vsel %vm512, %v596, 0.0
        %v642 = vadd.f32 %v640, %v641
        %v643 = vsel %vm512, %v597, 0.0
        %v644 = vadd.f32 %v642, %v643
        %v645 = vsel %vm512, %v598, 0.0
        %v646 = vadd.f32 %v644, %v645
        %v647 = vsel %vm512, %v599, 0.0
        %v648 = vadd.f32 %v646, %v647
        %v649 = vsel %vm512, %v600, 0.0
        %v650 = vadd.f32 %v648, %v649
        %v651 = vsel %vm512, %v601, 0.0
        %v652 = vadd.f32 %v650, %v651
        %v653 = vsel %vm512, %v602, 0.0
        %v654 = vadd.f32 %v652, %v653
        %v655 = vsel %vm512, %v603, 0.0
        %v656 = vadd.f32 %v654, %v655
        %v657 = vsel %vm512, %v604, 0.0
        %v658 = vadd.f32 %v656, %v657
        %v659 = vsel %vm512, %v605, 0.0
        %v660 = vadd.f32 %v658, %v659
        %v661 = vsel %vm512, %v606, 0.0
        %v662 = vadd.f32 %v660, %v661
        %v663 = vsel %vm512, %v607, 0.0
        %v664 = vadd.f32 %v662, %v663
        %v665 = vsel %vm512, %v608, 0.0
        %v666 = vadd.f32 %v664, %v665
        %v667 = vsel %vm512, %v609, 0.0
        %v668 = vadd.f32 %v666, %v667
        %v669 = vsel %vm512, %v610, 0.0
        %v670 = vadd.f32 %v668, %v669
        %v671 = vsel %vm512, %v611, 0.0
        %v672 = vadd.f32 %v670, %v671
        %v673 = vsel %vm512, %v612, 0.0
        %v674 = vadd.f32 %v672, %v673
        %v675 = vsel %vm512, %v613, 0.0
        %v676 = vadd.f32 %v674, %v675
        %v677 = vrot.slane %v676, 4
        %v678 = vadd.f32 %v676, %v677
        %v679 = vrot.slane %v678, 2
        %v680 = vadd.f32 %v678, %v679
        %v681 = vrot.slane %v680, 1
        %v682 = vadd.f32 %v680, %v681
        %vm683 = vcmask 1040384
        %v684 = vsel %vm683, %v581, %v682
        %v685 = vmul.f32 %v684, 0.00390625
        %v686 = vld [vmem:[%s3] sm:$0xff]
        %v687 = vld [vmem:[%s3 + $0x8] sm:$0xff]
        %v688 = vld [vmem:[%s3 + $0x10] sm:$0xff]
        %v689 = vld [vmem:[%s3 + $0x18] sm:$0xff]
        %v691 = vsel %vm512, %v685, 0
        %693 = vmatpush.msra.mxu0 0.0
        %694 = vmatpush.msra.mxu0 0.0
        %695 = vmatpush.msra.mxu0 0.0
        %696 = vmatpush.msra.mxu0 0.0
        %697 = vmatpush.msra.mxu0 0.0
        %698 = vmatpush.msra.mxu0 0.0
        %699 = vmatpush.msra.mxu0 0.0
        %700 = vmatpush.msra.mxu0 0.0
        %701 = vmatpush.msra.mxu0 0.0
        %702 = vmatpush.msra.mxu0 0.0
        %703 = vmatpush.msra.mxu0 0.0
        %704 = vmatpush.msra.mxu0 0.0
        %705 = vmatpush.msra.mxu0 %v689
        %706 = vmatpush.msra.mxu0 %v688
        %707 = vmatpush.msra.mxu0 %v687
        %708 = vmatpush.msra.mxu0 %v686
        %709 = vmatmul.f32.gmra.mxu0 %v691
        %v710 = vpop.f32.mrf.mxu0
        %v711 = vadd.f32 0.0, %v710
        %712 = vdwg.mxu0
        %v713 = vmul.f32 %v711, %v711
        %v715 = vrot.slane %v713, 7
        %v717 = vsub.f32 %v711, %v715
        %v718 = vadd.f32 %v717, 1e-06
        %v719 = vrsqrt.pop %v718
        %v720 = vmul.f32 %v719, %v718
        %v721 = vmul.f32 %v720, %v719
        %v722 = vmul.f32 0.5, %v721
        %v723 = vsub.f32 1.5, %v722
        %v724 = vmul.f32 %v719, %v723
        %vm725 = vweird.f32 %v718
        %vm726 = vweird.f32 %v719
        %vm727 = vmor %vm725, %vm726
        %v728 = vsel %vm727, %v719, %v724
        %v729 = vperm.slane %v711, 0
        %v730 = vsub.f32 %v464, %v729
        %v731 = vsub.f32 %v465, %v729
        %v732 = vsub.f32 %v466, %v729
        %v733 = vsub.f32 %v467, %v729
        %v734 = vsub.f32 %v468, %v729
        %v735 = vsub.f32 %v469, %v729
        %v736 = vsub.f32 %v470, %v729
        %v737 = vsub.f32 %v471, %v729
        %v738 = vsub.f32 %v472, %v729
        %v739 = vsub.f32 %v473, %v729
        %v740 = vsub.f32 %v474, %v729
        %v741 = vsub.f32 %v475, %v729
        %v742 = vsub.f32 %v476, %v729
        %v743 = vsub.f32 %v477, %v729
        %v744 = vsub.f32 %v478, %v729
        %v745 = vsub.f32 %v479, %v729
        %v746 = vsub.f32 %v496, %v729
        %v747 = vsub.f32 %v497, %v729
        %v748 = vsub.f32 %v498, %v729
        %v749 = vsub.f32 %v499, %v729
        %v750 = vsub.f32 %v500, %v729
        %v751 = vsub.f32 %v501, %v729
        %v752 = vsub.f32 %v502, %v729
        %v753 = vsub.f32 %v503, %v729
        %v754 = vsub.f32 %v504, %v729
        %v755 = vsub.f32 %v505, %v729
        %v756 = vsub.f32 %v506, %v729
        %v757 = vsub.f32 %v507, %v729
        %v758 = vsub.f32 %v508, %v729
        %v759 = vsub.f32 %v509, %v729
        %v760 = vsub.f32 %v510, %v729
        %v761 = vsub.f32 %v511, %v729
        %v762 = vperm.slane %v728, 1
        %v763 = vmul.f32 %v730, %v762
        %v764 = vmul.f32 %v731, %v762
        %v765 = vmul.f32 %v732, %v762
        %v766 = vmul.f32 %v733, %v762
        %v767 = vmul.f32 %v734, %v762
        %v768 = vmul.f32 %v735, %v762
        %v769 = vmul.f32 %v736, %v762
        %v770 = vmul.f32 %v737, %v762
        %v771 = vmul.f32 %v738, %v762
        %v772 = vmul.f32 %v739, %v762
        %v773 = vmul.f32 %v740, %v762
        %v774 = vmul.f32 %v741, %v762
        %v775 = vmul.f32 %v742, %v762
        %v776 = vmul.f32 %v743, %v762
        %v777 = vmul.f32 %v744, %v762
        %v778 = vmul.f32 %v745, %v762
        %v779 = vmul.f32 %v746, %v762
        %v780 = vmul.f32 %v747, %v762
        %v781 = vmul.f32 %v748, %v762
        %v782 = vmul.f32 %v749, %v762
        %v783 = vmul.f32 %v750, %v762
        %v784 = vmul.f32 %v751, %v762
        %v785 = vmul.f32 %v752, %v762
        %v786 = vmul.f32 %v753, %v762
        %v787 = vmul.f32 %v754, %v762
        %v788 = vmul.f32 %v755, %v762
        %v789 = vmul.f32 %v756, %v762
        %v790 = vmul.f32 %v757, %v762
        %v791 = vmul.f32 %v758, %v762
        %v792 = vmul.f32 %v759, %v762
        %v793 = vmul.f32 %v760, %v762
        %v794 = vmul.f32 %v761, %v762
        %v795 = vld [vmem:[%s1] sm:$0x1]
        %v797 = vperm.slane %v795, 0
        %v799 = vmul.f32 %v763, %v797
        %v800 = vmul.f32 %v764, %v797
        %v801 = vmul.f32 %v765, %v797
        %v802 = vmul.f32 %v766, %v797
        %v803 = vmul.f32 %v767, %v797
        %v804 = vmul.f32 %v768, %v797
        %v805 = vmul.f32 %v769, %v797
        %v806 = vmul.f32 %v770, %v797
        %v807 = vmul.f32 %v771, %v797
        %v808 = vmul.f32 %v772, %v797
        %v809 = vmul.f32 %v773, %v797
        %v810 = vmul.f32 %v774, %v797
        %v811 = vmul.f32 %v775, %v797
        %v812 = vmul.f32 %v776, %v797
        %v813 = vmul.f32 %v777, %v797
        %v814 = vmul.f32 %v778, %v797
        %v815 = vmul.f32 %v779, %v797
        %v816 = vmul.f32 %v780, %v797
        %v817 = vmul.f32 %v781, %v797
        %v818 = vmul.f32 %v782, %v797
        %v819 = vmul.f32 %v783, %v797
        %v820 = vmul.f32 %v784, %v797
        %v821 = vmul.f32 %v785, %v797
        %v822 = vmul.f32 %v786, %v797
        %v823 = vmul.f32 %v787, %v797
        %v824 = vmul.f32 %v788, %v797
        %v825 = vmul.f32 %v789, %v797
        %v826 = vmul.f32 %v790, %v797
        %v827 = vmul.f32 %v791, %v797
        %v828 = vmul.f32 %v792, %v797
        %v829 = vmul.f32 %v793, %v797
        %v830 = vmul.f32 %v794, %v797
        %v831 = vld [vmem:[%s2] sm:$0x1]
        %v833 = vperm.slane %v831, 0
        %v835 = vadd.f32 %v799, %v833
        %v836 = vadd.f32 %v800, %v833
        %v837 = vadd.f32 %v801, %v833
        %v838 = vadd.f32 %v802, %v833
        %v839 = vadd.f32 %v803, %v833
        %v840 = vadd.f32 %v804, %v833
        %v841 = vadd.f32 %v805, %v833
        %v842 = vadd.f32 %v806, %v833
        %v843 = vadd.f32 %v807, %v833
        %v844 = vadd.f32 %v808, %v833
        %v845 = vadd.f32 %v809, %v833
        %v846 = vadd.f32 %v810, %v833
        %v847 = vadd.f32 %v811, %v833
        %v848 = vadd.f32 %v812, %v833
        %v849 = vadd.f32 %v813, %v833
        %v850 = vadd.f32 %v814, %v833
        %v851 = vadd.f32 %v815, %v833
        %v852 = vadd.f32 %v816, %v833
        %v853 = vadd.f32 %v817, %v833
        %v854 = vadd.f32 %v818, %v833
        %v855 = vadd.f32 %v819, %v833
        %v856 = vadd.f32 %v820, %v833
        %v857 = vadd.f32 %v821, %v833
        %v858 = vadd.f32 %v822, %v833
        %v859 = vadd.f32 %v823, %v833
        %v860 = vadd.f32 %v824, %v833
        %v861 = vadd.f32 %v825, %v833
        %v862 = vadd.f32 %v826, %v833
        %v863 = vadd.f32 %v827, %v833
        %v864 = vadd.f32 %v828, %v833
        %v865 = vadd.f32 %v829, %v833
        %v866 = vadd.f32 %v830, %v833
        %v867 = vsub.f32 0.0, %v835
        %v868 = vsub.f32 0.0, %v836
        %v869 = vsub.f32 0.0, %v837
        %v870 = vsub.f32 0.0, %v838
        %v871 = vsub.f32 0.0, %v839
        %v872 = vsub.f32 0.0, %v840
        %v873 = vsub.f32 0.0, %v841
        %v874 = vsub.f32 0.0, %v842
        %v875 = vsub.f32 0.0, %v843
        %v876 = vsub.f32 0.0, %v844
        %v877 = vsub.f32 0.0, %v845
        %v878 = vsub.f32 0.0, %v846
        %v879 = vsub.f32 0.0, %v847
        %v880 = vsub.f32 0.0, %v848
        %v881 = vsub.f32 0.0, %v849
        %v882 = vsub.f32 0.0, %v850
        %v883 = vsub.f32 0.0, %v851
        %v884 = vsub.f32 0.0, %v852
        %v885 = vsub.f32 0.0, %v853
        %v886 = vsub.f32 0.0, %v854
        %v887 = vsub.f32 0.0, %v855
        %v888 = vsub.f32 0.0, %v856
        %v889 = vsub.f32 0.0, %v857
        %v890 = vsub.f32 0.0, %v858
        %v891 = vsub.f32 0.0, %v859
        %v892 = vsub.f32 0.0, %v860
        %v893 = vsub.f32 0.0, %v861
        %v894 = vsub.f32 0.0, %v862
        %v895 = vsub.f32 0.0, %v863
        %v896 = vsub.f32 0.0, %v864
        %v897 = vsub.f32 0.0, %v865
        %v898 = vsub.f32 0.0, %v866
        %v899 = vmul.f32 %v867, 1.442695
        %v900 = vpow.pop %v899
        %v901 = vmul.f32 %v868, 1.442695
        %v902 = vpow.pop %v901
        %v903 = vmul.f32 %v869, 1.442695
        %v904 = vpow.pop %v903
        %v905 = vmul.f32 %v870, 1.442695
        %v906 = vpow.pop %v905
        %v907 = vmul.f32 %v871, 1.442695
        %v908 = vpow.pop %v907
        %v909 = vmul.f32 %v872, 1.442695
        %v910 = vpow.pop %v909
        %v911 = vmul.f32 %v873, 1.442695
        %v912 = vpow.pop %v911
        %v913 = vmul.f32 %v874, 1.442695
        %v914 = vpow.pop %v913
        %v915 = vmul.f32 %v875, 1.442695
        %v916 = vpow.pop %v915
        %v917 = vmul.f32 %v876, 1.442695
        %v918 = vpow.pop %v917
        %v919 = vmul.f32 %v877, 1.442695
        %v920 = vpow.pop %v919
        %v921 = vmul.f32 %v878, 1.442695
        %v922 = vpow.pop %v921
        %v923 = vmul.f32 %v879, 1.442695
        %v924 = vpow.pop %v923
        %v925 = vmul.f32 %v880, 1.442695
        %v926 = vpow.pop %v925
        %v927 = vmul.f32 %v881, 1.442695
        %v928 = vpow.pop %v927
        %v929 = vmul.f32 %v882, 1.442695
        %v930 = vpow.pop %v929
        %v931 = vmul.f32 %v883, 1.442695
        %v932 = vpow.pop %v931
        %v933 = vmul.f32 %v884, 1.442695
        %v934 = vpow.pop %v933
        %v935 = vmul.f32 %v885, 1.442695
        %v936 = vpow.pop %v935
        %v937 = vmul.f32 %v886, 1.442695
        %v938 = vpow.pop %v937
        %v939 = vmul.f32 %v887, 1.442695
        %v940 = vpow.pop %v939
        %v941 = vmul.f32 %v888, 1.442695
        %v942 = vpow.pop %v941
        %v943 = vmul.f32 %v889, 1.442695
        %v944 = vpow.pop %v943
        %v945 = vmul.f32 %v890, 1.442695
        %v946 = vpow.pop %v945
        %v947 = vmul.f32 %v891, 1.442695
        %v948 = vpow.pop %v947
        %v949 = vmul.f32 %v892, 1.442695
        %v950 = vpow.pop %v949
        %v951 = vmul.f32 %v893, 1.442695
        %v952 = vpow.pop %v951
        %v953 = vmul.f32 %v894, 1.442695
        %v954 = vpow.pop %v953
        %v955 = vmul.f32 %v895, 1.442695
        %v956 = vpow.pop %v955
        %v957 = vmul.f32 %v896, 1.442695
        %v958 = vpow.pop %v957
        %v959 = vmul.f32 %v897, 1.442695
        %v960 = vpow.pop %v959
        %v961 = vmul.f32 %v898, 1.442695
        %v962 = vpow.pop %v961
        %v963 = vadd.f32 %v900, 1.0
        %v964 = vadd.f32 %v902, 1.0
        %v965 = vadd.f32 %v904, 1.0
        %v966 = vadd.f32 %v906, 1.0
        %v967 = vadd.f32 %v908, 1.0
        %v968 = vadd.f32 %v910, 1.0
        %v969 = vadd.f32 %v912, 1.0
        %v970 = vadd.f32 %v914, 1.0
        %v971 = vadd.f32 %v916, 1.0
        %v972 = vadd.f32 %v918, 1.0
        %v973 = vadd.f32 %v920, 1.0
        %v974 = vadd.f32 %v922, 1.0
        %v975 = vadd.f32 %v924, 1.0
        %v976 = vadd.f32 %v926, 1.0
        %v977 = vadd.f32 %v928, 1.0
        %v978 = vadd.f32 %v930, 1.0
        %v979 = vadd.f32 %v932, 1.0
        %v980 = vadd.f32 %v934, 1.0
        %v981 = vadd.f32 %v936, 1.0
        %v982 = vadd.f32 %v938, 1.0
        %v983 = vadd.f32 %v940, 1.0
        %v984 = vadd.f32 %v942, 1.0
        %v985 = vadd.f32 %v944, 1.0
        %v986 = vadd.f32 %v946, 1.0
        %v987 = vadd.f32 %v948, 1.0
        %v988 = vadd.f32 %v950, 1.0
        %v989 = vadd.f32 %v952, 1.0
        %v990 = vadd.f32 %v954, 1.0
        %v991 = vadd.f32 %v956, 1.0
        %v992 = vadd.f32 %v958, 1.0
        %v993 = vadd.f32 %v960, 1.0
        %v994 = vadd.f32 %v962, 1.0
        %v995 = vrcp.pop %v963
        %v996 = vrcp.pop %v964
        %v997 = vrcp.pop %v965
        %v998 = vrcp.pop %v966
        %v999 = vrcp.pop %v967
        %v1000 = vrcp.pop %v968
        %v1001 = vrcp.pop %v969
        %v1002 = vrcp.pop %v970
        %v1003 = vrcp.pop %v971
        %v1004 = vrcp.pop %v972
        %v1005 = vrcp.pop %v973
        %v1006 = vrcp.pop %v974
        %v1007 = vrcp.pop %v975
        %v1008 = vrcp.pop %v976
        %v1009 = vrcp.pop %v977
        %v1010 = vrcp.pop %v978
        %v1011 = vrcp.pop %v979
        %v1012 = vrcp.pop %v980
        %v1013 = vrcp.pop %v981
        %v1014 = vrcp.pop %v982
        %v1015 = vrcp.pop %v983
        %v1016 = vrcp.pop %v984
        %v1017 = vrcp.pop %v985
        %v1018 = vrcp.pop %v986
        %v1019 = vrcp.pop %v987
        %v1020 = vrcp.pop %v988
        %v1021 = vrcp.pop %v989
        %v1022 = vrcp.pop %v990
        %v1023 = vrcp.pop %v991
        %v1024 = vrcp.pop %v992
        %v1025 = vrcp.pop %v993
        %v1026 = vrcp.pop %v994
        %v1027 = vmul.f32 %v835, %v995
        %v1028 = vmul.f32 %v836, %v996
        %v1029 = vmul.f32 %v837, %v997
        %v1030 = vmul.f32 %v838, %v998
        %v1031 = vmul.f32 %v839, %v999
        %v1032 = vmul.f32 %v840, %v1000
        %v1033 = vmul.f32 %v841, %v1001
        %v1034 = vmul.f32 %v842, %v1002
        %v1035 = vmul.f32 %v843, %v1003
        %v1036 = vmul.f32 %v844, %v1004
        %v1037 = vmul.f32 %v845, %v1005
        %v1038 = vmul.f32 %v846, %v1006
        %v1039 = vmul.f32 %v847, %v1007
        %v1040 = vmul.f32 %v848, %v1008
        %v1041 = vmul.f32 %v849, %v1009
        %v1042 = vmul.f32 %v850, %v1010
        %v1043 = vmul.f32 %v851, %v1011
        %v1044 = vmul.f32 %v852, %v1012
        %v1045 = vmul.f32 %v853, %v1013
        %v1046 = vmul.f32 %v854, %v1014
        %v1047 = vmul.f32 %v855, %v1015
        %v1048 = vmul.f32 %v856, %v1016
        %v1049 = vmul.f32 %v857, %v1017
        %v1050 = vmul.f32 %v858, %v1018
        %v1051 = vmul.f32 %v859, %v1019
        %v1052 = vmul.f32 %v860, %v1020
        %v1053 = vmul.f32 %v861, %v1021
        %v1054 = vmul.f32 %v862, %v1022
        %v1055 = vmul.f32 %v863, %v1023
        %v1056 = vmul.f32 %v864, %v1024
        %v1057 = vmul.f32 %v865, %v1025
        %v1058 = vmul.f32 %v866, %v1026
        %v1059 = vpack.c.bf16 %v1028, %v1027
        %v1060 = vpack.c.bf16 %v1030, %v1029
        %v1061 = vpack.c.bf16 %v1032, %v1031
        %v1062 = vpack.c.bf16 %v1034, %v1033
        %v1063 = vpack.c.bf16 %v1036, %v1035
        %v1064 = vpack.c.bf16 %v1038, %v1037
        %v1065 = vpack.c.bf16 %v1040, %v1039
        %v1066 = vpack.c.bf16 %v1042, %v1041
        %v1067 = vpack.c.bf16 %v1044, %v1043
        %v1068 = vpack.c.bf16 %v1046, %v1045
        %v1069 = vpack.c.bf16 %v1048, %v1047
        %v1070 = vpack.c.bf16 %v1050, %v1049
        %v1071 = vpack.c.bf16 %v1052, %v1051
        %v1072 = vpack.c.bf16 %v1054, %v1053
        %v1073 = vpack.c.bf16 %v1056, %v1055
        %v1074 = vpack.c.bf16 %v1058, %v1057
        %v1075 = vld [vmem:[%s4] sm:$0xf]
        %v1076 = vld [vmem:[%s4 + $0x4] sm:$0xf]
        %v1077 = vld [vmem:[%s4 + $0x8] sm:$0xf]
        %v1078 = vld [vmem:[%s4 + $0xc] sm:$0xf]
        %v1079 = vld [vmem:[%s5] sm:$0x1]
        %v1081 = vperm.slane %v1079, 0
        %v1087 = vunpack.c.l.b16 %v1075
        %v1088 = vunpack.c.l.b16 %v1076
        %v1089 = vunpack.c.l.b16 %v1077
        %v1090 = vunpack.c.l.b16 %v1078
        %v1091 = vpack.c.b16 %v1088, %v1087
        %v1092 = vpack.c.b16 %v1090, %v1089
        %v1096 = vsel %vm512, %v1059, 0
        %v1099 = vsel %vm512, %v1060, 0
        %v1102 = vsel %vm512, %v1061, 0
        %v1105 = vsel %vm512, %v1062, 0
        %v1108 = vsel %vm512, %v1063, 0
        %v1111 = vsel %vm512, %v1064, 0
        %v1114 = vsel %vm512, %v1065, 0
        %v1117 = vsel %vm512, %v1066, 0
        %v1120 = vsel %vm512, %v1067, 0
        %v1123 = vsel %vm512, %v1068, 0
        %v1126 = vsel %vm512, %v1069, 0
        %v1129 = vsel %vm512, %v1070, 0
        %v1132 = vsel %vm512, %v1071, 0
        %v1135 = vsel %vm512, %v1072, 0
        %v1138 = vsel %vm512, %v1073, 0
        %v1141 = vsel %vm512, %v1074, 0
        %1143 = vmatpush.bf16.msra.mxu0 0
        %1144 = vmatpush.bf16.msra.mxu0 0
        %1145 = vmatpush.bf16.msra.mxu0 0
        %1146 = vmatpush.bf16.msra.mxu0 0
        %1147 = vmatpush.bf16.msra.mxu0 0
        %1148 = vmatpush.bf16.msra.mxu0 0
        %1149 = vmatpush.bf16.msra.mxu0 %v1092
        %1150 = vmatpush.bf16.msra.mxu0 %v1091
        %1151 = vmatmul.bf16.gmra.mxu0 %v1096
        %v1152 = vpop.f32.mrf.mxu0
        %v1153 = vadd.f32 %v1081, %v1152
        %v1154 = vpop.f32.mrf.mxu0
        %v1155 = vadd.f32 %v1081, %v1154
        %1156 = vmatmul.bf16.gmra.mxu0 %v1099
        %v1157 = vpop.f32.mrf.mxu0
        %v1158 = vadd.f32 %v1081, %v1157
        %v1159 = vpop.f32.mrf.mxu0
        %v1160 = vadd.f32 %v1081, %v1159
        %1161 = vmatmul.bf16.gmra.mxu0 %v1102
        %v1162 = vpop.f32.mrf.mxu0
        %v1163 = vadd.f32 %v1081, %v1162
        %v1164 = vpop.f32.mrf.mxu0
        %v1165 = vadd.f32 %v1081, %v1164
        %1166 = vmatmul.bf16.gmra.mxu0 %v1105
        %v1167 = vpop.f32.mrf.mxu0
        %v1168 = vadd.f32 %v1081, %v1167
        %v1169 = vpop.f32.mrf.mxu0
        %v1170 = vadd.f32 %v1081, %v1169
        %1171 = vmatmul.bf16.gmra.mxu0 %v1108
        %v1172 = vpop.f32.mrf.mxu0
        %v1173 = vadd.f32 %v1081, %v1172
        %v1174 = vpop.f32.mrf.mxu0
        %v1175 = vadd.f32 %v1081, %v1174
        %1176 = vmatmul.bf16.gmra.mxu0 %v1111
        %v1177 = vpop.f32.mrf.mxu0
        %v1178 = vadd.f32 %v1081, %v1177
        %v1179 = vpop.f32.mrf.mxu0
        %v1180 = vadd.f32 %v1081, %v1179
        %1181 = vmatmul.bf16.gmra.mxu0 %v1114
        %v1182 = vpop.f32.mrf.mxu0
        %v1183 = vadd.f32 %v1081, %v1182
        %v1184 = vpop.f32.mrf.mxu0
        %v1185 = vadd.f32 %v1081, %v1184
        %1186 = vmatmul.bf16.gmra.mxu0 %v1117
        %v1187 = vpop.f32.mrf.mxu0
        %v1188 = vadd.f32 %v1081, %v1187
        %v1189 = vpop.f32.mrf.mxu0
        %v1190 = vadd.f32 %v1081, %v1189
        %1191 = vmatmul.bf16.gmra.mxu0 %v1120
        %v1192 = vpop.f32.mrf.mxu0
        %v1193 = vadd.f32 %v1081, %v1192
        %v1194 = vpop.f32.mrf.mxu0
        %v1195 = vadd.f32 %v1081, %v1194
        %1196 = vmatmul.bf16.gmra.mxu0 %v1123
        %v1197 = vpop.f32.mrf.mxu0
        %v1198 = vadd.f32 %v1081, %v1197
        %v1199 = vpop.f32.mrf.mxu0
        %v1200 = vadd.f32 %v1081, %v1199
        %1201 = vmatmul.bf16.gmra.mxu0 %v1126
        %v1202 = vpop.f32.mrf.mxu0
        %v1203 = vadd.f32 %v1081, %v1202
        %v1204 = vpop.f32.mrf.mxu0
        %v1205 = vadd.f32 %v1081, %v1204
        %1206 = vmatmul.bf16.gmra.mxu0 %v1129
        %v1207 = vpop.f32.mrf.mxu0
        %v1208 = vadd.f32 %v1081, %v1207
        %v1209 = vpop.f32.mrf.mxu0
        %v1210 = vadd.f32 %v1081, %v1209
        %1211 = vmatmul.bf16.gmra.mxu0 %v1132
        %v1212 = vpop.f32.mrf.mxu0
        %v1213 = vadd.f32 %v1081, %v1212
        %v1214 = vpop.f32.mrf.mxu0
        %v1215 = vadd.f32 %v1081, %v1214
        %1216 = vmatmul.bf16.gmra.mxu0 %v1135
        %v1217 = vpop.f32.mrf.mxu0
        %v1218 = vadd.f32 %v1081, %v1217
        %v1219 = vpop.f32.mrf.mxu0
        %v1220 = vadd.f32 %v1081, %v1219
        %1221 = vmatmul.bf16.gmra.mxu0 %v1138
        %v1222 = vpop.f32.mrf.mxu0
        %v1223 = vadd.f32 %v1081, %v1222
        %v1224 = vpop.f32.mrf.mxu0
        %v1225 = vadd.f32 %v1081, %v1224
        %1226 = vmatmul.bf16.gmra.mxu0 %v1141
        %v1227 = vpop.f32.mrf.mxu0
        %v1228 = vadd.f32 %v1081, %v1227
        %v1229 = vpop.f32.mrf.mxu0
        %v1230 = vadd.f32 %v1081, %v1229
        %1231 = vdwg.mxu0
        %vm1232 = vcmask 523264
        %v1233 = vsel %vm1232, %v1153, 0.0
        %v1234 = vsel %vm1232, %v1155, 0.0
        %v1235 = vadd.f32 %v1233, %v1234
        %v1236 = vsel %vm1232, %v1158, 0.0
        %v1237 = vadd.f32 %v1235, %v1236
        %v1238 = vsel %vm1232, %v1160, 0.0
        %v1239 = vadd.f32 %v1237, %v1238
        %v1240 = vsel %vm1232, %v1163, 0.0
        %v1241 = vadd.f32 %v1239, %v1240
        %v1242 = vsel %vm1232, %v1165, 0.0
        %v1243 = vadd.f32 %v1241, %v1242
        %v1244 = vsel %vm1232, %v1168, 0.0
        %v1245 = vadd.f32 %v1243, %v1244
        %v1246 = vsel %vm1232, %v1170, 0.0
        %v1247 = vadd.f32 %v1245, %v1246
        %v1248 = vsel %vm1232, %v1173, 0.0
        %v1249 = vadd.f32 %v1247, %v1248
        %v1250 = vsel %vm1232, %v1175, 0.0
        %v1251 = vadd.f32 %v1249, %v1250
        %v1252 = vsel %vm1232, %v1178, 0.0
        %v1253 = vadd.f32 %v1251, %v1252
        %v1254 = vsel %vm1232, %v1180, 0.0
        %v1255 = vadd.f32 %v1253, %v1254
        %v1256 = vsel %vm1232, %v1183, 0.0
        %v1257 = vadd.f32 %v1255, %v1256
        %v1258 = vsel %vm1232, %v1185, 0.0
        %v1259 = vadd.f32 %v1257, %v1258
        %v1260 = vsel %vm1232, %v1188, 0.0
        %v1261 = vadd.f32 %v1259, %v1260
        %v1262 = vsel %vm1232, %v1190, 0.0
        %v1263 = vadd.f32 %v1261, %v1262
        %v1264 = vsel %vm1232, %v1193, 0.0
        %v1265 = vadd.f32 %v1263, %v1264
        %v1266 = vsel %vm1232, %v1195, 0.0
        %v1267 = vadd.f32 %v1265, %v1266
        %v1268 = vsel %vm1232, %v1198, 0.0
        %v1269 = vadd.f32 %v1267, %v1268
        %v1270 = vsel %vm1232, %v1200, 0.0
        %v1271 = vadd.f32 %v1269, %v1270
        %v1272 = vsel %vm1232, %v1203, 0.0
        %v1273 = vadd.f32 %v1271, %v1272
        %v1274 = vsel %vm1232, %v1205, 0.0
        %v1275 = vadd.f32 %v1273, %v1274
        %v1276 = vsel %vm1232, %v1208, 0.0
        %v1277 = vadd.f32 %v1275, %v1276
        %v1278 = vsel %vm1232, %v1210, 0.0
        %v1279 = vadd.f32 %v1277, %v1278
        %v1280 = vsel %vm1232, %v1213, 0.0
        %v1281 = vadd.f32 %v1279, %v1280
        %v1282 = vsel %vm1232, %v1215, 0.0
        %v1283 = vadd.f32 %v1281, %v1282
        %v1284 = vsel %vm1232, %v1218, 0.0
        %v1285 = vadd.f32 %v1283, %v1284
        %v1286 = vsel %vm1232, %v1220, 0.0
        %v1287 = vadd.f32 %v1285, %v1286
        %v1288 = vsel %vm1232, %v1223, 0.0
        %v1289 = vadd.f32 %v1287, %v1288
        %v1290 = vsel %vm1232, %v1225, 0.0
        %v1291 = vadd.f32 %v1289, %v1290
        %v1292 = vsel %vm1232, %v1228, 0.0
        %v1293 = vadd.f32 %v1291, %v1292
        %v1294 = vsel %vm1232, %v1230, 0.0
        %v1295 = vadd.f32 %v1293, %v1294
        %v1296 = vrot.slane %v1295, 4
        %v1297 = vadd.f32 %v1295, %v1296
        %v1298 = vrot.slane %v1297, 2
        %v1299 = vadd.f32 %v1297, %v1298
        %v1300 = vrot.slane %v1299, 1
        %v1301 = vadd.f32 %v1299, %v1300
        %v1302 = vmul.f32 %v1153, %v1153
        %v1303 = vmul.f32 %v1155, %v1155
        %v1304 = vmul.f32 %v1158, %v1158
        %v1305 = vmul.f32 %v1160, %v1160
        %v1306 = vmul.f32 %v1163, %v1163
        %v1307 = vmul.f32 %v1165, %v1165
        %v1308 = vmul.f32 %v1168, %v1168
        %v1309 = vmul.f32 %v1170, %v1170
        %v1310 = vmul.f32 %v1173, %v1173
        %v1311 = vmul.f32 %v1175, %v1175
        %v1312 = vmul.f32 %v1178, %v1178
        %v1313 = vmul.f32 %v1180, %v1180
        %v1314 = vmul.f32 %v1183, %v1183
        %v1315 = vmul.f32 %v1185, %v1185
        %v1316 = vmul.f32 %v1188, %v1188
        %v1317 = vmul.f32 %v1190, %v1190
        %v1318 = vmul.f32 %v1193, %v1193
        %v1319 = vmul.f32 %v1195, %v1195
        %v1320 = vmul.f32 %v1198, %v1198
        %v1321 = vmul.f32 %v1200, %v1200
        %v1322 = vmul.f32 %v1203, %v1203
        %v1323 = vmul.f32 %v1205, %v1205
        %v1324 = vmul.f32 %v1208, %v1208
        %v1325 = vmul.f32 %v1210, %v1210
        %v1326 = vmul.f32 %v1213, %v1213
        %v1327 = vmul.f32 %v1215, %v1215
        %v1328 = vmul.f32 %v1218, %v1218
        %v1329 = vmul.f32 %v1220, %v1220
        %v1330 = vmul.f32 %v1223, %v1223
        %v1331 = vmul.f32 %v1225, %v1225
        %v1332 = vmul.f32 %v1228, %v1228
        %v1333 = vmul.f32 %v1230, %v1230
        %v1334 = vsel %vm1232, %v1302, 0.0
        %v1335 = vsel %vm1232, %v1303, 0.0
        %v1336 = vadd.f32 %v1334, %v1335
        %v1337 = vsel %vm1232, %v1304, 0.0
        %v1338 = vadd.f32 %v1336, %v1337
        %v1339 = vsel %vm1232, %v1305, 0.0
        %v1340 = vadd.f32 %v1338, %v1339
        %v1341 = vsel %vm1232, %v1306, 0.0
        %v1342 = vadd.f32 %v1340, %v1341
        %v1343 = vsel %vm1232, %v1307, 0.0
        %v1344 = vadd.f32 %v1342, %v1343
        %v1345 = vsel %vm1232, %v1308, 0.0
        %v1346 = vadd.f32 %v1344, %v1345
        %v1347 = vsel %vm1232, %v1309, 0.0
        %v1348 = vadd.f32 %v1346, %v1347
        %v1349 = vsel %vm1232, %v1310, 0.0
        %v1350 = vadd.f32 %v1348, %v1349
        %v1351 = vsel %vm1232, %v1311, 0.0
        %v1352 = vadd.f32 %v1350, %v1351
        %v1353 = vsel %vm1232, %v1312, 0.0
        %v1354 = vadd.f32 %v1352, %v1353
        %v1355 = vsel %vm1232, %v1313, 0.0
        %v1356 = vadd.f32 %v1354, %v1355
        %v1357 = vsel %vm1232, %v1314, 0.0
        %v1358 = vadd.f32 %v1356, %v1357
        %v1359 = vsel %vm1232, %v1315, 0.0
        %v1360 = vadd.f32 %v1358, %v1359
        %v1361 = vsel %vm1232, %v1316, 0.0
        %v1362 = vadd.f32 %v1360, %v1361
        %v1363 = vsel %vm1232, %v1317, 0.0
        %v1364 = vadd.f32 %v1362, %v1363
        %v1365 = vsel %vm1232, %v1318, 0.0
        %v1366 = vadd.f32 %v1364, %v1365
        %v1367 = vsel %vm1232, %v1319, 0.0
        %v1368 = vadd.f32 %v1366, %v1367
        %v1369 = vsel %vm1232, %v1320, 0.0
        %v1370 = vadd.f32 %v1368, %v1369
        %v1371 = vsel %vm1232, %v1321, 0.0
        %v1372 = vadd.f32 %v1370, %v1371
        %v1373 = vsel %vm1232, %v1322, 0.0
        %v1374 = vadd.f32 %v1372, %v1373
        %v1375 = vsel %vm1232, %v1323, 0.0
        %v1376 = vadd.f32 %v1374, %v1375
        %v1377 = vsel %vm1232, %v1324, 0.0
        %v1378 = vadd.f32 %v1376, %v1377
        %v1379 = vsel %vm1232, %v1325, 0.0
        %v1380 = vadd.f32 %v1378, %v1379
        %v1381 = vsel %vm1232, %v1326, 0.0
        %v1382 = vadd.f32 %v1380, %v1381
        %v1383 = vsel %vm1232, %v1327, 0.0
        %v1384 = vadd.f32 %v1382, %v1383
        %v1385 = vsel %vm1232, %v1328, 0.0
        %v1386 = vadd.f32 %v1384, %v1385
        %v1387 = vsel %vm1232, %v1329, 0.0
        %v1388 = vadd.f32 %v1386, %v1387
        %v1389 = vsel %vm1232, %v1330, 0.0
        %v1390 = vadd.f32 %v1388, %v1389
        %v1391 = vsel %vm1232, %v1331, 0.0
        %v1392 = vadd.f32 %v1390, %v1391
        %v1393 = vsel %vm1232, %v1332, 0.0
        %v1394 = vadd.f32 %v1392, %v1393
        %v1395 = vsel %vm1232, %v1333, 0.0
        %v1396 = vadd.f32 %v1394, %v1395
        %v1397 = vrot.slane %v1396, 4
        %v1398 = vadd.f32 %v1396, %v1397
        %v1399 = vrot.slane %v1398, 2
        %v1400 = vadd.f32 %v1398, %v1399
        %v1401 = vrot.slane %v1400, 1
        %v1402 = vadd.f32 %v1400, %v1401
        %v1403 = vsel %vm683, %v1301, %v1402
        %v1404 = vmul.f32 %v1403, 0.00390625
        %v1405 = vld [vmem:[%s8] sm:$0xff]
        %v1406 = vld [vmem:[%s8 + $0x8] sm:$0xff]
        %v1407 = vld [vmem:[%s8 + $0x10] sm:$0xff]
        %v1408 = vld [vmem:[%s8 + $0x18] sm:$0xff]
        %v1409 = vld [vmem:[%s8 + $0x20] sm:$0xff]
        %v1410 = vld [vmem:[%s8 + $0x28] sm:$0xff]
        %v1411 = vld [vmem:[%s8 + $0x30] sm:$0xff]
        %v1412 = vld [vmem:[%s8 + $0x38] sm:$0xff]
        %v1414 = vsel %vm1232, %v1404, 0
        %1416 = vmatpush.msra.mxu0 0.0
        %1417 = vmatpush.msra.mxu0 0.0
        %1418 = vmatpush.msra.mxu0 0.0
        %1419 = vmatpush.msra.mxu0 0.0
        %1420 = vmatpush.msra.mxu0 0.0
        %1421 = vmatpush.msra.mxu0 0.0
        %1422 = vmatpush.msra.mxu0 0.0
        %1423 = vmatpush.msra.mxu0 0.0
        %1424 = vmatpush.msra.mxu0 %v1412
        %1425 = vmatpush.msra.mxu0 %v1411
        %1426 = vmatpush.msra.mxu0 %v1410
        %1427 = vmatpush.msra.mxu0 %v1409
        %1428 = vmatpush.msra.mxu0 %v1408
        %1429 = vmatpush.msra.mxu0 %v1407
        %1430 = vmatpush.msra.mxu0 %v1406
        %1431 = vmatpush.msra.mxu0 %v1405
        %1432 = vmatmul.f32.gmra.mxu0 %v1414
        %v1433 = vpop.f32.mrf.mxu0
        %v1434 = vadd.f32 0.0, %v1433
        %1435 = vdwg.mxu0
        %v1436 = vmul.f32 %v1434, %v1434
        %v1438 = vrot.slane %v1436, 7
        %v1440 = vsub.f32 %v1434, %v1438
        %v1441 = vadd.f32 %v1440, 1e-06
        %v1442 = vrsqrt.pop %v1441
        %v1443 = vmul.f32 %v1442, %v1441
        %v1444 = vmul.f32 %v1443, %v1442
        %v1445 = vmul.f32 0.5, %v1444
        %v1446 = vsub.f32 1.5, %v1445
        %v1447 = vmul.f32 %v1442, %v1446
        %vm1448 = vweird.f32 %v1441
        %vm1449 = vweird.f32 %v1442
        %vm1450 = vmor %vm1448, %vm1449
        %v1451 = vsel %vm1450, %v1442, %v1447
        %v1452 = vperm.slane %v1434, 0
        %v1453 = vsub.f32 %v1153, %v1452
        %v1454 = vsub.f32 %v1155, %v1452
        %v1455 = vsub.f32 %v1158, %v1452
        %v1456 = vsub.f32 %v1160, %v1452
        %v1457 = vsub.f32 %v1163, %v1452
        %v1458 = vsub.f32 %v1165, %v1452
        %v1459 = vsub.f32 %v1168, %v1452
        %v1460 = vsub.f32 %v1170, %v1452
        %v1461 = vsub.f32 %v1173, %v1452
        %v1462 = vsub.f32 %v1175, %v1452
        %v1463 = vsub.f32 %v1178, %v1452
        %v1464 = vsub.f32 %v1180, %v1452
        %v1465 = vsub.f32 %v1183, %v1452
        %v1466 = vsub.f32 %v1185, %v1452
        %v1467 = vsub.f32 %v1188, %v1452
        %v1468 = vsub.f32 %v1190, %v1452
        %v1469 = vsub.f32 %v1193, %v1452
        %v1470 = vsub.f32 %v1195, %v1452
        %v1471 = vsub.f32 %v1198, %v1452
        %v1472 = vsub.f32 %v1200, %v1452
        %v1473 = vsub.f32 %v1203, %v1452
        %v1474 = vsub.f32 %v1205, %v1452
        %v1475 = vsub.f32 %v1208, %v1452
        %v1476 = vsub.f32 %v1210, %v1452
        %v1477 = vsub.f32 %v1213, %v1452
        %v1478 = vsub.f32 %v1215, %v1452
        %v1479 = vsub.f32 %v1218, %v1452
        %v1480 = vsub.f32 %v1220, %v1452
        %v1481 = vsub.f32 %v1223, %v1452
        %v1482 = vsub.f32 %v1225, %v1452
        %v1483 = vsub.f32 %v1228, %v1452
        %v1484 = vsub.f32 %v1230, %v1452
        %v1485 = vperm.slane %v1451, 1
        %v1486 = vmul.f32 %v1453, %v1485
        %v1487 = vmul.f32 %v1454, %v1485
        %v1488 = vmul.f32 %v1455, %v1485
        %v1489 = vmul.f32 %v1456, %v1485
        %v1490 = vmul.f32 %v1457, %v1485
        %v1491 = vmul.f32 %v1458, %v1485
        %v1492 = vmul.f32 %v1459, %v1485
        %v1493 = vmul.f32 %v1460, %v1485
        %v1494 = vmul.f32 %v1461, %v1485
        %v1495 = vmul.f32 %v1462, %v1485
        %v1496 = vmul.f32 %v1463, %v1485
        %v1497 = vmul.f32 %v1464, %v1485
        %v1498 = vmul.f32 %v1465, %v1485
        %v1499 = vmul.f32 %v1466, %v1485
        %v1500 = vmul.f32 %v1467, %v1485
        %v1501 = vmul.f32 %v1468, %v1485
        %v1502 = vmul.f32 %v1469, %v1485
        %v1503 = vmul.f32 %v1470, %v1485
        %v1504 = vmul.f32 %v1471, %v1485
        %v1505 = vmul.f32 %v1472, %v1485
        %v1506 = vmul.f32 %v1473, %v1485
        %v1507 = vmul.f32 %v1474, %v1485
        %v1508 = vmul.f32 %v1475, %v1485
        %v1509 = vmul.f32 %v1476, %v1485
        %v1510 = vmul.f32 %v1477, %v1485
        %v1511 = vmul.f32 %v1478, %v1485
        %v1512 = vmul.f32 %v1479, %v1485
        %v1513 = vmul.f32 %v1480, %v1485
        %v1514 = vmul.f32 %v1481, %v1485
        %v1515 = vmul.f32 %v1482, %v1485
        %v1516 = vmul.f32 %v1483, %v1485
        %v1517 = vmul.f32 %v1484, %v1485
        %v1518 = vld [vmem:[%s6] sm:$0x1]
        %v1520 = vperm.slane %v1518, 0
        %v1522 = vmul.f32 %v1486, %v1520
        %v1523 = vmul.f32 %v1487, %v1520
        %v1524 = vmul.f32 %v1488, %v1520
        %v1525 = vmul.f32 %v1489, %v1520
        %v1526 = vmul.f32 %v1490, %v1520
        %v1527 = vmul.f32 %v1491, %v1520
        %v1528 = vmul.f32 %v1492, %v1520
        %v1529 = vmul.f32 %v1493, %v1520
        %v1530 = vmul.f32 %v1494, %v1520
        %v1531 = vmul.f32 %v1495, %v1520
        %v1532 = vmul.f32 %v1496, %v1520
        %v1533 = vmul.f32 %v1497, %v1520
        %v1534 = vmul.f32 %v1498, %v1520
        %v1535 = vmul.f32 %v1499, %v1520
        %v1536 = vmul.f32 %v1500, %v1520
        %v1537 = vmul.f32 %v1501, %v1520
        %v1538 = vmul.f32 %v1502, %v1520
        %v1539 = vmul.f32 %v1503, %v1520
        %v1540 = vmul.f32 %v1504, %v1520
        %v1541 = vmul.f32 %v1505, %v1520
        %v1542 = vmul.f32 %v1506, %v1520
        %v1543 = vmul.f32 %v1507, %v1520
        %v1544 = vmul.f32 %v1508, %v1520
        %v1545 = vmul.f32 %v1509, %v1520
        %v1546 = vmul.f32 %v1510, %v1520
        %v1547 = vmul.f32 %v1511, %v1520
        %v1548 = vmul.f32 %v1512, %v1520
        %v1549 = vmul.f32 %v1513, %v1520
        %v1550 = vmul.f32 %v1514, %v1520
        %v1551 = vmul.f32 %v1515, %v1520
        %v1552 = vmul.f32 %v1516, %v1520
        %v1553 = vmul.f32 %v1517, %v1520
        %v1554 = vld [vmem:[%s7] sm:$0x1]
        %v1556 = vperm.slane %v1554, 0
        %v1558 = vadd.f32 %v1522, %v1556
        %v1559 = vadd.f32 %v1523, %v1556
        %v1560 = vadd.f32 %v1524, %v1556
        %v1561 = vadd.f32 %v1525, %v1556
        %v1562 = vadd.f32 %v1526, %v1556
        %v1563 = vadd.f32 %v1527, %v1556
        %v1564 = vadd.f32 %v1528, %v1556
        %v1565 = vadd.f32 %v1529, %v1556
        %v1566 = vadd.f32 %v1530, %v1556
        %v1567 = vadd.f32 %v1531, %v1556
        %v1568 = vadd.f32 %v1532, %v1556
        %v1569 = vadd.f32 %v1533, %v1556
        %v1570 = vadd.f32 %v1534, %v1556
        %v1571 = vadd.f32 %v1535, %v1556
        %v1572 = vadd.f32 %v1536, %v1556
        %v1573 = vadd.f32 %v1537, %v1556
        %v1574 = vadd.f32 %v1538, %v1556
        %v1575 = vadd.f32 %v1539, %v1556
        %v1576 = vadd.f32 %v1540, %v1556
        %v1577 = vadd.f32 %v1541, %v1556
        %v1578 = vadd.f32 %v1542, %v1556
        %v1579 = vadd.f32 %v1543, %v1556
        %v1580 = vadd.f32 %v1544, %v1556
        %v1581 = vadd.f32 %v1545, %v1556
        %v1582 = vadd.f32 %v1546, %v1556
        %v1583 = vadd.f32 %v1547, %v1556
        %v1584 = vadd.f32 %v1548, %v1556
        %v1585 = vadd.f32 %v1549, %v1556
        %v1586 = vadd.f32 %v1550, %v1556
        %v1587 = vadd.f32 %v1551, %v1556
        %v1588 = vadd.f32 %v1552, %v1556
        %v1589 = vadd.f32 %v1553, %v1556
        %v1590 = vsub.f32 0.0, %v1558
        %v1591 = vsub.f32 0.0, %v1559
        %v1592 = vsub.f32 0.0, %v1560
        %v1593 = vsub.f32 0.0, %v1561
        %v1594 = vsub.f32 0.0, %v1562
        %v1595 = vsub.f32 0.0, %v1563
        %v1596 = vsub.f32 0.0, %v1564
        %v1597 = vsub.f32 0.0, %v1565
        %v1598 = vsub.f32 0.0, %v1566
        %v1599 = vsub.f32 0.0, %v1567
        %v1600 = vsub.f32 0.0, %v1568
        %v1601 = vsub.f32 0.0, %v1569
        %v1602 = vsub.f32 0.0, %v1570
        %v1603 = vsub.f32 0.0, %v1571
        %v1604 = vsub.f32 0.0, %v1572
        %v1605 = vsub.f32 0.0, %v1573
        %v1606 = vsub.f32 0.0, %v1574
        %v1607 = vsub.f32 0.0, %v1575
        %v1608 = vsub.f32 0.0, %v1576
        %v1609 = vsub.f32 0.0, %v1577
        %v1610 = vsub.f32 0.0, %v1578
        %v1611 = vsub.f32 0.0, %v1579
        %v1612 = vsub.f32 0.0, %v1580
        %v1613 = vsub.f32 0.0, %v1581
        %v1614 = vsub.f32 0.0, %v1582
        %v1615 = vsub.f32 0.0, %v1583
        %v1616 = vsub.f32 0.0, %v1584
        %v1617 = vsub.f32 0.0, %v1585
        %v1618 = vsub.f32 0.0, %v1586
        %v1619 = vsub.f32 0.0, %v1587
        %v1620 = vsub.f32 0.0, %v1588
        %v1621 = vsub.f32 0.0, %v1589
        %v1622 = vmul.f32 %v1590, 1.442695
        %v1623 = vpow.pop %v1622
        %v1624 = vmul.f32 %v1591, 1.442695
        %v1625 = vpow.pop %v1624
        %v1626 = vmul.f32 %v1592, 1.442695
        %v1627 = vpow.pop %v1626
        %v1628 = vmul.f32 %v1593, 1.442695
        %v1629 = vpow.pop %v1628
        %v1630 = vmul.f32 %v1594, 1.442695
        %v1631 = vpow.pop %v1630
        %v1632 = vmul.f32 %v1595, 1.442695
        %v1633 = vpow.pop %v1632
        %v1634 = vmul.f32 %v1596, 1.442695
        %v1635 = vpow.pop %v1634
        %v1636 = vmul.f32 %v1597, 1.442695
        %v1637 = vpow.pop %v1636
        %v1638 = vmul.f32 %v1598, 1.442695
        %v1639 = vpow.pop %v1638
        %v1640 = vmul.f32 %v1599, 1.442695
        %v1641 = vpow.pop %v1640
        %v1642 = vmul.f32 %v1600, 1.442695
        %v1643 = vpow.pop %v1642
        %v1644 = vmul.f32 %v1601, 1.442695
        %v1645 = vpow.pop %v1644
        %v1646 = vmul.f32 %v1602, 1.442695
        %v1647 = vpow.pop %v1646
        %v1648 = vmul.f32 %v1603, 1.442695
        %v1649 = vpow.pop %v1648
        %v1650 = vmul.f32 %v1604, 1.442695
        %v1651 = vpow.pop %v1650
        %v1652 = vmul.f32 %v1605, 1.442695
        %v1653 = vpow.pop %v1652
        %v1654 = vmul.f32 %v1606, 1.442695
        %v1655 = vpow.pop %v1654
        %v1656 = vmul.f32 %v1607, 1.442695
        %v1657 = vpow.pop %v1656
        %v1658 = vmul.f32 %v1608, 1.442695
        %v1659 = vpow.pop %v1658
        %v1660 = vmul.f32 %v1609, 1.442695
        %v1661 = vpow.pop %v1660
        %v1662 = vmul.f32 %v1610, 1.442695
        %v1663 = vpow.pop %v1662
        %v1664 = vmul.f32 %v1611, 1.442695
        %v1665 = vpow.pop %v1664
        %v1666 = vmul.f32 %v1612, 1.442695
        %v1667 = vpow.pop %v1666
        %v1668 = vmul.f32 %v1613, 1.442695
        %v1669 = vpow.pop %v1668
        %v1670 = vmul.f32 %v1614, 1.442695
        %v1671 = vpow.pop %v1670
        %v1672 = vmul.f32 %v1615, 1.442695
        %v1673 = vpow.pop %v1672
        %v1674 = vmul.f32 %v1616, 1.442695
        %v1675 = vpow.pop %v1674
        %v1676 = vmul.f32 %v1617, 1.442695
        %v1677 = vpow.pop %v1676
        %v1678 = vmul.f32 %v1618, 1.442695
        %v1679 = vpow.pop %v1678
        %v1680 = vmul.f32 %v1619, 1.442695
        %v1681 = vpow.pop %v1680
        %v1682 = vmul.f32 %v1620, 1.442695
        %v1683 = vpow.pop %v1682
        %v1684 = vmul.f32 %v1621, 1.442695
        %v1685 = vpow.pop %v1684
        %v1686 = vadd.f32 %v1623, 1.0
        %v1687 = vadd.f32 %v1625, 1.0
        %v1688 = vadd.f32 %v1627, 1.0
        %v1689 = vadd.f32 %v1629, 1.0
        %v1690 = vadd.f32 %v1631, 1.0
        %v1691 = vadd.f32 %v1633, 1.0
        %v1692 = vadd.f32 %v1635, 1.0
        %v1693 = vadd.f32 %v1637, 1.0
        %v1694 = vadd.f32 %v1639, 1.0
        %v1695 = vadd.f32 %v1641, 1.0
        %v1696 = vadd.f32 %v1643, 1.0
        %v1697 = vadd.f32 %v1645, 1.0
        %v1698 = vadd.f32 %v1647, 1.0
        %v1699 = vadd.f32 %v1649, 1.0
        %v1700 = vadd.f32 %v1651, 1.0
        %v1701 = vadd.f32 %v1653, 1.0
        %v1702 = vadd.f32 %v1655, 1.0
        %v1703 = vadd.f32 %v1657, 1.0
        %v1704 = vadd.f32 %v1659, 1.0
        %v1705 = vadd.f32 %v1661, 1.0
        %v1706 = vadd.f32 %v1663, 1.0
        %v1707 = vadd.f32 %v1665, 1.0
        %v1708 = vadd.f32 %v1667, 1.0
        %v1709 = vadd.f32 %v1669, 1.0
        %v1710 = vadd.f32 %v1671, 1.0
        %v1711 = vadd.f32 %v1673, 1.0
        %v1712 = vadd.f32 %v1675, 1.0
        %v1713 = vadd.f32 %v1677, 1.0
        %v1714 = vadd.f32 %v1679, 1.0
        %v1715 = vadd.f32 %v1681, 1.0
        %v1716 = vadd.f32 %v1683, 1.0
        %v1717 = vadd.f32 %v1685, 1.0
        %v1718 = vrcp.pop %v1686
        %v1719 = vrcp.pop %v1687
        %v1720 = vrcp.pop %v1688
        %v1721 = vrcp.pop %v1689
        %v1722 = vrcp.pop %v1690
        %v1723 = vrcp.pop %v1691
        %v1724 = vrcp.pop %v1692
        %v1725 = vrcp.pop %v1693
        %v1726 = vrcp.pop %v1694
        %v1727 = vrcp.pop %v1695
        %v1728 = vrcp.pop %v1696
        %v1729 = vrcp.pop %v1697
        %v1730 = vrcp.pop %v1698
        %v1731 = vrcp.pop %v1699
        %v1732 = vrcp.pop %v1700
        %v1733 = vrcp.pop %v1701
        %v1734 = vrcp.pop %v1702
        %v1735 = vrcp.pop %v1703
        %v1736 = vrcp.pop %v1704
        %v1737 = vrcp.pop %v1705
        %v1738 = vrcp.pop %v1706
        %v1739 = vrcp.pop %v1707
        %v1740 = vrcp.pop %v1708
        %v1741 = vrcp.pop %v1709
        %v1742 = vrcp.pop %v1710
        %v1743 = vrcp.pop %v1711
        %v1744 = vrcp.pop %v1712
        %v1745 = vrcp.pop %v1713
        %v1746 = vrcp.pop %v1714
        %v1747 = vrcp.pop %v1715
        %v1748 = vrcp.pop %v1716
        %v1749 = vrcp.pop %v1717
        %v1750 = vmul.f32 %v1558, %v1718
        %v1751 = vmul.f32 %v1559, %v1719
        %v1752 = vmul.f32 %v1560, %v1720
        %v1753 = vmul.f32 %v1561, %v1721
        %v1754 = vmul.f32 %v1562, %v1722
        %v1755 = vmul.f32 %v1563, %v1723
        %v1756 = vmul.f32 %v1564, %v1724
        %v1757 = vmul.f32 %v1565, %v1725
        %v1758 = vmul.f32 %v1566, %v1726
        %v1759 = vmul.f32 %v1567, %v1727
        %v1760 = vmul.f32 %v1568, %v1728
        %v1761 = vmul.f32 %v1569, %v1729
        %v1762 = vmul.f32 %v1570, %v1730
        %v1763 = vmul.f32 %v1571, %v1731
        %v1764 = vmul.f32 %v1572, %v1732
        %v1765 = vmul.f32 %v1573, %v1733
        %v1766 = vmul.f32 %v1574, %v1734
        %v1767 = vmul.f32 %v1575, %v1735
        %v1768 = vmul.f32 %v1576, %v1736
        %v1769 = vmul.f32 %v1577, %v1737
        %v1770 = vmul.f32 %v1578, %v1738
        %v1771 = vmul.f32 %v1579, %v1739
        %v1772 = vmul.f32 %v1580, %v1740
        %v1773 = vmul.f32 %v1581, %v1741
        %v1774 = vmul.f32 %v1582, %v1742
        %v1775 = vmul.f32 %v1583, %v1743
        %v1776 = vmul.f32 %v1584, %v1744
        %v1777 = vmul.f32 %v1585, %v1745
        %v1778 = vmul.f32 %v1586, %v1746
        %v1779 = vmul.f32 %v1587, %v1747
        %v1780 = vmul.f32 %v1588, %v1748
        %v1781 = vmul.f32 %v1589, %v1749
        %1782 = vst.msk [vmem:[#allocation2] sm:$0xff] %vm1232, 0.0
        %1783 = vst.msk [vmem:[#allocation2 + $0x8] sm:$0xff] %vm1232, 0.0
        %1784 = vst.msk [vmem:[#allocation2 + $0x10] sm:$0xff] %vm1232, 0.0
        %1785 = vst.msk [vmem:[#allocation2 + $0x118] sm:$0xff] %vm1232, 0.0
        %1786 = vst.msk [vmem:[#allocation2 + $0x120] sm:$0xff] %vm1232, 0.0
        %1787 = vst.msk [vmem:[#allocation2 + $0x128] sm:$0xff] %vm1232, 0.0
        %1788 = vst.msk [vmem:[#allocation2 + $0x18] sm:$0xff] %vm1232, %v1750
        %1789 = vst.msk [vmem:[#allocation2 + $0x20] sm:$0xff] %vm1232, %v1751
        %1790 = vst.msk [vmem:[#allocation2 + $0x28] sm:$0xff] %vm1232, %v1752
        %1791 = vst.msk [vmem:[#allocation2 + $0x30] sm:$0xff] %vm1232, %v1753
        %1792 = vst.msk [vmem:[#allocation2 + $0x38] sm:$0xff] %vm1232, %v1754
        %1793 = vst.msk [vmem:[#allocation2 + $0x40] sm:$0xff] %vm1232, %v1755
        %1794 = vst.msk [vmem:[#allocation2 + $0x48] sm:$0xff] %vm1232, %v1756
        %1795 = vst.msk [vmem:[#allocation2 + $0x50] sm:$0xff] %vm1232, %v1757
        %1796 = vst.msk [vmem:[#allocation2 + $0x58] sm:$0xff] %vm1232, %v1758
        %1797 = vst.msk [vmem:[#allocation2 + $0x60] sm:$0xff] %vm1232, %v1759
        %1798 = vst.msk [vmem:[#allocation2 + $0x68] sm:$0xff] %vm1232, %v1760
        %1799 = vst.msk [vmem:[#allocation2 + $0x70] sm:$0xff] %vm1232, %v1761
        %1800 = vst.msk [vmem:[#allocation2 + $0x78] sm:$0xff] %vm1232, %v1762
        %1801 = vst.msk [vmem:[#allocation2 + $0x80] sm:$0xff] %vm1232, %v1763
        %1802 = vst.msk [vmem:[#allocation2 + $0x88] sm:$0xff] %vm1232, %v1764
        %1803 = vst.msk [vmem:[#allocation2 + $0x90] sm:$0xff] %vm1232, %v1765
        %1804 = vst.msk [vmem:[#allocation2 + $0x98] sm:$0xff] %vm1232, %v1766
        %1805 = vst.msk [vmem:[#allocation2 + $0xa0] sm:$0xff] %vm1232, %v1767
        %1806 = vst.msk [vmem:[#allocation2 + $0xa8] sm:$0xff] %vm1232, %v1768
        %1807 = vst.msk [vmem:[#allocation2 + $0xb0] sm:$0xff] %vm1232, %v1769
        %1808 = vst.msk [vmem:[#allocation2 + $0xb8] sm:$0xff] %vm1232, %v1770
        %1809 = vst.msk [vmem:[#allocation2 + $0xc0] sm:$0xff] %vm1232, %v1771
        %1810 = vst.msk [vmem:[#allocation2 + $0xc8] sm:$0xff] %vm1232, %v1772
        %1811 = vst.msk [vmem:[#allocation2 + $0xd0] sm:$0xff] %vm1232, %v1773
        %1812 = vst.msk [vmem:[#allocation2 + $0xd8] sm:$0xff] %vm1232, %v1774
        %1813 = vst.msk [vmem:[#allocation2 + $0xe0] sm:$0xff] %vm1232, %v1775
        %1814 = vst.msk [vmem:[#allocation2 + $0xe8] sm:$0xff] %vm1232, %v1776
        %1815 = vst.msk [vmem:[#allocation2 + $0xf0] sm:$0xff] %vm1232, %v1777
        %1816 = vst.msk [vmem:[#allocation2 + $0xf8] sm:$0xff] %vm1232, %v1778
        %1817 = vst.msk [vmem:[#allocation2 + $0x100] sm:$0xff] %vm1232, %v1779
        %1818 = vst.msk [vmem:[#allocation2 + $0x108] sm:$0xff] %vm1232, %v1780
        %1819 = vst.msk [vmem:[#allocation2 + $0x110] sm:$0xff] %vm1232, %v1781
        %v1820 = vlaneseq
        %v1821 = vshrl.u32 %v1820, 7
        %v1822 = vadd.s32 %v1821, 8
        %v1823 = vadd.s32 %v1821, 16
        %v1824 = vadd.s32 %v1821, 24
        %v1825 = vadd.s32 %v1821, 32
        %v1826 = vadd.s32 %v1821, 40
        %v1827 = vadd.s32 %v1821, 48
        %v1828 = vadd.s32 %v1821, 56
        %v1829 = vadd.s32 %v1821, 64
        %v1830 = vadd.s32 %v1821, 72
        %v1831 = vadd.s32 %v1821, 80
        %v1832 = vadd.s32 %v1821, 88
        %v1833 = vadd.s32 %v1821, 96
        %v1834 = vadd.s32 %v1821, 104
        %v1835 = vadd.s32 %v1821, 112
        %v1836 = vadd.s32 %v1821, 120
        %v1837 = vadd.s32 %v1821, 128
        %v1838 = vadd.s32 %v1821, 136
        %v1839 = vadd.s32 %v1821, 144
        %v1840 = vadd.s32 %v1821, 152
        %v1841 = vadd.s32 %v1821, 160
        %v1842 = vadd.s32 %v1821, 168
        %v1843 = vadd.s32 %v1821, 176
        %v1844 = vadd.s32 %v1821, 184
        %v1845 = vadd.s32 %v1821, 192
        %v1846 = vadd.s32 %v1821, 200
        %v1847 = vadd.s32 %v1821, 208
        %v1848 = vadd.s32 %v1821, 216
        %v1849 = vadd.s32 %v1821, 224
        %v1850 = vadd.s32 %v1821, 232
        %v1851 = vadd.s32 %v1821, 240
        %v1852 = vadd.s32 %v1821, 248
        %vm1853 = vcmp.lt.s32.totalorder %v1821, 0
        %v1854 = vsub.s32 0, %v1821
        %v1855 = vsel %vm1853, %v1854, %v1821
        %v1856 = vshrl.u32 %v1855, 4
        %v1857 = vand.u32 %v1855, 15
        %v1858 = vsub.s32 0, %v1857
        %v1859 = vsel %vm1853, %v1858, %v1857
        %vm1860 = vcmp.lt.s32.totalorder %v1822, 0
        %v1861 = vsub.s32 0, %v1822
        %v1862 = vsel %vm1860, %v1861, %v1822
        %v1863 = vshrl.u32 %v1862, 4
        %v1864 = vand.u32 %v1862, 15
        %v1865 = vsub.s32 0, %v1864
        %v1866 = vsel %vm1860, %v1865, %v1864
        %vm1867 = vcmp.lt.s32.totalorder %v1823, 0
        %v1868 = vsub.s32 0, %v1823
        %v1869 = vsel %vm1867, %v1868, %v1823
        %v1870 = vshrl.u32 %v1869, 4
        %v1871 = vand.u32 %v1869, 15
        %v1872 = vsub.s32 0, %v1871
        %v1873 = vsel %vm1867, %v1872, %v1871
        %vm1874 = vcmp.lt.s32.totalorder %v1824, 0
        %v1875 = vsub.s32 0, %v1824
        %v1876 = vsel %vm1874, %v1875, %v1824
        %v1877 = vshrl.u32 %v1876, 4
        %v1878 = vand.u32 %v1876, 15
        %v1879 = vsub.s32 0, %v1878
        %v1880 = vsel %vm1874, %v1879, %v1878
        %vm1881 = vcmp.lt.s32.totalorder %v1825, 0
        %v1882 = vsub.s32 0, %v1825
        %v1883 = vsel %vm1881, %v1882, %v1825
        %v1884 = vshrl.u32 %v1883, 4
        %v1885 = vand.u32 %v1883, 15
        %v1886 = vsub.s32 0, %v1885
        %v1887 = vsel %vm1881, %v1886, %v1885
        %vm1888 = vcmp.lt.s32.totalorder %v1826, 0
        %v1889 = vsub.s32 0, %v1826
        %v1890 = vsel %vm1888, %v1889, %v1826
        %v1891 = vshrl.u32 %v1890, 4
        %v1892 = vand.u32 %v1890, 15
        %v1893 = vsub.s32 0, %v1892
        %v1894 = vsel %vm1888, %v1893, %v1892
        %vm1895 = vcmp.lt.s32.totalorder %v1827, 0
        %v1896 = vsub.s32 0, %v1827
        %v1897 = vsel %vm1895, %v1896, %v1827
        %v1898 = vshrl.u32 %v1897, 4
        %v1899 = vand.u32 %v1897, 15
        %v1900 = vsub.s32 0, %v1899
        %v1901 = vsel %vm1895, %v1900, %v1899
        %vm1902 = vcmp.lt.s32.totalorder %v1828, 0
        %v1903 = vsub.s32 0, %v1828
        %v1904 = vsel %vm1902, %v1903, %v1828
        %v1905 = vshrl.u32 %v1904, 4
        %v1906 = vand.u32 %v1904, 15
        %v1907 = vsub.s32 0, %v1906
        %v1908 = vsel %vm1902, %v1907, %v1906
        %vm1909 = vcmp.lt.s32.totalorder %v1829, 0
        %v1910 = vsub.s32 0, %v1829
        %v1911 = vsel %vm1909, %v1910, %v1829
        %v1912 = vshrl.u32 %v1911, 4
        %v1913 = vand.u32 %v1911, 15
        %v1914 = vsub.s32 0, %v1913
        %v1915 = vsel %vm1909, %v1914, %v1913
        %vm1916 = vcmp.lt.s32.totalorder %v1830, 0
        %v1917 = vsub.s32 0, %v1830
        %v1918 = vsel %vm1916, %v1917, %v1830
        %v1919 = vshrl.u32 %v1918, 4
        %v1920 = vand.u32 %v1918, 15
        %v1921 = vsub.s32 0, %v1920
        %v1922 = vsel %vm1916, %v1921, %v1920
        %vm1923 = vcmp.lt.s32.totalorder %v1831, 0
        %v1924 = vsub.s32 0, %v1831
        %v1925 = vsel %vm1923, %v1924, %v1831
        %v1926 = vshrl.u32 %v1925, 4
        %v1927 = vand.u32 %v1925, 15
        %v1928 = vsub.s32 0, %v1927
        %v1929 = vsel %vm1923, %v1928, %v1927
        %vm1930 = vcmp.lt.s32.totalorder %v1832, 0
        %v1931 = vsub.s32 0, %v1832
        %v1932 = vsel %vm1930, %v1931, %v1832
        %v1933 = vshrl.u32 %v1932, 4
        %v1934 = vand.u32 %v1932, 15
        %v1935 = vsub.s32 0, %v1934
        %v1936 = vsel %vm1930, %v1935, %v1934
        %vm1937 = vcmp.lt.s32.totalorder %v1833, 0
        %v1938 = vsub.s32 0, %v1833
        %v1939 = vsel %vm1937, %v1938, %v1833
        %v1940 = vshrl.u32 %v1939, 4
        %v1941 = vand.u32 %v1939, 15
        %v1942 = vsub.s32 0, %v1941
        %v1943 = vsel %vm1937, %v1942, %v1941
        %vm1944 = vcmp.lt.s32.totalorder %v1834, 0
        %v1945 = vsub.s32 0, %v1834
        %v1946 = vsel %vm1944, %v1945, %v1834
        %v1947 = vshrl.u32 %v1946, 4
        %v1948 = vand.u32 %v1946, 15
        %v1949 = vsub.s32 0, %v1948
        %v1950 = vsel %vm1944, %v1949, %v1948
        %vm1951 = vcmp.lt.s32.totalorder %v1835, 0
        %v1952 = vsub.s32 0, %v1835
        %v1953 = vsel %vm1951, %v1952, %v1835
        %v1954 = vshrl.u32 %v1953, 4
        %v1955 = vand.u32 %v1953, 15
        %v1956 = vsub.s32 0, %v1955
        %v1957 = vsel %vm1951, %v1956, %v1955
        %vm1958 = vcmp.lt.s32.totalorder %v1836, 0
        %v1959 = vsub.s32 0, %v1836
        %v1960 = vsel %vm1958, %v1959, %v1836
        %v1961 = vshrl.u32 %v1960, 4
        %v1962 = vand.u32 %v1960, 15
        %v1963 = vsub.s32 0, %v1962
        %v1964 = vsel %vm1958, %v1963, %v1962
        %vm1965 = vcmp.lt.s32.totalorder %v1837, 0
        %v1966 = vsub.s32 0, %v1837
        %v1967 = vsel %vm1965, %v1966, %v1837
        %v1968 = vshrl.u32 %v1967, 4
        %v1969 = vand.u32 %v1967, 15
        %v1970 = vsub.s32 0, %v1969
        %v1971 = vsel %vm1965, %v1970, %v1969
        %vm1972 = vcmp.lt.s32.totalorder %v1838, 0
        %v1973 = vsub.s32 0, %v1838
        %v1974 = vsel %vm1972, %v1973, %v1838
        %v1975 = vshrl.u32 %v1974, 4
        %v1976 = vand.u32 %v1974, 15
        %v1977 = vsub.s32 0, %v1976
        %v1978 = vsel %vm1972, %v1977, %v1976
        %vm1979 = vcmp.lt.s32.totalorder %v1839, 0
        %v1980 = vsub.s32 0, %v1839
        %v1981 = vsel %vm1979, %v1980, %v1839
        %v1982 = vshrl.u32 %v1981, 4
        %v1983 = vand.u32 %v1981, 15
        %v1984 = vsub.s32 0, %v1983
        %v1985 = vsel %vm1979, %v1984, %v1983
        %vm1986 = vcmp.lt.s32.totalorder %v1840, 0
        %v1987 = vsub.s32 0, %v1840
        %v1988 = vsel %vm1986, %v1987, %v1840
        %v1989 = vshrl.u32 %v1988, 4
        %v1990 = vand.u32 %v1988, 15
        %v1991 = vsub.s32 0, %v1990
        %v1992 = vsel %vm1986, %v1991, %v1990
        %vm1993 = vcmp.lt.s32.totalorder %v1841, 0
        %v1994 = vsub.s32 0, %v1841
        %v1995 = vsel %vm1993, %v1994, %v1841
        %v1996 = vshrl.u32 %v1995, 4
        %v1997 = vand.u32 %v1995, 15
        %v1998 = vsub.s32 0, %v1997
        %v1999 = vsel %vm1993, %v1998, %v1997
        %vm2000 = vcmp.lt.s32.totalorder %v1842, 0
        %v2001 = vsub.s32 0, %v1842
        %v2002 = vsel %vm2000, %v2001, %v1842
        %v2003 = vshrl.u32 %v2002, 4
        %v2004 = vand.u32 %v2002, 15
        %v2005 = vsub.s32 0, %v2004
        %v2006 = vsel %vm2000, %v2005, %v2004
        %vm2007 = vcmp.lt.s32.totalorder %v1843, 0
        %v2008 = vsub.s32 0, %v1843
        %v2009 = vsel %vm2007, %v2008, %v1843
        %v2010 = vshrl.u32 %v2009, 4
        %v2011 = vand.u32 %v2009, 15
        %v2012 = vsub.s32 0, %v2011
        %v2013 = vsel %vm2007, %v2012, %v2011
        %vm2014 = vcmp.lt.s32.totalorder %v1844, 0
        %v2015 = vsub.s32 0, %v1844
        %v2016 = vsel %vm2014, %v2015, %v1844
        %v2017 = vshrl.u32 %v2016, 4
        %v2018 = vand.u32 %v2016, 15
        %v2019 = vsub.s32 0, %v2018
        %v2020 = vsel %vm2014, %v2019, %v2018
        %vm2021 = vcmp.lt.s32.totalorder %v1845, 0
        %v2022 = vsub.s32 0, %v1845
        %v2023 = vsel %vm2021, %v2022, %v1845
        %v2024 = vshrl.u32 %v2023, 4
        %v2025 = vand.u32 %v2023, 15
        %v2026 = vsub.s32 0, %v2025
        %v2027 = vsel %vm2021, %v2026, %v2025
        %vm2028 = vcmp.lt.s32.totalorder %v1846, 0
        %v2029 = vsub.s32 0, %v1846
        %v2030 = vsel %vm2028, %v2029, %v1846
        %v2031 = vshrl.u32 %v2030, 4
        %v2032 = vand.u32 %v2030, 15
        %v2033 = vsub.s32 0, %v2032
        %v2034 = vsel %vm2028, %v2033, %v2032
        %vm2035 = vcmp.lt.s32.totalorder %v1847, 0
        %v2036 = vsub.s32 0, %v1847
        %v2037 = vsel %vm2035, %v2036, %v1847
        %v2038 = vshrl.u32 %v2037, 4
        %v2039 = vand.u32 %v2037, 15
        %v2040 = vsub.s32 0, %v2039
        %v2041 = vsel %vm2035, %v2040, %v2039
        %vm2042 = vcmp.lt.s32.totalorder %v1848, 0
        %v2043 = vsub.s32 0, %v1848
        %v2044 = vsel %vm2042, %v2043, %v1848
        %v2045 = vshrl.u32 %v2044, 4
        %v2046 = vand.u32 %v2044, 15
        %v2047 = vsub.s32 0, %v2046
        %v2048 = vsel %vm2042, %v2047, %v2046
        %vm2049 = vcmp.lt.s32.totalorder %v1849, 0
        %v2050 = vsub.s32 0, %v1849
        %v2051 = vsel %vm2049, %v2050, %v1849
        %v2052 = vshrl.u32 %v2051, 4
        %v2053 = vand.u32 %v2051, 15
        %v2054 = vsub.s32 0, %v2053
        %v2055 = vsel %vm2049, %v2054, %v2053
        %vm2056 = vcmp.lt.s32.totalorder %v1850, 0
        %v2057 = vsub.s32 0, %v1850
        %v2058 = vsel %vm2056, %v2057, %v1850
        %v2059 = vshrl.u32 %v2058, 4
        %v2060 = vand.u32 %v2058, 15
        %v2061 = vsub.s32 0, %v2060
        %v2062 = vsel %vm2056, %v2061, %v2060
        %vm2063 = vcmp.lt.s32.totalorder %v1851, 0
        %v2064 = vsub.s32 0, %v1851
        %v2065 = vsel %vm2063, %v2064, %v1851
        %v2066 = vshrl.u32 %v2065, 4
        %v2067 = vand.u32 %v2065, 15
        %v2068 = vsub.s32 0, %v2067
        %v2069 = vsel %vm2063, %v2068, %v2067
        %vm2070 = vcmp.lt.s32.totalorder %v1852, 0
        %v2071 = vsub.s32 0, %v1852
        %v2072 = vsel %vm2070, %v2071, %v1852
        %v2073 = vshrl.u32 %v2072, 4
        %v2074 = vand.u32 %v2072, 15
        %v2075 = vsub.s32 0, %v2074
        %v2076 = vsel %vm2070, %v2075, %v2074
        %vm2077 = vcmp.ne.s32.totalorder %v1859, 0
        %vm2078 = vcmp.ne.s32.totalorder %v1866, 0
        %vm2079 = vcmp.ne.s32.totalorder %v1873, 0
        %vm2080 = vcmp.ne.s32.totalorder %v1880, 0
        %vm2081 = vcmp.ne.s32.totalorder %v1887, 0
        %vm2082 = vcmp.ne.s32.totalorder %v1894, 0
        %vm2083 = vcmp.ne.s32.totalorder %v1901, 0
        %vm2084 = vcmp.ne.s32.totalorder %v1908, 0
        %vm2085 = vcmp.ne.s32.totalorder %v1915, 0
        %vm2086 = vcmp.ne.s32.totalorder %v1922, 0
        %vm2087 = vcmp.ne.s32.totalorder %v1929, 0
        %vm2088 = vcmp.ne.s32.totalorder %v1936, 0
        %vm2089 = vcmp.ne.s32.totalorder %v1943, 0
        %vm2090 = vcmp.ne.s32.totalorder %v1950, 0
        %vm2091 = vcmp.ne.s32.totalorder %v1957, 0
        %vm2092 = vcmp.ne.s32.totalorder %v1964, 0
        %vm2093 = vcmp.ne.s32.totalorder %v1971, 0
        %vm2094 = vcmp.ne.s32.totalorder %v1978, 0
        %vm2095 = vcmp.ne.s32.totalorder %v1985, 0
        %vm2096 = vcmp.ne.s32.totalorder %v1992, 0
        %vm2097 = vcmp.ne.s32.totalorder %v1999, 0
        %vm2098 = vcmp.ne.s32.totalorder %v2006, 0
        %vm2099 = vcmp.ne.s32.totalorder %v2013, 0
        %vm2100 = vcmp.ne.s32.totalorder %v2020, 0
        %vm2101 = vcmp.ne.s32.totalorder %v2027, 0
        %vm2102 = vcmp.ne.s32.totalorder %v2034, 0
        %vm2103 = vcmp.ne.s32.totalorder %v2041, 0
        %vm2104 = vcmp.ne.s32.totalorder %v2048, 0
        %vm2105 = vcmp.ne.s32.totalorder %v2055, 0
        %vm2106 = vcmp.ne.s32.totalorder %v2062, 0
        %vm2107 = vcmp.ne.s32.totalorder %v2069, 0
        %vm2108 = vcmp.ne.s32.totalorder %v2076, 0
        %vm2109 = vcmp.lt.s32.totalorder %v1859, 0
        %vm2110 = vcmp.lt.s32.totalorder %v1866, 0
        %vm2111 = vcmp.lt.s32.totalorder %v1873, 0
        %vm2112 = vcmp.lt.s32.totalorder %v1880, 0
        %vm2113 = vcmp.lt.s32.totalorder %v1887, 0
        %vm2114 = vcmp.lt.s32.totalorder %v1894, 0
        %vm2115 = vcmp.lt.s32.totalorder %v1901, 0
        %vm2116 = vcmp.lt.s32.totalorder %v1908, 0
        %vm2117 = vcmp.lt.s32.totalorder %v1915, 0
        %vm2118 = vcmp.lt.s32.totalorder %v1922, 0
        %vm2119 = vcmp.lt.s32.totalorder %v1929, 0
        %vm2120 = vcmp.lt.s32.totalorder %v1936, 0
        %vm2121 = vcmp.lt.s32.totalorder %v1943, 0
        %vm2122 = vcmp.lt.s32.totalorder %v1950, 0
        %vm2123 = vcmp.lt.s32.totalorder %v1957, 0
        %vm2124 = vcmp.lt.s32.totalorder %v1964, 0
        %vm2125 = vcmp.lt.s32.totalorder %v1971, 0
        %vm2126 = vcmp.lt.s32.totalorder %v1978, 0
        %vm2127 = vcmp.lt.s32.totalorder %v1985, 0
        %vm2128 = vcmp.lt.s32.totalorder %v1992, 0
        %vm2129 = vcmp.lt.s32.totalorder %v1999, 0
        %vm2130 = vcmp.lt.s32.totalorder %v2006, 0
        %vm2131 = vcmp.lt.s32.totalorder %v2013, 0
        %vm2132 = vcmp.lt.s32.totalorder %v2020, 0
        %vm2133 = vcmp.lt.s32.totalorder %v2027, 0
        %vm2134 = vcmp.lt.s32.totalorder %v2034, 0
        %vm2135 = vcmp.lt.s32.totalorder %v2041, 0
        %vm2136 = vcmp.lt.s32.totalorder %v2048, 0
        %vm2137 = vcmp.lt.s32.totalorder %v2055, 0
        %vm2138 = vcmp.lt.s32.totalorder %v2062, 0
        %vm2139 = vcmp.lt.s32.totalorder %v2069, 0
        %vm2140 = vcmp.lt.s32.totalorder %v2076, 0
        %vm2141 = vmand %vm2109, %vm2077
        %vm2142 = vmand %vm2110, %vm2078
        %vm2143 = vmand %vm2111, %vm2079
        %vm2144 = vmand %vm2112, %vm2080
        %vm2145 = vmand %vm2113, %vm2081
        %vm2146 = vmand %vm2114, %vm2082
        %vm2147 = vmand %vm2115, %vm2083
        %vm2148 = vmand %vm2116, %vm2084
        %vm2149 = vmand %vm2117, %vm2085
        %vm2150 = vmand %vm2118, %vm2086
        %vm2151 = vmand %vm2119, %vm2087
        %vm2152 = vmand %vm2120, %vm2088
        %vm2153 = vmand %vm2121, %vm2089
        %vm2154 = vmand %vm2122, %vm2090
        %vm2155 = vmand %vm2123, %vm2091
        %vm2156 = vmand %vm2124, %vm2092
        %vm2157 = vmand %vm2125, %vm2093
        %vm2158 = vmand %vm2126, %vm2094
        %vm2159 = vmand %vm2127, %vm2095
        %vm2160 = vmand %vm2128, %vm2096
        %vm2161 = vmand %vm2129, %vm2097
        %vm2162 = vmand %vm2130, %vm2098
        %vm2163 = vmand %vm2131, %vm2099
        %vm2164 = vmand %vm2132, %vm2100
        %vm2165 = vmand %vm2133, %vm2101
        %vm2166 = vmand %vm2134, %vm2102
        %vm2167 = vmand %vm2135, %vm2103
        %vm2168 = vmand %vm2136, %vm2104
        %vm2169 = vmand %vm2137, %vm2105
        %vm2170 = vmand %vm2138, %vm2106
        %vm2171 = vmand %vm2139, %vm2107
        %vm2172 = vmand %vm2140, %vm2108
        %v2173 = vadd.s32 %v1859, 16
        %v2174 = vadd.s32 %v1866, 16
        %v2175 = vadd.s32 %v1873, 16
        %v2176 = vadd.s32 %v1880, 16
        %v2177 = vadd.s32 %v1887, 16
        %v2178 = vadd.s32 %v1894, 16
        %v2179 = vadd.s32 %v1901, 16
        %v2180 = vadd.s32 %v1908, 16
        %v2181 = vadd.s32 %v1915, 16
        %v2182 = vadd.s32 %v1922, 16
        %v2183 = vadd.s32 %v1929, 16
        %v2184 = vadd.s32 %v1936, 16
        %v2185 = vadd.s32 %v1943, 16
        %v2186 = vadd.s32 %v1950, 16
        %v2187 = vadd.s32 %v1957, 16
        %v2188 = vadd.s32 %v1964, 16
        %v2189 = vadd.s32 %v1971, 16
        %v2190 = vadd.s32 %v1978, 16
        %v2191 = vadd.s32 %v1985, 16
        %v2192 = vadd.s32 %v1992, 16
        %v2193 = vadd.s32 %v1999, 16
        %v2194 = vadd.s32 %v2006, 16
        %v2195 = vadd.s32 %v2013, 16
        %v2196 = vadd.s32 %v2020, 16
        %v2197 = vadd.s32 %v2027, 16
        %v2198 = vadd.s32 %v2034, 16
        %v2199 = vadd.s32 %v2041, 16
        %v2200 = vadd.s32 %v2048, 16
        %v2201 = vadd.s32 %v2055, 16
        %v2202 = vadd.s32 %v2062, 16
        %v2203 = vadd.s32 %v2069, 16
        %v2204 = vadd.s32 %v2076, 16
        %v2205 = vsel %vm2141, %v2173, %v1859
        %v2206 = vsel %vm2142, %v2174, %v1866
        %v2207 = vsel %vm2143, %v2175, %v1873
        %v2208 = vsel %vm2144, %v2176, %v1880
        %v2209 = vsel %vm2145, %v2177, %v1887
        %v2210 = vsel %vm2146, %v2178, %v1894
        %v2211 = vsel %vm2147, %v2179, %v1901
        %v2212 = vsel %vm2148, %v2180, %v1908
        %v2213 = vsel %vm2149, %v2181, %v1915
        %v2214 = vsel %vm2150, %v2182, %v1922
        %v2215 = vsel %vm2151, %v2183, %v1929
        %v2216 = vsel %vm2152, %v2184, %v1936
        %v2217 = vsel %vm2153, %v2185, %v1943
        %v2218 = vsel %vm2154, %v2186, %v1950
        %v2219 = vsel %vm2155, %v2187, %v1957
        %v2220 = vsel %vm2156, %v2188, %v1964
        %v2221 = vsel %vm2157, %v2189, %v1971
        %v2222 = vsel %vm2158, %v2190, %v1978
        %v2223 = vsel %vm2159, %v2191, %v1985
        %v2224 = vsel %vm2160, %v2192, %v1992
        %v2225 = vsel %vm2161, %v2193, %v1999
        %v2226 = vsel %vm2162, %v2194, %v2006
        %v2227 = vsel %vm2163, %v2195, %v2013
        %v2228 = vsel %vm2164, %v2196, %v2020
        %v2229 = vsel %vm2165, %v2197, %v2027
        %v2230 = vsel %vm2166, %v2198, %v2034
        %v2231 = vsel %vm2167, %v2199, %v2041
        %v2232 = vsel %vm2168, %v2200, %v2048
        %v2233 = vsel %vm2169, %v2201, %v2055
        %v2234 = vsel %vm2170, %v2202, %v2062
        %v2235 = vsel %vm2171, %v2203, %v2069
        %v2236 = vsel %vm2172, %v2204, %v2076
        %vm2237 = vcmp.ne.s32.totalorder %v2205, 0
        %vm2238 = vcmp.ne.s32.totalorder %v2206, 0
        %vm2239 = vcmp.ne.s32.totalorder %v2207, 0
        %vm2240 = vcmp.ne.s32.totalorder %v2208, 0
        %vm2241 = vcmp.ne.s32.totalorder %v2209, 0
        %vm2242 = vcmp.ne.s32.totalorder %v2210, 0
        %vm2243 = vcmp.ne.s32.totalorder %v2211, 0
        %vm2244 = vcmp.ne.s32.totalorder %v2212, 0
        %vm2245 = vcmp.ne.s32.totalorder %v2213, 0
        %vm2246 = vcmp.ne.s32.totalorder %v2214, 0
        %vm2247 = vcmp.ne.s32.totalorder %v2215, 0
        %vm2248 = vcmp.ne.s32.totalorder %v2216, 0
        %vm2249 = vcmp.ne.s32.totalorder %v2217, 0
        %vm2250 = vcmp.ne.s32.totalorder %v2218, 0
        %vm2251 = vcmp.ne.s32.totalorder %v2219, 0
        %vm2252 = vcmp.ne.s32.totalorder %v2220, 0
        %vm2253 = vcmp.ne.s32.totalorder %v2221, 0
        %vm2254 = vcmp.ne.s32.totalorder %v2222, 0
        %vm2255 = vcmp.ne.s32.totalorder %v2223, 0
        %vm2256 = vcmp.ne.s32.totalorder %v2224, 0
        %vm2257 = vcmp.ne.s32.totalorder %v2225, 0
        %vm2258 = vcmp.ne.s32.totalorder %v2226, 0
        %vm2259 = vcmp.ne.s32.totalorder %v2227, 0
        %vm2260 = vcmp.ne.s32.totalorder %v2228, 0
        %vm2261 = vcmp.ne.s32.totalorder %v2229, 0
        %vm2262 = vcmp.ne.s32.totalorder %v2230, 0
        %vm2263 = vcmp.ne.s32.totalorder %v2231, 0
        %vm2264 = vcmp.ne.s32.totalorder %v2232, 0
        %vm2265 = vcmp.ne.s32.totalorder %v2233, 0
        %vm2266 = vcmp.ne.s32.totalorder %v2234, 0
        %vm2267 = vcmp.ne.s32.totalorder %v2235, 0
        %vm2268 = vcmp.ne.s32.totalorder %v2236, 0
        %vm2269 = vcmp.ne.s32.totalorder %v2205, 15
        %vm2270 = vcmp.ne.s32.totalorder %v2206, 15
        %vm2271 = vcmp.ne.s32.totalorder %v2207, 15
        %vm2272 = vcmp.ne.s32.totalorder %v2208, 15
        %vm2273 = vcmp.ne.s32.totalorder %v2209, 15
        %vm2274 = vcmp.ne.s32.totalorder %v2210, 15
        %vm2275 = vcmp.ne.s32.totalorder %v2211, 15
        %vm2276 = vcmp.ne.s32.totalorder %v2212, 15
        %vm2277 = vcmp.ne.s32.totalorder %v2213, 15
        %vm2278 = vcmp.ne.s32.totalorder %v2214, 15
        %vm2279 = vcmp.ne.s32.totalorder %v2215, 15
        %vm2280 = vcmp.ne.s32.totalorder %v2216, 15
        %vm2281 = vcmp.ne.s32.totalorder %v2217, 15
        %vm2282 = vcmp.ne.s32.totalorder %v2218, 15
        %vm2283 = vcmp.ne.s32.totalorder %v2219, 15
        %vm2284 = vcmp.ne.s32.totalorder %v2220, 15
        %vm2285 = vcmp.ne.s32.totalorder %v2221, 15
        %vm2286 = vcmp.ne.s32.totalorder %v2222, 15
        %vm2287 = vcmp.ne.s32.totalorder %v2223, 15
        %vm2288 = vcmp.ne.s32.totalorder %v2224, 15
        %vm2289 = vcmp.ne.s32.totalorder %v2225, 15
        %vm2290 = vcmp.ne.s32.totalorder %v2226, 15
        %vm2291 = vcmp.ne.s32.totalorder %v2227, 15
        %vm2292 = vcmp.ne.s32.totalorder %v2228, 15
        %vm2293 = vcmp.ne.s32.totalorder %v2229, 15
        %vm2294 = vcmp.ne.s32.totalorder %v2230, 15
        %vm2295 = vcmp.ne.s32.totalorder %v2231, 15
        %vm2296 = vcmp.ne.s32.totalorder %v2232, 15
        %vm2297 = vcmp.ne.s32.totalorder %v2233, 15
        %vm2298 = vcmp.ne.s32.totalorder %v2234, 15
        %vm2299 = vcmp.ne.s32.totalorder %v2235, 15
        %vm2300 = vcmp.ne.s32.totalorder %v2236, 15
        %v2301 = vld [vmem:[#allocation2 + $0x7] sm:$0xff]
        %v2302 = vld [vmem:[#allocation2 + $0xf] sm:$0xff]
        %v2303 = vld [vmem:[#allocation2 + $0x17] sm:$0xff]
        %v2304 = vld [vmem:[#allocation2 + $0x1f] sm:$0xff]
        %v2305 = vld [vmem:[#allocation2 + $0x27] sm:$0xff]
        %v2306 = vld [vmem:[#allocation2 + $0x2f] sm:$0xff]
        %v2307 = vld [vmem:[#allocation2 + $0x37] sm:$0xff]
        %v2308 = vld [vmem:[#allocation2 + $0x3f] sm:$0xff]
        %v2309 = vld [vmem:[#allocation2 + $0x47] sm:$0xff]
        %v2310 = vld [vmem:[#allocation2 + $0x4f] sm:$0xff]
        %v2311 = vld [vmem:[#allocation2 + $0x57] sm:$0xff]
        %v2312 = vld [vmem:[#allocation2 + $0x5f] sm:$0xff]
        %v2313 = vld [vmem:[#allocation2 + $0x67] sm:$0xff]
        %v2314 = vld [vmem:[#allocation2 + $0x6f] sm:$0xff]
        %v2315 = vld [vmem:[#allocation2 + $0x77] sm:$0xff]
        %v2316 = vld [vmem:[#allocation2 + $0x7f] sm:$0xff]
        %v2317 = vld [vmem:[#allocation2 + $0x87] sm:$0xff]
        %v2318 = vld [vmem:[#allocation2 + $0x8f] sm:$0xff]
        %v2319 = vld [vmem:[#allocation2 + $0x97] sm:$0xff]
        %v2320 = vld [vmem:[#allocation2 + $0x9f] sm:$0xff]
        %v2321 = vld [vmem:[#allocation2 + $0xa7] sm:$0xff]
        %v2322 = vld [vmem:[#allocation2 + $0xaf] sm:$0xff]
        %v2323 = vld [vmem:[#allocation2 + $0xb7] sm:$0xff]
        %v2324 = vld [vmem:[#allocation2 + $0xbf] sm:$0xff]
        %v2325 = vld [vmem:[#allocation2 + $0xc7] sm:$0xff]
        %v2326 = vld [vmem:[#allocation2 + $0xcf] sm:$0xff]
        %v2327 = vld [vmem:[#allocation2 + $0xd7] sm:$0xff]
        %v2328 = vld [vmem:[#allocation2 + $0xdf] sm:$0xff]
        %v2329 = vld [vmem:[#allocation2 + $0xe7] sm:$0xff]
        %v2330 = vld [vmem:[#allocation2 + $0xef] sm:$0xff]
        %v2331 = vld [vmem:[#allocation2 + $0xf7] sm:$0xff]
        %v2332 = vld [vmem:[#allocation2 + $0xff] sm:$0xff]
        %v2333 = vsel %vm2237, 1, 0
        %v2334 = vsel %vm2238, 1, 0
        %v2335 = vsel %vm2239, 1, 0
        %v2336 = vsel %vm2240, 1, 0
        %v2337 = vsel %vm2241, 1, 0
        %v2338 = vsel %vm2242, 1, 0
        %v2339 = vsel %vm2243, 1, 0
        %v2340 = vsel %vm2244, 1, 0
        %v2341 = vsel %vm2245, 1, 0
        %v2342 = vsel %vm2246, 1, 0
        %v2343 = vsel %vm2247, 1, 0
        %v2344 = vsel %vm2248, 1, 0
        %v2345 = vsel %vm2249, 1, 0
        %v2346 = vsel %vm2250, 1, 0
        %v2347 = vsel %vm2251, 1, 0
        %v2348 = vsel %vm2252, 1, 0
        %v2349 = vsel %vm2253, 1, 0
        %v2350 = vsel %vm2254, 1, 0
        %v2351 = vsel %vm2255, 1, 0
        %v2352 = vsel %vm2256, 1, 0
        %v2353 = vsel %vm2257, 1, 0
        %v2354 = vsel %vm2258, 1, 0
        %v2355 = vsel %vm2259, 1, 0
        %v2356 = vsel %vm2260, 1, 0
        %v2357 = vsel %vm2261, 1, 0
        %v2358 = vsel %vm2262, 1, 0
        %v2359 = vsel %vm2263, 1, 0
        %v2360 = vsel %vm2264, 1, 0
        %v2361 = vsel %vm2265, 1, 0
        %v2362 = vsel %vm2266, 1, 0
        %v2363 = vsel %vm2267, 1, 0
        %v2364 = vsel %vm2268, 1, 0
        %vm2365 = vcmp.eq.s32.totalorder %v2333, 1
        %vm2366 = vcmp.eq.s32.totalorder %v2334, 1
        %vm2367 = vcmp.eq.s32.totalorder %v2335, 1
        %vm2368 = vcmp.eq.s32.totalorder %v2336, 1
        %vm2369 = vcmp.eq.s32.totalorder %v2337, 1
        %vm2370 = vcmp.eq.s32.totalorder %v2338, 1
        %vm2371 = vcmp.eq.s32.totalorder %v2339, 1
        %vm2372 = vcmp.eq.s32.totalorder %v2340, 1
        %vm2373 = vcmp.eq.s32.totalorder %v2341, 1
        %vm2374 = vcmp.eq.s32.totalorder %v2342, 1
        %vm2375 = vcmp.eq.s32.totalorder %v2343, 1
        %vm2376 = vcmp.eq.s32.totalorder %v2344, 1
        %vm2377 = vcmp.eq.s32.totalorder %v2345, 1
        %vm2378 = vcmp.eq.s32.totalorder %v2346, 1
        %vm2379 = vcmp.eq.s32.totalorder %v2347, 1
        %vm2380 = vcmp.eq.s32.totalorder %v2348, 1
        %vm2381 = vcmp.eq.s32.totalorder %v2349, 1
        %vm2382 = vcmp.eq.s32.totalorder %v2350, 1
        %vm2383 = vcmp.eq.s32.totalorder %v2351, 1
        %vm2384 = vcmp.eq.s32.totalorder %v2352, 1
        %vm2385 = vcmp.eq.s32.totalorder %v2353, 1
        %vm2386 = vcmp.eq.s32.totalorder %v2354, 1
        %vm2387 = vcmp.eq.s32.totalorder %v2355, 1
        %vm2388 = vcmp.eq.s32.totalorder %v2356, 1
        %vm2389 = vcmp.eq.s32.totalorder %v2357, 1
        %vm2390 = vcmp.eq.s32.totalorder %v2358, 1
        %vm2391 = vcmp.eq.s32.totalorder %v2359, 1
        %vm2392 = vcmp.eq.s32.totalorder %v2360, 1
        %vm2393 = vcmp.eq.s32.totalorder %v2361, 1
        %vm2394 = vcmp.eq.s32.totalorder %v2362, 1
        %vm2395 = vcmp.eq.s32.totalorder %v2363, 1
        %vm2396 = vcmp.eq.s32.totalorder %v2364, 1
        %v2397 = vsel %vm2365, %v2301, 0.0
        %v2398 = vsel %vm2366, %v2302, 0.0
        %v2399 = vsel %vm2367, %v2303, 0.0
        %v2400 = vsel %vm2368, %v2304, 0.0
        %v2401 = vsel %vm2369, %v2305, 0.0
        %v2402 = vsel %vm2370, %v2306, 0.0
        %v2403 = vsel %vm2371, %v2307, 0.0
        %v2404 = vsel %vm2372, %v2308, 0.0
        %v2405 = vsel %vm2373, %v2309, 0.0
        %v2406 = vsel %vm2374, %v2310, 0.0
        %v2407 = vsel %vm2375, %v2311, 0.0
        %v2408 = vsel %vm2376, %v2312, 0.0
        %v2409 = vsel %vm2377, %v2313, 0.0
        %v2410 = vsel %vm2378, %v2314, 0.0
        %v2411 = vsel %vm2379, %v2315, 0.0
        %v2412 = vsel %vm2380, %v2316, 0.0
        %v2413 = vsel %vm2381, %v2317, 0.0
        %v2414 = vsel %vm2382, %v2318, 0.0
        %v2415 = vsel %vm2383, %v2319, 0.0
        %v2416 = vsel %vm2384, %v2320, 0.0
        %v2417 = vsel %vm2385, %v2321, 0.0
        %v2418 = vsel %vm2386, %v2322, 0.0
        %v2419 = vsel %vm2387, %v2323, 0.0
        %v2420 = vsel %vm2388, %v2324, 0.0
        %v2421 = vsel %vm2389, %v2325, 0.0
        %v2422 = vsel %vm2390, %v2326, 0.0
        %v2423 = vsel %vm2391, %v2327, 0.0
        %v2424 = vsel %vm2392, %v2328, 0.0
        %v2425 = vsel %vm2393, %v2329, 0.0
        %v2426 = vsel %vm2394, %v2330, 0.0
        %v2427 = vsel %vm2395, %v2331, 0.0
        %v2428 = vsel %vm2396, %v2332, 0.0
        %v2429 = vpack.c.bf16 %v2397, %v2397
        %v2430 = vpack.c.bf16 %v2398, %v2398
        %v2431 = vpack.c.bf16 %v2399, %v2399
        %v2432 = vpack.c.bf16 %v2400, %v2400
        %v2433 = vpack.c.bf16 %v2401, %v2401
        %v2434 = vpack.c.bf16 %v2402, %v2402
        %v2435 = vpack.c.bf16 %v2403, %v2403
        %v2436 = vpack.c.bf16 %v2404, %v2404
        %v2437 = vpack.c.bf16 %v2405, %v2405
        %v2438 = vpack.c.bf16 %v2406, %v2406
        %v2439 = vpack.c.bf16 %v2407, %v2407
        %v2440 = vpack.c.bf16 %v2408, %v2408
        %v2441 = vpack.c.bf16 %v2409, %v2409
        %v2442 = vpack.c.bf16 %v2410, %v2410
        %v2443 = vpack.c.bf16 %v2411, %v2411
        %v2444 = vpack.c.bf16 %v2412, %v2412
        %v2445 = vpack.c.bf16 %v2413, %v2413
        %v2446 = vpack.c.bf16 %v2414, %v2414
        %v2447 = vpack.c.bf16 %v2415, %v2415
        %v2448 = vpack.c.bf16 %v2416, %v2416
        %v2449 = vpack.c.bf16 %v2417, %v2417
        %v2450 = vpack.c.bf16 %v2418, %v2418
        %v2451 = vpack.c.bf16 %v2419, %v2419
        %v2452 = vpack.c.bf16 %v2420, %v2420
        %v2453 = vpack.c.bf16 %v2421, %v2421
        %v2454 = vpack.c.bf16 %v2422, %v2422
        %v2455 = vpack.c.bf16 %v2423, %v2423
        %v2456 = vpack.c.bf16 %v2424, %v2424
        %v2457 = vpack.c.bf16 %v2425, %v2425
        %v2458 = vpack.c.bf16 %v2426, %v2426
        %v2459 = vpack.c.bf16 %v2427, %v2427
        %v2460 = vpack.c.bf16 %v2428, %v2428
        %v2461 = vld [vmem:[#allocation2 + $0x8] sm:$0xff]
        %v2462 = vld [vmem:[#allocation2 + $0x10] sm:$0xff]
        %v2463 = vld [vmem:[#allocation2 + $0x18] sm:$0xff]
        %v2464 = vld [vmem:[#allocation2 + $0x20] sm:$0xff]
        %v2465 = vld [vmem:[#allocation2 + $0x28] sm:$0xff]
        %v2466 = vld [vmem:[#allocation2 + $0x30] sm:$0xff]
        %v2467 = vld [vmem:[#allocation2 + $0x38] sm:$0xff]
        %v2468 = vld [vmem:[#allocation2 + $0x40] sm:$0xff]
        %v2469 = vld [vmem:[#allocation2 + $0x48] sm:$0xff]
        %v2470 = vld [vmem:[#allocation2 + $0x50] sm:$0xff]
        %v2471 = vld [vmem:[#allocation2 + $0x58] sm:$0xff]
        %v2472 = vld [vmem:[#allocation2 + $0x60] sm:$0xff]
        %v2473 = vld [vmem:[#allocation2 + $0x68] sm:$0xff]
        %v2474 = vld [vmem:[#allocation2 + $0x70] sm:$0xff]
        %v2475 = vld [vmem:[#allocation2 + $0x78] sm:$0xff]
        %v2476 = vld [vmem:[#allocation2 + $0x80] sm:$0xff]
        %v2477 = vld [vmem:[#allocation2 + $0x88] sm:$0xff]
        %v2478 = vld [vmem:[#allocation2 + $0x90] sm:$0xff]
        %v2479 = vld [vmem:[#allocation2 + $0x98] sm:$0xff]
        %v2480 = vld [vmem:[#allocation2 + $0xa0] sm:$0xff]
        %v2481 = vld [vmem:[#allocation2 + $0xa8] sm:$0xff]
        %v2482 = vld [vmem:[#allocation2 + $0xb0] sm:$0xff]
        %v2483 = vld [vmem:[#allocation2 + $0xb8] sm:$0xff]
        %v2484 = vld [vmem:[#allocation2 + $0xc0] sm:$0xff]
        %v2485 = vld [vmem:[#allocation2 + $0xc8] sm:$0xff]
        %v2486 = vld [vmem:[#allocation2 + $0xd0] sm:$0xff]
        %v2487 = vld [vmem:[#allocation2 + $0xd8] sm:$0xff]
        %v2488 = vld [vmem:[#allocation2 + $0xe0] sm:$0xff]
        %v2489 = vld [vmem:[#allocation2 + $0xe8] sm:$0xff]
        %v2490 = vld [vmem:[#allocation2 + $0xf0] sm:$0xff]
        %v2491 = vld [vmem:[#allocation2 + $0xf8] sm:$0xff]
        %v2492 = vld [vmem:[#allocation2 + $0x100] sm:$0xff]
        %v2493 = vpack.c.bf16 %v2461, %v2461
        %v2494 = vpack.c.bf16 %v2462, %v2462
        %v2495 = vpack.c.bf16 %v2463, %v2463
        %v2496 = vpack.c.bf16 %v2464, %v2464
        %v2497 = vpack.c.bf16 %v2465, %v2465
        %v2498 = vpack.c.bf16 %v2466, %v2466
        %v2499 = vpack.c.bf16 %v2467, %v2467
        %v2500 = vpack.c.bf16 %v2468, %v2468
        %v2501 = vpack.c.bf16 %v2469, %v2469
        %v2502 = vpack.c.bf16 %v2470, %v2470
        %v2503 = vpack.c.bf16 %v2471, %v2471
        %v2504 = vpack.c.bf16 %v2472, %v2472
        %v2505 = vpack.c.bf16 %v2473, %v2473
        %v2506 = vpack.c.bf16 %v2474, %v2474
        %v2507 = vpack.c.bf16 %v2475, %v2475
        %v2508 = vpack.c.bf16 %v2476, %v2476
        %v2509 = vpack.c.bf16 %v2477, %v2477
        %v2510 = vpack.c.bf16 %v2478, %v2478
        %v2511 = vpack.c.bf16 %v2479, %v2479
        %v2512 = vpack.c.bf16 %v2480, %v2480
        %v2513 = vpack.c.bf16 %v2481, %v2481
        %v2514 = vpack.c.bf16 %v2482, %v2482
        %v2515 = vpack.c.bf16 %v2483, %v2483
        %v2516 = vpack.c.bf16 %v2484, %v2484
        %v2517 = vpack.c.bf16 %v2485, %v2485
        %v2518 = vpack.c.bf16 %v2486, %v2486
        %v2519 = vpack.c.bf16 %v2487, %v2487
        %v2520 = vpack.c.bf16 %v2488, %v2488
        %v2521 = vpack.c.bf16 %v2489, %v2489
        %v2522 = vpack.c.bf16 %v2490, %v2490
        %v2523 = vpack.c.bf16 %v2491, %v2491
        %v2524 = vpack.c.bf16 %v2492, %v2492
        %v2525 = vld [vmem:[#allocation2 + $0x9] sm:$0xff]
        %v2526 = vld [vmem:[#allocation2 + $0x11] sm:$0xff]
        %v2527 = vld [vmem:[#allocation2 + $0x19] sm:$0xff]
        %v2528 = vld [vmem:[#allocation2 + $0x21] sm:$0xff]
        %v2529 = vld [vmem:[#allocation2 + $0x29] sm:$0xff]
        %v2530 = vld [vmem:[#allocation2 + $0x31] sm:$0xff]
        %v2531 = vld [vmem:[#allocation2 + $0x39] sm:$0xff]
        %v2532 = vld [vmem:[#allocation2 + $0x41] sm:$0xff]
        %v2533 = vld [vmem:[#allocation2 + $0x49] sm:$0xff]
        %v2534 = vld [vmem:[#allocation2 + $0x51] sm:$0xff]
        %v2535 = vld [vmem:[#allocation2 + $0x59] sm:$0xff]
        %v2536 = vld [vmem:[#allocation2 + $0x61] sm:$0xff]
        %v2537 = vld [vmem:[#allocation2 + $0x69] sm:$0xff]
        %v2538 = vld [vmem:[#allocation2 + $0x71] sm:$0xff]
        %v2539 = vld [vmem:[#allocation2 + $0x79] sm:$0xff]
        %v2540 = vld [vmem:[#allocation2 + $0x81] sm:$0xff]
        %v2541 = vld [vmem:[#allocation2 + $0x89] sm:$0xff]
        %v2542 = vld [vmem:[#allocation2 + $0x91] sm:$0xff]
        %v2543 = vld [vmem:[#allocation2 + $0x99] sm:$0xff]
        %v2544 = vld [vmem:[#allocation2 + $0xa1] sm:$0xff]
        %v2545 = vld [vmem:[#allocation2 + $0xa9] sm:$0xff]
        %v2546 = vld [vmem:[#allocation2 + $0xb1] sm:$0xff]
        %v2547 = vld [vmem:[#allocation2 + $0xb9] sm:$0xff]
        %v2548 = vld [vmem:[#allocation2 + $0xc1] sm:$0xff]
        %v2549 = vld [vmem:[#allocation2 + $0xc9] sm:$0xff]
        %v2550 = vld [vmem:[#allocation2 + $0xd1] sm:$0xff]
        %v2551 = vld [vmem:[#allocation2 + $0xd9] sm:$0xff]
        %v2552 = vld [vmem:[#allocation2 + $0xe1] sm:$0xff]
        %v2553 = vld [vmem:[#allocation2 + $0xe9] sm:$0xff]
        %v2554 = vld [vmem:[#allocation2 + $0xf1] sm:$0xff]
        %v2555 = vld [vmem:[#allocation2 + $0xf9] sm:$0xff]
        %v2556 = vld [vmem:[#allocation2 + $0x101] sm:$0xff]
        %v2557 = vsel %vm2269, 1, 0
        %v2558 = vsel %vm2270, 1, 0
        %v2559 = vsel %vm2271, 1, 0
        %v2560 = vsel %vm2272, 1, 0
        %v2561 = vsel %vm2273, 1, 0
        %v2562 = vsel %vm2274, 1, 0
        %v2563 = vsel %vm2275, 1, 0
        %v2564 = vsel %vm2276, 1, 0
        %v2565 = vsel %vm2277, 1, 0
        %v2566 = vsel %vm2278, 1, 0
        %v2567 = vsel %vm2279, 1, 0
        %v2568 = vsel %vm2280, 1, 0
        %v2569 = vsel %vm2281, 1, 0
        %v2570 = vsel %vm2282, 1, 0
        %v2571 = vsel %vm2283, 1, 0
        %v2572 = vsel %vm2284, 1, 0
        %v2573 = vsel %vm2285, 1, 0
        %v2574 = vsel %vm2286, 1, 0
        %v2575 = vsel %vm2287, 1, 0
        %v2576 = vsel %vm2288, 1, 0
        %v2577 = vsel %vm2289, 1, 0
        %v2578 = vsel %vm2290, 1, 0
        %v2579 = vsel %vm2291, 1, 0
        %v2580 = vsel %vm2292, 1, 0
        %v2581 = vsel %vm2293, 1, 0
        %v2582 = vsel %vm2294, 1, 0
        %v2583 = vsel %vm2295, 1, 0
        %v2584 = vsel %vm2296, 1, 0
        %v2585 = vsel %vm2297, 1, 0
        %v2586 = vsel %vm2298, 1, 0
        %v2587 = vsel %vm2299, 1, 0
        %v2588 = vsel %vm2300, 1, 0
        %vm2589 = vcmp.eq.s32.totalorder %v2557, 1
        %vm2590 = vcmp.eq.s32.totalorder %v2558, 1
        %vm2591 = vcmp.eq.s32.totalorder %v2559, 1
        %vm2592 = vcmp.eq.s32.totalorder %v2560, 1
        %vm2593 = vcmp.eq.s32.totalorder %v2561, 1
        %vm2594 = vcmp.eq.s32.totalorder %v2562, 1
        %vm2595 = vcmp.eq.s32.totalorder %v2563, 1
        %vm2596 = vcmp.eq.s32.totalorder %v2564, 1
        %vm2597 = vcmp.eq.s32.totalorder %v2565, 1
        %vm2598 = vcmp.eq.s32.totalorder %v2566, 1
        %vm2599 = vcmp.eq.s32.totalorder %v2567, 1
        %vm2600 = vcmp.eq.s32.totalorder %v2568, 1
        %vm2601 = vcmp.eq.s32.totalorder %v2569, 1
        %vm2602 = vcmp.eq.s32.totalorder %v2570, 1
        %vm2603 = vcmp.eq.s32.totalorder %v2571, 1
        %vm2604 = vcmp.eq.s32.totalorder %v2572, 1
        %vm2605 = vcmp.eq.s32.totalorder %v2573, 1
        %vm2606 = vcmp.eq.s32.totalorder %v2574, 1
        %vm2607 = vcmp.eq.s32.totalorder %v2575, 1
        %vm2608 = vcmp.eq.s32.totalorder %v2576, 1
        %vm2609 = vcmp.eq.s32.totalorder %v2577, 1
        %vm2610 = vcmp.eq.s32.totalorder %v2578, 1
        %vm2611 = vcmp.eq.s32.totalorder %v2579, 1
        %vm2612 = vcmp.eq.s32.totalorder %v2580, 1
        %vm2613 = vcmp.eq.s32.totalorder %v2581, 1
        %vm2614 = vcmp.eq.s32.totalorder %v2582, 1
        %vm2615 = vcmp.eq.s32.totalorder %v2583, 1
        %vm2616 = vcmp.eq.s32.totalorder %v2584, 1
        %vm2617 = vcmp.eq.s32.totalorder %v2585, 1
        %vm2618 = vcmp.eq.s32.totalorder %v2586, 1
        %vm2619 = vcmp.eq.s32.totalorder %v2587, 1
        %vm2620 = vcmp.eq.s32.totalorder %v2588, 1
        %v2621 = vsel %vm2589, %v2525, 0.0
        %v2622 = vsel %vm2590, %v2526, 0.0
        %v2623 = vsel %vm2591, %v2527, 0.0
        %v2624 = vsel %vm2592, %v2528, 0.0
        %v2625 = vsel %vm2593, %v2529, 0.0
        %v2626 = vsel %vm2594, %v2530, 0.0
        %v2627 = vsel %vm2595, %v2531, 0.0
        %v2628 = vsel %vm2596, %v2532, 0.0
        %v2629 = vsel %vm2597, %v2533, 0.0
        %v2630 = vsel %vm2598, %v2534, 0.0
        %v2631 = vsel %vm2599, %v2535, 0.0
        %v2632 = vsel %vm2600, %v2536, 0.0
        %v2633 = vsel %vm2601, %v2537, 0.0
        %v2634 = vsel %vm2602, %v2538, 0.0
        %v2635 = vsel %vm2603, %v2539, 0.0
        %v2636 = vsel %vm2604, %v2540, 0.0
        %v2637 = vsel %vm2605, %v2541, 0.0
        %v2638 = vsel %vm2606, %v2542, 0.0
        %v2639 = vsel %vm2607, %v2543, 0.0
        %v2640 = vsel %vm2608, %v2544, 0.0
        %v2641 = vsel %vm2609, %v2545, 0.0
        %v2642 = vsel %vm2610, %v2546, 0.0
        %v2643 = vsel %vm2611, %v2547, 0.0
        %v2644 = vsel %vm2612, %v2548, 0.0
        %v2645 = vsel %vm2613, %v2549, 0.0
        %v2646 = vsel %vm2614, %v2550, 0.0
        %v2647 = vsel %vm2615, %v2551, 0.0
        %v2648 = vsel %vm2616, %v2552, 0.0
        %v2649 = vsel %vm2617, %v2553, 0.0
        %v2650 = vsel %vm2618, %v2554, 0.0
        %v2651 = vsel %vm2619, %v2555, 0.0
        %v2652 = vsel %vm2620, %v2556, 0.0
        %v2653 = vpack.c.bf16 %v2621, %v2621
        %v2654 = vpack.c.bf16 %v2622, %v2622
        %v2655 = vpack.c.bf16 %v2623, %v2623
        %v2656 = vpack.c.bf16 %v2624, %v2624
        %v2657 = vpack.c.bf16 %v2625, %v2625
        %v2658 = vpack.c.bf16 %v2626, %v2626
        %v2659 = vpack.c.bf16 %v2627, %v2627
        %v2660 = vpack.c.bf16 %v2628, %v2628
        %v2661 = vpack.c.bf16 %v2629, %v2629
        %v2662 = vpack.c.bf16 %v2630, %v2630
        %v2663 = vpack.c.bf16 %v2631, %v2631
        %v2664 = vpack.c.bf16 %v2632, %v2632
        %v2665 = vpack.c.bf16 %v2633, %v2633
        %v2666 = vpack.c.bf16 %v2634, %v2634
        %v2667 = vpack.c.bf16 %v2635, %v2635
        %v2668 = vpack.c.bf16 %v2636, %v2636
        %v2669 = vpack.c.bf16 %v2637, %v2637
        %v2670 = vpack.c.bf16 %v2638, %v2638
        %v2671 = vpack.c.bf16 %v2639, %v2639
        %v2672 = vpack.c.bf16 %v2640, %v2640
        %v2673 = vpack.c.bf16 %v2641, %v2641
        %v2674 = vpack.c.bf16 %v2642, %v2642
        %v2675 = vpack.c.bf16 %v2643, %v2643
        %v2676 = vpack.c.bf16 %v2644, %v2644
        %v2677 = vpack.c.bf16 %v2645, %v2645
        %v2678 = vpack.c.bf16 %v2646, %v2646
        %v2679 = vpack.c.bf16 %v2647, %v2647
        %v2680 = vpack.c.bf16 %v2648, %v2648
        %v2681 = vpack.c.bf16 %v2649, %v2649
        %v2682 = vpack.c.bf16 %v2650, %v2650
        %v2683 = vpack.c.bf16 %v2651, %v2651
        %v2684 = vpack.c.bf16 %v2652, %v2652
        %v2685 = vld [vmem:[#allocation2 + $0x107] sm:$0xff]
        %v2686 = vld [vmem:[#allocation2 + $0x10f] sm:$0xff]
        %v2687 = vsel %vm2365, %v2303, 0.0
        %v2688 = vsel %vm2366, %v2304, 0.0
        %v2689 = vsel %vm2367, %v2305, 0.0
        %v2690 = vsel %vm2368, %v2306, 0.0
        %v2691 = vsel %vm2369, %v2307, 0.0
        %v2692 = vsel %vm2370, %v2308, 0.0
        %v2693 = vsel %vm2371, %v2309, 0.0
        %v2694 = vsel %vm2372, %v2310, 0.0
        %v2695 = vsel %vm2373, %v2311, 0.0
        %v2696 = vsel %vm2374, %v2312, 0.0
        %v2697 = vsel %vm2375, %v2313, 0.0
        %v2698 = vsel %vm2376, %v2314, 0.0
        %v2699 = vsel %vm2377, %v2315, 0.0
        %v2700 = vsel %vm2378, %v2316, 0.0
        %v2701 = vsel %vm2379, %v2317, 0.0
        %v2702 = vsel %vm2380, %v2318, 0.0
        %v2703 = vsel %vm2381, %v2319, 0.0
        %v2704 = vsel %vm2382, %v2320, 0.0
        %v2705 = vsel %vm2383, %v2321, 0.0
        %v2706 = vsel %vm2384, %v2322, 0.0
        %v2707 = vsel %vm2385, %v2323, 0.0
        %v2708 = vsel %vm2386, %v2324, 0.0
        %v2709 = vsel %vm2387, %v2325, 0.0
        %v2710 = vsel %vm2388, %v2326, 0.0
        %v2711 = vsel %vm2389, %v2327, 0.0
        %v2712 = vsel %vm2390, %v2328, 0.0
        %v2713 = vsel %vm2391, %v2329, 0.0
        %v2714 = vsel %vm2392, %v2330, 0.0
        %v2715 = vsel %vm2393, %v2331, 0.0
        %v2716 = vsel %vm2394, %v2332, 0.0
        %v2717 = vsel %vm2395, %v2685, 0.0
        %v2718 = vsel %vm2396, %v2686, 0.0
        %v2719 = vpack.c.bf16 %v2687, %v2687
        %v2720 = vpack.c.bf16 %v2688, %v2688
        %v2721 = vpack.c.bf16 %v2689, %v2689
        %v2722 = vpack.c.bf16 %v2690, %v2690
        %v2723 = vpack.c.bf16 %v2691, %v2691
        %v2724 = vpack.c.bf16 %v2692, %v2692
        %v2725 = vpack.c.bf16 %v2693, %v2693
        %v2726 = vpack.c.bf16 %v2694, %v2694
        %v2727 = vpack.c.bf16 %v2695, %v2695
        %v2728 = vpack.c.bf16 %v2696, %v2696
        %v2729 = vpack.c.bf16 %v2697, %v2697
        %v2730 = vpack.c.bf16 %v2698, %v2698
        %v2731 = vpack.c.bf16 %v2699, %v2699
        %v2732 = vpack.c.bf16 %v2700, %v2700
        %v2733 = vpack.c.bf16 %v2701, %v2701
        %v2734 = vpack.c.bf16 %v2702, %v2702
        %v2735 = vpack.c.bf16 %v2703, %v2703
        %v2736 = vpack.c.bf16 %v2704, %v2704
        %v2737 = vpack.c.bf16 %v2705, %v2705
        %v2738 = vpack.c.bf16 %v2706, %v2706
        %v2739 = vpack.c.bf16 %v2707, %v2707
        %v2740 = vpack.c.bf16 %v2708, %v2708
        %v2741 = vpack.c.bf16 %v2709, %v2709
        %v2742 = vpack.c.bf16 %v2710, %v2710
        %v2743 = vpack.c.bf16 %v2711, %v2711
        %v2744 = vpack.c.bf16 %v2712, %v2712
        %v2745 = vpack.c.bf16 %v2713, %v2713
        %v2746 = vpack.c.bf16 %v2714, %v2714
        %v2747 = vpack.c.bf16 %v2715, %v2715
        %v2748 = vpack.c.bf16 %v2716, %v2716
        %v2749 = vpack.c.bf16 %v2717, %v2717
        %v2750 = vpack.c.bf16 %v2718, %v2718
        %v2751 = vld [vmem:[#allocation2 + $0x108] sm:$0xff]
        %v2752 = vld [vmem:[#allocation2 + $0x110] sm:$0xff]
        %v2753 = vpack.c.bf16 %v2751, %v2751
        %v2754 = vpack.c.bf16 %v2752, %v2752
        %v2755 = vld [vmem:[#allocation2 + $0x109] sm:$0xff]
        %v2756 = vld [vmem:[#allocation2 + $0x111] sm:$0xff]
        %v2757 = vsel %vm2589, %v2527, 0.0
        %v2758 = vsel %vm2590, %v2528, 0.0
        %v2759 = vsel %vm2591, %v2529, 0.0
        %v2760 = vsel %vm2592, %v2530, 0.0
        %v2761 = vsel %vm2593, %v2531, 0.0
        %v2762 = vsel %vm2594, %v2532, 0.0
        %v2763 = vsel %vm2595, %v2533, 0.0
        %v2764 = vsel %vm2596, %v2534, 0.0
        %v2765 = vsel %vm2597, %v2535, 0.0
        %v2766 = vsel %vm2598, %v2536, 0.0
        %v2767 = vsel %vm2599, %v2537, 0.0
        %v2768 = vsel %vm2600, %v2538, 0.0
        %v2769 = vsel %vm2601, %v2539, 0.0
        %v2770 = vsel %vm2602, %v2540, 0.0
        %v2771 = vsel %vm2603, %v2541, 0.0
        %v2772 = vsel %vm2604, %v2542, 0.0
        %v2773 = vsel %vm2605, %v2543, 0.0
        %v2774 = vsel %vm2606, %v2544, 0.0
        %v2775 = vsel %vm2607, %v2545, 0.0
        %v2776 = vsel %vm2608, %v2546, 0.0
        %v2777 = vsel %vm2609, %v2547, 0.0
        %v2778 = vsel %vm2610, %v2548, 0.0
        %v2779 = vsel %vm2611, %v2549, 0.0
        %v2780 = vsel %vm2612, %v2550, 0.0
        %v2781 = vsel %vm2613, %v2551, 0.0
        %v2782 = vsel %vm2614, %v2552, 0.0
        %v2783 = vsel %vm2615, %v2553, 0.0
        %v2784 = vsel %vm2616, %v2554, 0.0
        %v2785 = vsel %vm2617, %v2555, 0.0
        %v2786 = vsel %vm2618, %v2556, 0.0
        %v2787 = vsel %vm2619, %v2755, 0.0
        %v2788 = vsel %vm2620, %v2756, 0.0
        %v2789 = vpack.c.bf16 %v2757, %v2757
        %v2790 = vpack.c.bf16 %v2758, %v2758
        %v2791 = vpack.c.bf16 %v2759, %v2759
        %v2792 = vpack.c.bf16 %v2760, %v2760
        %v2793 = vpack.c.bf16 %v2761, %v2761
        %v2794 = vpack.c.bf16 %v2762, %v2762
        %v2795 = vpack.c.bf16 %v2763, %v2763
        %v2796 = vpack.c.bf16 %v2764, %v2764
        %v2797 = vpack.c.bf16 %v2765, %v2765
        %v2798 = vpack.c.bf16 %v2766, %v2766
        %v2799 = vpack.c.bf16 %v2767, %v2767
        %v2800 = vpack.c.bf16 %v2768, %v2768
        %v2801 = vpack.c.bf16 %v2769, %v2769
        %v2802 = vpack.c.bf16 %v2770, %v2770
        %v2803 = vpack.c.bf16 %v2771, %v2771
        %v2804 = vpack.c.bf16 %v2772, %v2772
        %v2805 = vpack.c.bf16 %v2773, %v2773
        %v2806 = vpack.c.bf16 %v2774, %v2774
        %v2807 = vpack.c.bf16 %v2775, %v2775
        %v2808 = vpack.c.bf16 %v2776, %v2776
        %v2809 = vpack.c.bf16 %v2777, %v2777
        %v2810 = vpack.c.bf16 %v2778, %v2778
        %v2811 = vpack.c.bf16 %v2779, %v2779
        %v2812 = vpack.c.bf16 %v2780, %v2780
        %v2813 = vpack.c.bf16 %v2781, %v2781
        %v2814 = vpack.c.bf16 %v2782, %v2782
        %v2815 = vpack.c.bf16 %v2783, %v2783
        %v2816 = vpack.c.bf16 %v2784, %v2784
        %v2817 = vpack.c.bf16 %v2785, %v2785
        %v2818 = vpack.c.bf16 %v2786, %v2786
        %v2819 = vpack.c.bf16 %v2787, %v2787
        %v2820 = vpack.c.bf16 %v2788, %v2788
        %v2821 = vld [vmem:[#allocation2 + $0x117] sm:$0xff]
        %v2822 = vld [vmem:[#allocation2 + $0x11f] sm:$0xff]
        %v2823 = vsel %vm2365, %v2305, 0.0
        %v2824 = vsel %vm2366, %v2306, 0.0
        %v2825 = vsel %vm2367, %v2307, 0.0
        %v2826 = vsel %vm2368, %v2308, 0.0
        %v2827 = vsel %vm2369, %v2309, 0.0
        %v2828 = vsel %vm2370, %v2310, 0.0
        %v2829 = vsel %vm2371, %v2311, 0.0
        %v2830 = vsel %vm2372, %v2312, 0.0
        %v2831 = vsel %vm2373, %v2313, 0.0
        %v2832 = vsel %vm2374, %v2314, 0.0
        %v2833 = vsel %vm2375, %v2315, 0.0
        %v2834 = vsel %vm2376, %v2316, 0.0
        %v2835 = vsel %vm2377, %v2317, 0.0
        %v2836 = vsel %vm2378, %v2318, 0.0
        %v2837 = vsel %vm2379, %v2319, 0.0
        %v2838 = vsel %vm2380, %v2320, 0.0
        %v2839 = vsel %vm2381, %v2321, 0.0
        %v2840 = vsel %vm2382, %v2322, 0.0
        %v2841 = vsel %vm2383, %v2323, 0.0
        %v2842 = vsel %vm2384, %v2324, 0.0
        %v2843 = vsel %vm2385, %v2325, 0.0
        %v2844 = vsel %vm2386, %v2326, 0.0
        %v2845 = vsel %vm2387, %v2327, 0.0
        %v2846 = vsel %vm2388, %v2328, 0.0
        %v2847 = vsel %vm2389, %v2329, 0.0
        %v2848 = vsel %vm2390, %v2330, 0.0
        %v2849 = vsel %vm2391, %v2331, 0.0
        %v2850 = vsel %vm2392, %v2332, 0.0
        %v2851 = vsel %vm2393, %v2685, 0.0
        %v2852 = vsel %vm2394, %v2686, 0.0
        %v2853 = vsel %vm2395, %v2821, 0.0
        %v2854 = vsel %vm2396, %v2822, 0.0
        %v2855 = vpack.c.bf16 %v2823, %v2823
        %v2856 = vpack.c.bf16 %v2824, %v2824
        %v2857 = vpack.c.bf16 %v2825, %v2825
        %v2858 = vpack.c.bf16 %v2826, %v2826
        %v2859 = vpack.c.bf16 %v2827, %v2827
        %v2860 = vpack.c.bf16 %v2828, %v2828
        %v2861 = vpack.c.bf16 %v2829, %v2829
        %v2862 = vpack.c.bf16 %v2830, %v2830
        %v2863 = vpack.c.bf16 %v2831, %v2831
        %v2864 = vpack.c.bf16 %v2832, %v2832
        %v2865 = vpack.c.bf16 %v2833, %v2833
        %v2866 = vpack.c.bf16 %v2834, %v2834
        %v2867 = vpack.c.bf16 %v2835, %v2835
        %v2868 = vpack.c.bf16 %v2836, %v2836
        %v2869 = vpack.c.bf16 %v2837, %v2837
        %v2870 = vpack.c.bf16 %v2838, %v2838
        %v2871 = vpack.c.bf16 %v2839, %v2839
        %v2872 = vpack.c.bf16 %v2840, %v2840
        %v2873 = vpack.c.bf16 %v2841, %v2841
        %v2874 = vpack.c.bf16 %v2842, %v2842
        %v2875 = vpack.c.bf16 %v2843, %v2843
        %v2876 = vpack.c.bf16 %v2844, %v2844
        %v2877 = vpack.c.bf16 %v2845, %v2845
        %v2878 = vpack.c.bf16 %v2846, %v2846
        %v2879 = vpack.c.bf16 %v2847, %v2847
        %v2880 = vpack.c.bf16 %v2848, %v2848
        %v2881 = vpack.c.bf16 %v2849, %v2849
        %v2882 = vpack.c.bf16 %v2850, %v2850
        %v2883 = vpack.c.bf16 %v2851, %v2851
        %v2884 = vpack.c.bf16 %v2852, %v2852
        %v2885 = vpack.c.bf16 %v2853, %v2853
        %v2886 = vpack.c.bf16 %v2854, %v2854
        %v2887 = vld [vmem:[#allocation2 + $0x118] sm:$0xff]
        %v2888 = vld [vmem:[#allocation2 + $0x120] sm:$0xff]
        %v2889 = vpack.c.bf16 %v2887, %v2887
        %v2890 = vpack.c.bf16 %v2888, %v2888
        %v2891 = vld [vmem:[#allocation2 + $0x119] sm:$0xff]
        %v2892 = vld [vmem:[#allocation2 + $0x121] sm:$0xff]
        %v2893 = vsel %vm2589, %v2529, 0.0
        %v2894 = vsel %vm2590, %v2530, 0.0
        %v2895 = vsel %vm2591, %v2531, 0.0
        %v2896 = vsel %vm2592, %v2532, 0.0
        %v2897 = vsel %vm2593, %v2533, 0.0
        %v2898 = vsel %vm2594, %v2534, 0.0
        %v2899 = vsel %vm2595, %v2535, 0.0
        %v2900 = vsel %vm2596, %v2536, 0.0
        %v2901 = vsel %vm2597, %v2537, 0.0
        %v2902 = vsel %vm2598, %v2538, 0.0
        %v2903 = vsel %vm2599, %v2539, 0.0
        %v2904 = vsel %vm2600, %v2540, 0.0
        %v2905 = vsel %vm2601, %v2541, 0.0
        %v2906 = vsel %vm2602, %v2542, 0.0
        %v2907 = vsel %vm2603, %v2543, 0.0
        %v2908 = vsel %vm2604, %v2544, 0.0
        %v2909 = vsel %vm2605, %v2545, 0.0
        %v2910 = vsel %vm2606, %v2546, 0.0
        %v2911 = vsel %vm2607, %v2547, 0.0
        %v2912 = vsel %vm2608, %v2548, 0.0
        %v2913 = vsel %vm2609, %v2549, 0.0
        %v2914 = vsel %vm2610, %v2550, 0.0
        %v2915 = vsel %vm2611, %v2551, 0.0
        %v2916 = vsel %vm2612, %v2552, 0.0
        %v2917 = vsel %vm2613, %v2553, 0.0
        %v2918 = vsel %vm2614, %v2554, 0.0
        %v2919 = vsel %vm2615, %v2555, 0.0
        %v2920 = vsel %vm2616, %v2556, 0.0
        %v2921 = vsel %vm2617, %v2755, 0.0
        %v2922 = vsel %vm2618, %v2756, 0.0
        %v2923 = vsel %vm2619, %v2891, 0.0
        %v2924 = vsel %vm2620, %v2892, 0.0
        %v2925 = vpack.c.bf16 %v2893, %v2893
        %v2926 = vpack.c.bf16 %v2894, %v2894
        %v2927 = vpack.c.bf16 %v2895, %v2895
        %v2928 = vpack.c.bf16 %v2896, %v2896
        %v2929 = vpack.c.bf16 %v2897, %v2897
        %v2930 = vpack.c.bf16 %v2898, %v2898
        %v2931 = vpack.c.bf16 %v2899, %v2899
        %v2932 = vpack.c.bf16 %v2900, %v2900
        %v2933 = vpack.c.bf16 %v2901, %v2901
        %v2934 = vpack.c.bf16 %v2902, %v2902
        %v2935 = vpack.c.bf16 %v2903, %v2903
        %v2936 = vpack.c.bf16 %v2904, %v2904
        %v2937 = vpack.c.bf16 %v2905, %v2905
        %v2938 = vpack.c.bf16 %v2906, %v2906
        %v2939 = vpack.c.bf16 %v2907, %v2907
        %v2940 = vpack.c.bf16 %v2908, %v2908
        %v2941 = vpack.c.bf16 %v2909, %v2909
        %v2942 = vpack.c.bf16 %v2910, %v2910
        %v2943 = vpack.c.bf16 %v2911, %v2911
        %v2944 = vpack.c.bf16 %v2912, %v2912
        %v2945 = vpack.c.bf16 %v2913, %v2913
        %v2946 = vpack.c.bf16 %v2914, %v2914
        %v2947 = vpack.c.bf16 %v2915, %v2915
        %v2948 = vpack.c.bf16 %v2916, %v2916
        %v2949 = vpack.c.bf16 %v2917, %v2917
        %v2950 = vpack.c.bf16 %v2918, %v2918
        %v2951 = vpack.c.bf16 %v2919, %v2919
        %v2952 = vpack.c.bf16 %v2920, %v2920
        %v2953 = vpack.c.bf16 %v2921, %v2921
        %v2954 = vpack.c.bf16 %v2922, %v2922
        %v2955 = vpack.c.bf16 %v2923, %v2923
        %v2956 = vpack.c.bf16 %v2924, %v2924
        %v2989 = vunpack.c.l.b16 %v2429
        %v2990 = vunpack.c.l.b16 %v2430
        %v2991 = vunpack.c.l.b16 %v2431
        %v2992 = vunpack.c.l.b16 %v2432
        %v2993 = vunpack.c.l.b16 %v2433
        %v2994 = vunpack.c.l.b16 %v2434
        %v2995 = vunpack.c.l.b16 %v2435
        %v2996 = vunpack.c.l.b16 %v2436
        %v2997 = vunpack.c.l.b16 %v2437
        %v2998 = vunpack.c.l.b16 %v2438
        %v2999 = vunpack.c.l.b16 %v2439
        %v3000 = vunpack.c.l.b16 %v2440
        %v3001 = vunpack.c.l.b16 %v2441
        %v3002 = vunpack.c.l.b16 %v2442
        %v3003 = vunpack.c.l.b16 %v2443
        %v3004 = vunpack.c.l.b16 %v2444
        %v3005 = vunpack.c.l.b16 %v2445
        %v3006 = vunpack.c.l.b16 %v2446
        %v3007 = vunpack.c.l.b16 %v2447
        %v3008 = vunpack.c.l.b16 %v2448
        %v3009 = vunpack.c.l.b16 %v2449
        %v3010 = vunpack.c.l.b16 %v2450
        %v3011 = vunpack.c.l.b16 %v2451
        %v3012 = vunpack.c.l.b16 %v2452
        %v3013 = vunpack.c.l.b16 %v2453
        %v3014 = vunpack.c.l.b16 %v2454
        %v3015 = vunpack.c.l.b16 %v2455
        %v3016 = vunpack.c.l.b16 %v2456
        %v3017 = vunpack.c.l.b16 %v2457
        %v3018 = vunpack.c.l.b16 %v2458
        %v3019 = vunpack.c.l.b16 %v2459
        %v3020 = vunpack.c.l.b16 %v2460
        %v3021 = vpack.c.b16 %v2990, %v2989
        %v3022 = vpack.c.b16 %v2992, %v2991
        %v3023 = vpack.c.b16 %v2994, %v2993
        %v3024 = vpack.c.b16 %v2996, %v2995
        %v3025 = vpack.c.b16 %v2998, %v2997
        %v3026 = vpack.c.b16 %v3000, %v2999
        %v3027 = vpack.c.b16 %v3002, %v3001
        %v3028 = vpack.c.b16 %v3004, %v3003
        %v3029 = vpack.c.b16 %v3006, %v3005
        %v3030 = vpack.c.b16 %v3008, %v3007
        %v3031 = vpack.c.b16 %v3010, %v3009
        %v3032 = vpack.c.b16 %v3012, %v3011
        %v3033 = vpack.c.b16 %v3014, %v3013
        %v3034 = vpack.c.b16 %v3016, %v3015
        %v3035 = vpack.c.b16 %v3018, %v3017
        %v3036 = vpack.c.b16 %v3020, %v3019
        %v3069 = vunpack.c.l.b16 %v2493
        %v3070 = vunpack.c.l.b16 %v2494
        %v3071 = vunpack.c.l.b16 %v2495
        %v3072 = vunpack.c.l.b16 %v2496
        %v3073 = vunpack.c.l.b16 %v2497
        %v3074 = vunpack.c.l.b16 %v2498
        %v3075 = vunpack.c.l.b16 %v2499
        %v3076 = vunpack.c.l.b16 %v2500
        %v3077 = vunpack.c.l.b16 %v2501
        %v3078 = vunpack.c.l.b16 %v2502
        %v3079 = vunpack.c.l.b16 %v2503
        %v3080 = vunpack.c.l.b16 %v2504
        %v3081 = vunpack.c.l.b16 %v2505
        %v3082 = vunpack.c.l.b16 %v2506
        %v3083 = vunpack.c.l.b16 %v2507
        %v3084 = vunpack.c.l.b16 %v2508
        %v3085 = vunpack.c.l.b16 %v2509
        %v3086 = vunpack.c.l.b16 %v2510
        %v3087 = vunpack.c.l.b16 %v2511
        %v3088 = vunpack.c.l.b16 %v2512
        %v3089 = vunpack.c.l.b16 %v2513
        %v3090 = vunpack.c.l.b16 %v2514
        %v3091 = vunpack.c.l.b16 %v2515
        %v3092 = vunpack.c.l.b16 %v2516
        %v3093 = vunpack.c.l.b16 %v2517
        %v3094 = vunpack.c.l.b16 %v2518
        %v3095 = vunpack.c.l.b16 %v2519
        %v3096 = vunpack.c.l.b16 %v2520
        %v3097 = vunpack.c.l.b16 %v2521
        %v3098 = vunpack.c.l.b16 %v2522
        %v3099 = vunpack.c.l.b16 %v2523
        %v3100 = vunpack.c.l.b16 %v2524
        %v3101 = vpack.c.b16 %v3070, %v3069
        %v3102 = vpack.c.b16 %v3072, %v3071
        %v3103 = vpack.c.b16 %v3074, %v3073
        %v3104 = vpack.c.b16 %v3076, %v3075
        %v3105 = vpack.c.b16 %v3078, %v3077
        %v3106 = vpack.c.b16 %v3080, %v3079
        %v3107 = vpack.c.b16 %v3082, %v3081
        %v3108 = vpack.c.b16 %v3084, %v3083
        %v3109 = vpack.c.b16 %v3086, %v3085
        %v3110 = vpack.c.b16 %v3088, %v3087
        %v3111 = vpack.c.b16 %v3090, %v3089
        %v3112 = vpack.c.b16 %v3092, %v3091
        %v3113 = vpack.c.b16 %v3094, %v3093
        %v3114 = vpack.c.b16 %v3096, %v3095
        %v3115 = vpack.c.b16 %v3098, %v3097
        %v3116 = vpack.c.b16 %v3100, %v3099
        %3117 = vrot.lane.b32.xlu0 %v3101, 64
        %v3118 = vpop.permute.xlu0 %3117
        %3119 = vrot.lane.b32.xlu0 %v3102, 64
        %v3120 = vpop.permute.xlu0 %3119
        %3121 = vrot.lane.b32.xlu0 %v3103, 64
        %v3122 = vpop.permute.xlu0 %3121
        %3123 = vrot.lane.b32.xlu0 %v3104, 64
        %v3124 = vpop.permute.xlu0 %3123
        %3125 = vrot.lane.b32.xlu0 %v3105, 64
        %v3126 = vpop.permute.xlu0 %3125
        %3127 = vrot.lane.b32.xlu0 %v3106, 64
        %v3128 = vpop.permute.xlu0 %3127
        %3129 = vrot.lane.b32.xlu0 %v3107, 64
        %v3130 = vpop.permute.xlu0 %3129
        %3131 = vrot.lane.b32.xlu0 %v3108, 64
        %v3132 = vpop.permute.xlu0 %3131
        %3133 = vrot.lane.b32.xlu0 %v3109, 64
        %v3134 = vpop.permute.xlu0 %3133
        %3135 = vrot.lane.b32.xlu0 %v3110, 64
        %v3136 = vpop.permute.xlu0 %3135
        %3137 = vrot.lane.b32.xlu0 %v3111, 64
        %v3138 = vpop.permute.xlu0 %3137
        %3139 = vrot.lane.b32.xlu0 %v3112, 64
        %v3140 = vpop.permute.xlu0 %3139
        %3141 = vrot.lane.b32.xlu0 %v3113, 64
        %v3142 = vpop.permute.xlu0 %3141
        %3143 = vrot.lane.b32.xlu0 %v3114, 64
        %v3144 = vpop.permute.xlu0 %3143
        %3145 = vrot.lane.b32.xlu0 %v3115, 64
        %v3146 = vpop.permute.xlu0 %3145
        %3147 = vrot.lane.b32.xlu0 %v3116, 64
        %v3148 = vpop.permute.xlu0 %3147
        %v3181 = vunpack.c.l.b16 %v2653
        %v3182 = vunpack.c.l.b16 %v2654
        %v3183 = vunpack.c.l.b16 %v2655
        %v3184 = vunpack.c.l.b16 %v2656
        %v3185 = vunpack.c.l.b16 %v2657
        %v3186 = vunpack.c.l.b16 %v2658
        %v3187 = vunpack.c.l.b16 %v2659
        %v3188 = vunpack.c.l.b16 %v2660
        %v3189 = vunpack.c.l.b16 %v2661
        %v3190 = vunpack.c.l.b16 %v2662
        %v3191 = vunpack.c.l.b16 %v2663
        %v3192 = vunpack.c.l.b16 %v2664
        %v3193 = vunpack.c.l.b16 %v2665
        %v3194 = vunpack.c.l.b16 %v2666
        %v3195 = vunpack.c.l.b16 %v2667
        %v3196 = vunpack.c.l.b16 %v2668
        %v3197 = vunpack.c.l.b16 %v2669
        %v3198 = vunpack.c.l.b16 %v2670
        %v3199 = vunpack.c.l.b16 %v2671
        %v3200 = vunpack.c.l.b16 %v2672
        %v3201 = vunpack.c.l.b16 %v2673
        %v3202 = vunpack.c.l.b16 %v2674
        %v3203 = vunpack.c.l.b16 %v2675
        %v3204 = vunpack.c.l.b16 %v2676
        %v3205 = vunpack.c.l.b16 %v2677
        %v3206 = vunpack.c.l.b16 %v2678
        %v3207 = vunpack.c.l.b16 %v2679
        %v3208 = vunpack.c.l.b16 %v2680
        %v3209 = vunpack.c.l.b16 %v2681
        %v3210 = vunpack.c.l.b16 %v2682
        %v3211 = vunpack.c.l.b16 %v2683
        %v3212 = vunpack.c.l.b16 %v2684
        %v3213 = vpack.c.b16 %v3182, %v3181
        %v3214 = vpack.c.b16 %v3184, %v3183
        %v3215 = vpack.c.b16 %v3186, %v3185
        %v3216 = vpack.c.b16 %v3188, %v3187
        %v3217 = vpack.c.b16 %v3190, %v3189
        %v3218 = vpack.c.b16 %v3192, %v3191
        %v3219 = vpack.c.b16 %v3194, %v3193
        %v3220 = vpack.c.b16 %v3196, %v3195
        %v3221 = vpack.c.b16 %v3198, %v3197
        %v3222 = vpack.c.b16 %v3200, %v3199
        %v3223 = vpack.c.b16 %v3202, %v3201
        %v3224 = vpack.c.b16 %v3204, %v3203
        %v3225 = vpack.c.b16 %v3206, %v3205
        %v3226 = vpack.c.b16 %v3208, %v3207
        %v3227 = vpack.c.b16 %v3210, %v3209
        %v3228 = vpack.c.b16 %v3212, %v3211
        %v3261 = vunpack.c.l.b16 %v2719
        %v3262 = vunpack.c.l.b16 %v2720
        %v3263 = vunpack.c.l.b16 %v2721
        %v3264 = vunpack.c.l.b16 %v2722
        %v3265 = vunpack.c.l.b16 %v2723
        %v3266 = vunpack.c.l.b16 %v2724
        %v3267 = vunpack.c.l.b16 %v2725
        %v3268 = vunpack.c.l.b16 %v2726
        %v3269 = vunpack.c.l.b16 %v2727
        %v3270 = vunpack.c.l.b16 %v2728
        %v3271 = vunpack.c.l.b16 %v2729
        %v3272 = vunpack.c.l.b16 %v2730
        %v3273 = vunpack.c.l.b16 %v2731
        %v3274 = vunpack.c.l.b16 %v2732
        %v3275 = vunpack.c.l.b16 %v2733
        %v3276 = vunpack.c.l.b16 %v2734
        %v3277 = vunpack.c.l.b16 %v2735
        %v3278 = vunpack.c.l.b16 %v2736
        %v3279 = vunpack.c.l.b16 %v2737
        %v3280 = vunpack.c.l.b16 %v2738
        %v3281 = vunpack.c.l.b16 %v2739
        %v3282 = vunpack.c.l.b16 %v2740
        %v3283 = vunpack.c.l.b16 %v2741
        %v3284 = vunpack.c.l.b16 %v2742
        %v3285 = vunpack.c.l.b16 %v2743
        %v3286 = vunpack.c.l.b16 %v2744
        %v3287 = vunpack.c.l.b16 %v2745
        %v3288 = vunpack.c.l.b16 %v2746
        %v3289 = vunpack.c.l.b16 %v2747
        %v3290 = vunpack.c.l.b16 %v2748
        %v3291 = vunpack.c.l.b16 %v2749
        %v3292 = vunpack.c.l.b16 %v2750
        %v3293 = vpack.c.b16 %v3262, %v3261
        %v3294 = vpack.c.b16 %v3264, %v3263
        %v3295 = vpack.c.b16 %v3266, %v3265
        %v3296 = vpack.c.b16 %v3268, %v3267
        %v3297 = vpack.c.b16 %v3270, %v3269
        %v3298 = vpack.c.b16 %v3272, %v3271
        %v3299 = vpack.c.b16 %v3274, %v3273
        %v3300 = vpack.c.b16 %v3276, %v3275
        %v3301 = vpack.c.b16 %v3278, %v3277
        %v3302 = vpack.c.b16 %v3280, %v3279
        %v3303 = vpack.c.b16 %v3282, %v3281
        %v3304 = vpack.c.b16 %v3284, %v3283
        %v3305 = vpack.c.b16 %v3286, %v3285
        %v3306 = vpack.c.b16 %v3288, %v3287
        %v3307 = vpack.c.b16 %v3290, %v3289
        %v3308 = vpack.c.b16 %v3292, %v3291
        %3309 = vrot.lane.b32.xlu0 %v3293, 64
        %v3310 = vpop.permute.xlu0 %3309
        %3311 = vrot.lane.b32.xlu0 %v3294, 64
        %v3312 = vpop.permute.xlu0 %3311
        %3313 = vrot.lane.b32.xlu0 %v3295, 64
        %v3314 = vpop.permute.xlu0 %3313
        %3315 = vrot.lane.b32.xlu0 %v3296, 64
        %v3316 = vpop.permute.xlu0 %3315
        %3317 = vrot.lane.b32.xlu0 %v3297, 64
        %v3318 = vpop.permute.xlu0 %3317
        %3319 = vrot.lane.b32.xlu0 %v3298, 64
        %v3320 = vpop.permute.xlu0 %3319
        %3321 = vrot.lane.b32.xlu0 %v3299, 64
        %v3322 = vpop.permute.xlu0 %3321
        %3323 = vrot.lane.b32.xlu0 %v3300, 64
        %v3324 = vpop.permute.xlu0 %3323
        %3325 = vrot.lane.b32.xlu0 %v3301, 64
        %v3326 = vpop.permute.xlu0 %3325
        %3327 = vrot.lane.b32.xlu0 %v3302, 64
        %v3328 = vpop.permute.xlu0 %3327
        %3329 = vrot.lane.b32.xlu0 %v3303, 64
        %v3330 = vpop.permute.xlu0 %3329
        %3331 = vrot.lane.b32.xlu0 %v3304, 64
        %v3332 = vpop.permute.xlu0 %3331
        %3333 = vrot.lane.b32.xlu0 %v3305, 64
        %v3334 = vpop.permute.xlu0 %3333
        %3335 = vrot.lane.b32.xlu0 %v3306, 64
        %v3336 = vpop.permute.xlu0 %3335
        %3337 = vrot.lane.b32.xlu0 %v3307, 64
        %v3338 = vpop.permute.xlu0 %3337
        %3339 = vrot.lane.b32.xlu0 %v3308, 64
        %v3340 = vpop.permute.xlu0 %3339
        %v3343 = vunpack.c.l.b16 %v2753
        %v3344 = vunpack.c.l.b16 %v2754
        %v3345 = vpack.c.b16 %v3344, %v3343
        %v3378 = vunpack.c.l.b16 %v2789
        %v3379 = vunpack.c.l.b16 %v2790
        %v3380 = vunpack.c.l.b16 %v2791
        %v3381 = vunpack.c.l.b16 %v2792
        %v3382 = vunpack.c.l.b16 %v2793
        %v3383 = vunpack.c.l.b16 %v2794
        %v3384 = vunpack.c.l.b16 %v2795
        %v3385 = vunpack.c.l.b16 %v2796
        %v3386 = vunpack.c.l.b16 %v2797
        %v3387 = vunpack.c.l.b16 %v2798
        %v3388 = vunpack.c.l.b16 %v2799
        %v3389 = vunpack.c.l.b16 %v2800
        %v3390 = vunpack.c.l.b16 %v2801
        %v3391 = vunpack.c.l.b16 %v2802
        %v3392 = vunpack.c.l.b16 %v2803
        %v3393 = vunpack.c.l.b16 %v2804
        %v3394 = vunpack.c.l.b16 %v2805
        %v3395 = vunpack.c.l.b16 %v2806
        %v3396 = vunpack.c.l.b16 %v2807
        %v3397 = vunpack.c.l.b16 %v2808
        %v3398 = vunpack.c.l.b16 %v2809
        %v3399 = vunpack.c.l.b16 %v2810
        %v3400 = vunpack.c.l.b16 %v2811
        %v3401 = vunpack.c.l.b16 %v2812
        %v3402 = vunpack.c.l.b16 %v2813
        %v3403 = vunpack.c.l.b16 %v2814
        %v3404 = vunpack.c.l.b16 %v2815
        %v3405 = vunpack.c.l.b16 %v2816
        %v3406 = vunpack.c.l.b16 %v2817
        %v3407 = vunpack.c.l.b16 %v2818
        %v3408 = vunpack.c.l.b16 %v2819
        %v3409 = vunpack.c.l.b16 %v2820
        %v3410 = vpack.c.b16 %v3379, %v3378
        %v3411 = vpack.c.b16 %v3381, %v3380
        %v3412 = vpack.c.b16 %v3383, %v3382
        %v3413 = vpack.c.b16 %v3385, %v3384
        %v3414 = vpack.c.b16 %v3387, %v3386
        %v3415 = vpack.c.b16 %v3389, %v3388
        %v3416 = vpack.c.b16 %v3391, %v3390
        %v3417 = vpack.c.b16 %v3393, %v3392
        %v3418 = vpack.c.b16 %v3395, %v3394
        %v3419 = vpack.c.b16 %v3397, %v3396
        %v3420 = vpack.c.b16 %v3399, %v3398
        %v3421 = vpack.c.b16 %v3401, %v3400
        %v3422 = vpack.c.b16 %v3403, %v3402
        %v3423 = vpack.c.b16 %v3405, %v3404
        %v3424 = vpack.c.b16 %v3407, %v3406
        %v3425 = vpack.c.b16 %v3409, %v3408
        %3426 = vrot.lane.b32.xlu0 %v3410, 64
        %v3427 = vpop.permute.xlu0 %3426
        %3428 = vrot.lane.b32.xlu0 %v3411, 64
        %v3429 = vpop.permute.xlu0 %3428
        %3430 = vrot.lane.b32.xlu0 %v3412, 64
        %v3431 = vpop.permute.xlu0 %3430
        %3432 = vrot.lane.b32.xlu0 %v3413, 64
        %v3433 = vpop.permute.xlu0 %3432
        %3434 = vrot.lane.b32.xlu0 %v3414, 64
        %v3435 = vpop.permute.xlu0 %3434
        %3436 = vrot.lane.b32.xlu0 %v3415, 64
        %v3437 = vpop.permute.xlu0 %3436
        %3438 = vrot.lane.b32.xlu0 %v3416, 64
        %v3439 = vpop.permute.xlu0 %3438
        %3440 = vrot.lane.b32.xlu0 %v3417, 64
        %v3441 = vpop.permute.xlu0 %3440
        %3442 = vrot.lane.b32.xlu0 %v3418, 64
        %v3443 = vpop.permute.xlu0 %3442
        %3444 = vrot.lane.b32.xlu0 %v3419, 64
        %v3445 = vpop.permute.xlu0 %3444
        %3446 = vrot.lane.b32.xlu0 %v3420, 64
        %v3447 = vpop.permute.xlu0 %3446
        %3448 = vrot.lane.b32.xlu0 %v3421, 64
        %v3449 = vpop.permute.xlu0 %3448
        %3450 = vrot.lane.b32.xlu0 %v3422, 64
        %v3451 = vpop.permute.xlu0 %3450
        %3452 = vrot.lane.b32.xlu0 %v3423, 64
        %v3453 = vpop.permute.xlu0 %3452
        %3454 = vrot.lane.b32.xlu0 %v3424, 64
        %v3455 = vpop.permute.xlu0 %3454
        %3456 = vrot.lane.b32.xlu0 %v3425, 64
        %v3457 = vpop.permute.xlu0 %3456
        %v3490 = vunpack.c.l.b16 %v2855
        %v3491 = vunpack.c.l.b16 %v2856
        %v3492 = vunpack.c.l.b16 %v2857
        %v3493 = vunpack.c.l.b16 %v2858
        %v3494 = vunpack.c.l.b16 %v2859
        %v3495 = vunpack.c.l.b16 %v2860
        %v3496 = vunpack.c.l.b16 %v2861
        %v3497 = vunpack.c.l.b16 %v2862
        %v3498 = vunpack.c.l.b16 %v2863
        %v3499 = vunpack.c.l.b16 %v2864
        %v3500 = vunpack.c.l.b16 %v2865
        %v3501 = vunpack.c.l.b16 %v2866
        %v3502 = vunpack.c.l.b16 %v2867
        %v3503 = vunpack.c.l.b16 %v2868
        %v3504 = vunpack.c.l.b16 %v2869
        %v3505 = vunpack.c.l.b16 %v2870
        %v3506 = vunpack.c.l.b16 %v2871
        %v3507 = vunpack.c.l.b16 %v2872
        %v3508 = vunpack.c.l.b16 %v2873
        %v3509 = vunpack.c.l.b16 %v2874
        %v3510 = vunpack.c.l.b16 %v2875
        %v3511 = vunpack.c.l.b16 %v2876
        %v3512 = vunpack.c.l.b16 %v2877
        %v3513 = vunpack.c.l.b16 %v2878
        %v3514 = vunpack.c.l.b16 %v2879
        %v3515 = vunpack.c.l.b16 %v2880
        %v3516 = vunpack.c.l.b16 %v2881
        %v3517 = vunpack.c.l.b16 %v2882
        %v3518 = vunpack.c.l.b16 %v2883
        %v3519 = vunpack.c.l.b16 %v2884
        %v3520 = vunpack.c.l.b16 %v2885
        %v3521 = vunpack.c.l.b16 %v2886
        %v3522 = vpack.c.b16 %v3491, %v3490
        %v3523 = vpack.c.b16 %v3493, %v3492
        %v3524 = vpack.c.b16 %v3495, %v3494
        %v3525 = vpack.c.b16 %v3497, %v3496
        %v3526 = vpack.c.b16 %v3499, %v3498
        %v3527 = vpack.c.b16 %v3501, %v3500
        %v3528 = vpack.c.b16 %v3503, %v3502
        %v3529 = vpack.c.b16 %v3505, %v3504
        %v3530 = vpack.c.b16 %v3507, %v3506
        %v3531 = vpack.c.b16 %v3509, %v3508
        %v3532 = vpack.c.b16 %v3511, %v3510
        %v3533 = vpack.c.b16 %v3513, %v3512
        %v3534 = vpack.c.b16 %v3515, %v3514
        %v3535 = vpack.c.b16 %v3517, %v3516
        %v3536 = vpack.c.b16 %v3519, %v3518
        %v3537 = vpack.c.b16 %v3521, %v3520
        %v3540 = vunpack.c.l.b16 %v2889
        %v3541 = vunpack.c.l.b16 %v2890
        %v3542 = vpack.c.b16 %v3541, %v3540
        %3543 = vrot.lane.b32.xlu0 %v3345, 64
        %v3544 = vpop.permute.xlu0 %3543
        %3545 = vrot.lane.b32.xlu0 %v3542, 64
        %v3546 = vpop.permute.xlu0 %3545
        %v3579 = vunpack.c.l.b16 %v2925
        %v3580 = vunpack.c.l.b16 %v2926
        %v3581 = vunpack.c.l.b16 %v2927
        %v3582 = vunpack.c.l.b16 %v2928
        %v3583 = vunpack.c.l.b16 %v2929
        %v3584 = vunpack.c.l.b16 %v2930
        %v3585 = vunpack.c.l.b16 %v2931
        %v3586 = vunpack.c.l.b16 %v2932
        %v3587 = vunpack.c.l.b16 %v2933
        %v3588 = vunpack.c.l.b16 %v2934
        %v3589 = vunpack.c.l.b16 %v2935
        %v3590 = vunpack.c.l.b16 %v2936
        %v3591 = vunpack.c.l.b16 %v2937
        %v3592 = vunpack.c.l.b16 %v2938
        %v3593 = vunpack.c.l.b16 %v2939
        %v3594 = vunpack.c.l.b16 %v2940
        %v3595 = vunpack.c.l.b16 %v2941
        %v3596 = vunpack.c.l.b16 %v2942
        %v3597 = vunpack.c.l.b16 %v2943
        %v3598 = vunpack.c.l.b16 %v2944
        %v3599 = vunpack.c.l.b16 %v2945
        %v3600 = vunpack.c.l.b16 %v2946
        %v3601 = vunpack.c.l.b16 %v2947
        %v3602 = vunpack.c.l.b16 %v2948
        %v3603 = vunpack.c.l.b16 %v2949
        %v3604 = vunpack.c.l.b16 %v2950
        %v3605 = vunpack.c.l.b16 %v2951
        %v3606 = vunpack.c.l.b16 %v2952
        %v3607 = vunpack.c.l.b16 %v2953
        %v3608 = vunpack.c.l.b16 %v2954
        %v3609 = vunpack.c.l.b16 %v2955
        %v3610 = vunpack.c.l.b16 %v2956
        %v3611 = vpack.c.b16 %v3580, %v3579
        %v3612 = vpack.c.b16 %v3582, %v3581
        %v3613 = vpack.c.b16 %v3584, %v3583
        %v3614 = vpack.c.b16 %v3586, %v3585
        %v3615 = vpack.c.b16 %v3588, %v3587
        %v3616 = vpack.c.b16 %v3590, %v3589
        %v3617 = vpack.c.b16 %v3592, %v3591
        %v3618 = vpack.c.b16 %v3594, %v3593
        %v3619 = vpack.c.b16 %v3596, %v3595
        %v3620 = vpack.c.b16 %v3598, %v3597
        %v3621 = vpack.c.b16 %v3600, %v3599
        %v3622 = vpack.c.b16 %v3602, %v3601
        %v3623 = vpack.c.b16 %v3604, %v3603
        %v3624 = vpack.c.b16 %v3606, %v3605
        %v3625 = vpack.c.b16 %v3608, %v3607
        %v3626 = vpack.c.b16 %v3610, %v3609
        %v3629 = vsel %vm1232, %v3021, %v3118
        %v3633 = vsel %vm1232, %v3022, %v3120
        %v3637 = vsel %vm1232, %v3023, %v3122
        %v3641 = vsel %vm1232, %v3024, %v3124
        %v3645 = vsel %vm1232, %v3025, %v3126
        %v3649 = vsel %vm1232, %v3026, %v3128
        %v3653 = vsel %vm1232, %v3027, %v3130
        %v3657 = vsel %vm1232, %v3028, %v3132
        %v3661 = vsel %vm1232, %v3029, %v3134
        %v3665 = vsel %vm1232, %v3030, %v3136
        %v3669 = vsel %vm1232, %v3031, %v3138
        %v3673 = vsel %vm1232, %v3032, %v3140
        %v3677 = vsel %vm1232, %v3033, %v3142
        %v3681 = vsel %vm1232, %v3034, %v3144
        %v3685 = vsel %vm1232, %v3035, %v3146
        %v3689 = vsel %vm1232, %v3036, %v3148
        %v3693 = vsel %vm1232, %v3213, %v3310
        %v3697 = vsel %vm1232, %v3214, %v3312
        %v3701 = vsel %vm1232, %v3215, %v3314
        %v3705 = vsel %vm1232, %v3216, %v3316
        %v3709 = vsel %vm1232, %v3217, %v3318
        %v3713 = vsel %vm1232, %v3218, %v3320
        %v3717 = vsel %vm1232, %v3219, %v3322
        %v3721 = vsel %vm1232, %v3220, %v3324
        %v3725 = vsel %vm1232, %v3221, %v3326
        %v3729 = vsel %vm1232, %v3222, %v3328
        %v3733 = vsel %vm1232, %v3223, %v3330
        %v3737 = vsel %vm1232, %v3224, %v3332
        %v3741 = vsel %vm1232, %v3225, %v3334
        %v3745 = vsel %vm1232, %v3226, %v3336
        %v3749 = vsel %vm1232, %v3227, %v3338
        %v3753 = vsel %vm1232, %v3228, %v3340
        %v3757 = vsel %vm1232, %v3102, %v3427
        %v3761 = vsel %vm1232, %v3103, %v3429
        %v3765 = vsel %vm1232, %v3104, %v3431
        %v3769 = vsel %vm1232, %v3105, %v3433
        %v3773 = vsel %vm1232, %v3106, %v3435
        %v3777 = vsel %vm1232, %v3107, %v3437
        %v3781 = vsel %vm1232, %v3108, %v3439
        %v3785 = vsel %vm1232, %v3109, %v3441
        %v3789 = vsel %vm1232, %v3110, %v3443
        %v3793 = vsel %vm1232, %v3111, %v3445
        %v3797 = vsel %vm1232, %v3112, %v3447
        %v3801 = vsel %vm1232, %v3113, %v3449
        %v3805 = vsel %vm1232, %v3114, %v3451
        %v3809 = vsel %vm1232, %v3115, %v3453
        %v3813 = vsel %vm1232, %v3116, %v3455
        %v3817 = vsel %vm1232, %v3345, %v3457
        %v3820 = vsel %vm1232, %v3522, %v3122
        %v3823 = vsel %vm1232, %v3523, %v3124
        %v3826 = vsel %vm1232, %v3524, %v3126
        %v3829 = vsel %vm1232, %v3525, %v3128
        %v3832 = vsel %vm1232, %v3526, %v3130
        %v3835 = vsel %vm1232, %v3527, %v3132
        %v3838 = vsel %vm1232, %v3528, %v3134
        %v3841 = vsel %vm1232, %v3529, %v3136
        %v3844 = vsel %vm1232, %v3530, %v3138
        %v3847 = vsel %vm1232, %v3531, %v3140
        %v3850 = vsel %vm1232, %v3532, %v3142
        %v3853 = vsel %vm1232, %v3533, %v3144
        %v3856 = vsel %vm1232, %v3534, %v3146
        %v3859 = vsel %vm1232, %v3535, %v3148
        %v3863 = vsel %vm1232, %v3536, %v3544
        %v3867 = vsel %vm1232, %v3537, %v3546
        %v3869 = vld [vmem:[%s9] sm:$0xf]
        %v3870 = vld [vmem:[%s9 + $0x4] sm:$0xf]
        %v3871 = vld [vmem:[%s9 + $0x8] sm:$0xf]
        %v3872 = vld [vmem:[%s9 + $0xc] sm:$0xf]
        %v3873 = vld [vmem:[%s9 + $0x10] sm:$0xf]
        %v3874 = vld [vmem:[%s9 + $0x14] sm:$0xf]
        %v3875 = vld [vmem:[%s9 + $0x18] sm:$0xf]
        %v3876 = vld [vmem:[%s9 + $0x1c] sm:$0xf]
        %v3877 = vld [vmem:[%s9 + $0x20] sm:$0xf]
        %v3878 = vld [vmem:[%s9 + $0x24] sm:$0xf]
        %v3879 = vld [vmem:[%s9 + $0x28] sm:$0xf]
        %v3880 = vld [vmem:[%s9 + $0x2c] sm:$0xf]
        %v3881 = vld [vmem:[%s9 + $0x30] sm:$0xf]
        %v3882 = vld [vmem:[%s9 + $0x34] sm:$0xf]
        %v3883 = vld [vmem:[%s9 + $0x38] sm:$0xf]
        %v3884 = vld [vmem:[%s9 + $0x3c] sm:$0xf]
        %v3885 = vld [vmem:[%s9 + $0x40] sm:$0xf]
        %v3886 = vld [vmem:[%s9 + $0x44] sm:$0xf]
        %v3887 = vld [vmem:[%s9 + $0x48] sm:$0xf]
        %v3888 = vld [vmem:[%s9 + $0x4c] sm:$0xf]
        %v3889 = vld [vmem:[%s9 + $0x50] sm:$0xf]
        %v3890 = vld [vmem:[%s9 + $0x54] sm:$0xf]
        %v3891 = vld [vmem:[%s9 + $0x58] sm:$0xf]
        %v3892 = vld [vmem:[%s9 + $0x5c] sm:$0xf]
        %v3893 = vld [vmem:[%s9 + $0x60] sm:$0xf]
        %v3894 = vld [vmem:[%s9 + $0x64] sm:$0xf]
        %v3895 = vld [vmem:[%s9 + $0x68] sm:$0xf]
        %v3896 = vld [vmem:[%s9 + $0x6c] sm:$0xf]
        %v3897 = vld [vmem:[%s9 + $0x70] sm:$0xf]
        %v3898 = vld [vmem:[%s9 + $0x74] sm:$0xf]
        %v3899 = vld [vmem:[%s9 + $0x78] sm:$0xf]
        %v3900 = vld [vmem:[%s9 + $0x7c] sm:$0xf]
        %v3901 = vld [vmem:[%s9 + $0x80] sm:$0xf]
        %v3902 = vld [vmem:[%s9 + $0x84] sm:$0xf]
        %v3903 = vld [vmem:[%s9 + $0x88] sm:$0xf]
        %v3904 = vld [vmem:[%s9 + $0x8c] sm:$0xf]
        %v3905 = vld [vmem:[%s9 + $0x90] sm:$0xf]
        %v3906 = vld [vmem:[%s9 + $0x94] sm:$0xf]
        %v3907 = vld [vmem:[%s9 + $0x98] sm:$0xf]
        %v3908 = vld [vmem:[%s9 + $0x9c] sm:$0xf]
        %v3909 = vld [vmem:[%s9 + $0xa0] sm:$0xf]
        %v3910 = vld [vmem:[%s9 + $0xa4] sm:$0xf]
        %v3911 = vld [vmem:[%s9 + $0xa8] sm:$0xf]
        %v3912 = vld [vmem:[%s9 + $0xac] sm:$0xf]
        %v3913 = vld [vmem:[%s9 + $0xb0] sm:$0xf]
        %v3914 = vld [vmem:[%s9 + $0xb4] sm:$0xf]
        %v3915 = vld [vmem:[%s9 + $0xb8] sm:$0xf]
        %v3916 = vld [vmem:[%s9 + $0xbc] sm:$0xf]
        %v3917 = vld [vmem:[%s9 + $0xc0] sm:$0xf]
        %v3918 = vld [vmem:[%s9 + $0xc4] sm:$0xf]
        %v3919 = vld [vmem:[%s9 + $0xc8] sm:$0xf]
        %v3920 = vld [vmem:[%s9 + $0xcc] sm:$0xf]
        %v3921 = vld [vmem:[%s9 + $0xd0] sm:$0xf]
        %v3922 = vld [vmem:[%s9 + $0xd4] sm:$0xf]
        %v3923 = vld [vmem:[%s9 + $0xd8] sm:$0xf]
        %v3924 = vld [vmem:[%s9 + $0xdc] sm:$0xf]
        %v3925 = vld [vmem:[%s9 + $0xe0] sm:$0xf]
        %v3926 = vld [vmem:[%s9 + $0xe4] sm:$0xf]
        %v3927 = vld [vmem:[%s9 + $0xe8] sm:$0xf]
        %v3928 = vld [vmem:[%s9 + $0xec] sm:$0xf]
        %v3929 = vld [vmem:[%s9 + $0xf0] sm:$0xf]
        %v3930 = vld [vmem:[%s9 + $0xf4] sm:$0xf]
        %v3931 = vld [vmem:[%s9 + $0xf8] sm:$0xf]
        %v3932 = vld [vmem:[%s9 + $0xfc] sm:$0xf]
        %v3933 = vld [vmem:[%s9 + $0x100] sm:$0xf]
        %v3934 = vld [vmem:[%s9 + $0x104] sm:$0xf]
        %v3935 = vld [vmem:[%s9 + $0x108] sm:$0xf]
        %v3936 = vld [vmem:[%s9 + $0x10c] sm:$0xf]
        %v3937 = vld [vmem:[%s9 + $0x110] sm:$0xf]
        %v3938 = vld [vmem:[%s9 + $0x114] sm:$0xf]
        %v3939 = vld [vmem:[%s9 + $0x118] sm:$0xf]
        %v3940 = vld [vmem:[%s9 + $0x11c] sm:$0xf]
        %v4013 = vunpack.c.l.b16 %v3869
        %v4014 = vunpack.c.l.b16 %v3870
        %v4015 = vunpack.c.l.b16 %v3871
        %v4016 = vunpack.c.l.b16 %v3872
        %v4017 = vunpack.c.l.b16 %v3873
        %v4018 = vunpack.c.l.b16 %v3874
        %v4019 = vunpack.c.l.b16 %v3875
        %v4020 = vunpack.c.l.b16 %v3876
        %v4021 = vunpack.c.l.b16 %v3877
        %v4022 = vunpack.c.l.b16 %v3878
        %v4023 = vunpack.c.l.b16 %v3879
        %v4024 = vunpack.c.l.b16 %v3880
        %v4025 = vunpack.c.l.b16 %v3881
        %v4026 = vunpack.c.l.b16 %v3882
        %v4027 = vunpack.c.l.b16 %v3883
        %v4028 = vunpack.c.l.b16 %v3884
        %v4029 = vunpack.c.l.b16 %v3885
        %v4030 = vunpack.c.l.b16 %v3886
        %v4031 = vunpack.c.l.b16 %v3887
        %v4032 = vunpack.c.l.b16 %v3888
        %v4033 = vunpack.c.l.b16 %v3889
        %v4034 = vunpack.c.l.b16 %v3890
        %v4035 = vunpack.c.l.b16 %v3891
        %v4036 = vunpack.c.l.b16 %v3892
        %v4037 = vunpack.c.l.b16 %v3893
        %v4038 = vunpack.c.l.b16 %v3894
        %v4039 = vunpack.c.l.b16 %v3895
        %v4040 = vunpack.c.l.b16 %v3896
        %v4041 = vunpack.c.l.b16 %v3897
        %v4042 = vunpack.c.l.b16 %v3898
        %v4043 = vunpack.c.l.b16 %v3899
        %v4044 = vunpack.c.l.b16 %v3900
        %v4045 = vunpack.c.l.b16 %v3901
        %v4046 = vunpack.c.l.b16 %v3902
        %v4047 = vunpack.c.l.b16 %v3903
        %v4048 = vunpack.c.l.b16 %v3904
        %v4049 = vunpack.c.l.b16 %v3905
        %v4050 = vunpack.c.l.b16 %v3906
        %v4051 = vunpack.c.l.b16 %v3907
        %v4052 = vunpack.c.l.b16 %v3908
        %v4053 = vunpack.c.l.b16 %v3909
        %v4054 = vunpack.c.l.b16 %v3910
        %v4055 = vunpack.c.l.b16 %v3911
        %v4056 = vunpack.c.l.b16 %v3912
        %v4057 = vunpack.c.l.b16 %v3913
        %v4058 = vunpack.c.l.b16 %v3914
        %v4059 = vunpack.c.l.b16 %v3915
        %v4060 = vunpack.c.l.b16 %v3916
        %v4061 = vunpack.c.l.b16 %v3917
        %v4062 = vunpack.c.l.b16 %v3918
        %v4063 = vunpack.c.l.b16 %v3919
        %v4064 = vunpack.c.l.b16 %v3920
        %v4065 = vunpack.c.l.b16 %v3921
        %v4066 = vunpack.c.l.b16 %v3922
        %v4067 = vunpack.c.l.b16 %v3923
        %v4068 = vunpack.c.l.b16 %v3924
        %v4069 = vunpack.c.l.b16 %v3925
        %v4070 = vunpack.c.l.b16 %v3926
        %v4071 = vunpack.c.l.b16 %v3927
        %v4072 = vunpack.c.l.b16 %v3928
        %v4073 = vunpack.c.l.b16 %v3929
        %v4074 = vunpack.c.l.b16 %v3930
        %v4075 = vunpack.c.l.b16 %v3931
        %v4076 = vunpack.c.l.b16 %v3932
        %v4077 = vunpack.c.l.b16 %v3933
        %v4078 = vunpack.c.l.b16 %v3934
        %v4079 = vunpack.c.l.b16 %v3935
        %v4080 = vunpack.c.l.b16 %v3936
        %v4081 = vunpack.c.l.b16 %v3937
        %v4082 = vunpack.c.l.b16 %v3938
        %v4083 = vunpack.c.l.b16 %v3939
        %v4084 = vunpack.c.l.b16 %v3940
        %v4085 = vpack.c.b16 %v4014, %v4013
        %v4086 = vpack.c.b16 %v4016, %v4015
        %v4087 = vpack.c.b16 %v4018, %v4017
        %v4088 = vpack.c.b16 %v4020, %v4019
        %v4089 = vpack.c.b16 %v4022, %v4021
        %v4090 = vpack.c.b16 %v4024, %v4023
        %v4091 = vpack.c.b16 %v4026, %v4025
        %v4092 = vpack.c.b16 %v4028, %v4027
        %v4093 = vpack.c.b16 %v4030, %v4029
        %v4094 = vpack.c.b16 %v4032, %v4031
        %v4095 = vpack.c.b16 %v4034, %v4033
        %v4096 = vpack.c.b16 %v4036, %v4035
        %v4097 = vpack.c.b16 %v4038, %v4037
        %v4098 = vpack.c.b16 %v4040, %v4039
        %v4099 = vpack.c.b16 %v4042, %v4041
        %v4100 = vpack.c.b16 %v4044, %v4043
        %v4101 = vpack.c.b16 %v4046, %v4045
        %v4102 = vpack.c.b16 %v4048, %v4047
        %v4103 = vpack.c.b16 %v4050, %v4049
        %v4104 = vpack.c.b16 %v4052, %v4051
        %v4105 = vpack.c.b16 %v4054, %v4053
        %v4106 = vpack.c.b16 %v4056, %v4055
        %v4107 = vpack.c.b16 %v4058, %v4057
        %v4108 = vpack.c.b16 %v4060, %v4059
        %v4109 = vpack.c.b16 %v4062, %v4061
        %v4110 = vpack.c.b16 %v4064, %v4063
        %v4111 = vpack.c.b16 %v4066, %v4065
        %v4112 = vpack.c.b16 %v4068, %v4067
        %v4113 = vpack.c.b16 %v4070, %v4069
        %v4114 = vpack.c.b16 %v4072, %v4071
        %v4115 = vpack.c.b16 %v4074, %v4073
        %v4116 = vpack.c.b16 %v4076, %v4075
        %v4117 = vpack.c.b16 %v4078, %v4077
        %v4118 = vpack.c.b16 %v4080, %v4079
        %v4119 = vpack.c.b16 %v4082, %v4081
        %v4120 = vpack.c.b16 %v4084, %v4083
        %v4158 = vsel %vm1232, %v3611, 0
        %v4161 = vsel %vm1232, %v3612, 0
        %v4164 = vsel %vm1232, %v3613, 0
        %v4167 = vsel %vm1232, %v3614, 0
        %v4170 = vsel %vm1232, %v3615, 0
        %v4173 = vsel %vm1232, %v3616, 0
        %v4176 = vsel %vm1232, %v3617, 0
        %v4179 = vsel %vm1232, %v3618, 0
        %v4182 = vsel %vm1232, %v3619, 0
        %v4185 = vsel %vm1232, %v3620, 0
        %v4188 = vsel %vm1232, %v3621, 0
        %v4191 = vsel %vm1232, %v3622, 0
        %v4194 = vsel %vm1232, %v3623, 0
        %v4197 = vsel %vm1232, %v3624, 0
        %v4200 = vsel %vm1232, %v3625, 0
        %v4203 = vsel %vm1232, %v3626, 0
        %4205 = vmatpush.bf16.msra.mxu0 %v4092
        %4206 = vmatpush.bf16.msra.mxu0 %v4091
        %4207 = vmatpush.bf16.msra.mxu0 %v4090
        %4208 = vmatpush.bf16.msra.mxu0 %v4089
        %4209 = vmatpush.bf16.msra.mxu0 %v4088
        %4210 = vmatpush.bf16.msra.mxu0 %v4087
        %4211 = vmatpush.bf16.msra.mxu0 %v4086
        %4212 = vmatpush.bf16.msra.mxu0 %v4085
        %4213 = vmatmul.bf16.gmra.mxu0 %v3629
        %v4214 = vpop.f32.mrf.mxu0
        %v4215 = vadd.f32 0.0, %v4214
        %v4216 = vpop.f32.mrf.mxu0
        %v4217 = vadd.f32 0.0, %v4216
        %4218 = vmatmul.bf16.gmra.mxu0 %v3633
        %v4219 = vpop.f32.mrf.mxu0
        %v4220 = vadd.f32 0.0, %v4219
        %v4221 = vpop.f32.mrf.mxu0
        %v4222 = vadd.f32 0.0, %v4221
        %4223 = vmatmul.bf16.gmra.mxu0 %v3637
        %v4224 = vpop.f32.mrf.mxu0
        %v4225 = vadd.f32 0.0, %v4224
        %v4226 = vpop.f32.mrf.mxu0
        %v4227 = vadd.f32 0.0, %v4226
        %4228 = vmatmul.bf16.gmra.mxu0 %v3641
        %v4229 = vpop.f32.mrf.mxu0
        %v4230 = vadd.f32 0.0, %v4229
        %v4231 = vpop.f32.mrf.mxu0
        %v4232 = vadd.f32 0.0, %v4231
        %4233 = vmatmul.bf16.gmra.mxu0 %v3645
        %v4234 = vpop.f32.mrf.mxu0
        %v4235 = vadd.f32 0.0, %v4234
        %v4236 = vpop.f32.mrf.mxu0
        %v4237 = vadd.f32 0.0, %v4236
        %4238 = vmatmul.bf16.gmra.mxu0 %v3649
        %v4239 = vpop.f32.mrf.mxu0
        %v4240 = vadd.f32 0.0, %v4239
        %v4241 = vpop.f32.mrf.mxu0
        %v4242 = vadd.f32 0.0, %v4241
        %4243 = vmatmul.bf16.gmra.mxu0 %v3653
        %v4244 = vpop.f32.mrf.mxu0
        %v4245 = vadd.f32 0.0, %v4244
        %v4246 = vpop.f32.mrf.mxu0
        %v4247 = vadd.f32 0.0, %v4246
        %4248 = vmatmul.bf16.gmra.mxu0 %v3657
        %v4249 = vpop.f32.mrf.mxu0
        %v4250 = vadd.f32 0.0, %v4249
        %v4251 = vpop.f32.mrf.mxu0
        %v4252 = vadd.f32 0.0, %v4251
        %4253 = vmatmul.bf16.gmra.mxu0 %v3661
        %v4254 = vpop.f32.mrf.mxu0
        %v4255 = vadd.f32 0.0, %v4254
        %v4256 = vpop.f32.mrf.mxu0
        %v4257 = vadd.f32 0.0, %v4256
        %4258 = vmatmul.bf16.gmra.mxu0 %v3665
        %v4259 = vpop.f32.mrf.mxu0
        %v4260 = vadd.f32 0.0, %v4259
        %v4261 = vpop.f32.mrf.mxu0
        %v4262 = vadd.f32 0.0, %v4261
        %4263 = vmatmul.bf16.gmra.mxu0 %v3669
        %v4264 = vpop.f32.mrf.mxu0
        %v4265 = vadd.f32 0.0, %v4264
        %v4266 = vpop.f32.mrf.mxu0
        %v4267 = vadd.f32 0.0, %v4266
        %4268 = vmatmul.bf16.gmra.mxu0 %v3673
        %v4269 = vpop.f32.mrf.mxu0
        %v4270 = vadd.f32 0.0, %v4269
        %v4271 = vpop.f32.mrf.mxu0
        %v4272 = vadd.f32 0.0, %v4271
        %4273 = vmatmul.bf16.gmra.mxu0 %v3677
        %v4274 = vpop.f32.mrf.mxu0
        %v4275 = vadd.f32 0.0, %v4274
        %v4276 = vpop.f32.mrf.mxu0
        %v4277 = vadd.f32 0.0, %v4276
        %4278 = vmatmul.bf16.gmra.mxu0 %v3681
        %v4279 = vpop.f32.mrf.mxu0
        %v4280 = vadd.f32 0.0, %v4279
        %v4281 = vpop.f32.mrf.mxu0
        %v4282 = vadd.f32 0.0, %v4281
        %4283 = vmatmul.bf16.gmra.mxu0 %v3685
        %v4284 = vpop.f32.mrf.mxu0
        %v4285 = vadd.f32 0.0, %v4284
        %v4286 = vpop.f32.mrf.mxu0
        %v4287 = vadd.f32 0.0, %v4286
        %4288 = vmatmul.bf16.gmra.mxu0 %v3689
        %v4289 = vpop.f32.mrf.mxu0
        %v4290 = vadd.f32 0.0, %v4289
        %v4291 = vpop.f32.mrf.mxu0
        %v4292 = vadd.f32 0.0, %v4291
        %4293 = vdwg.mxu0
        %4294 = vmatpush.bf16.msra.mxu0 %v4100
        %4295 = vmatpush.bf16.msra.mxu0 %v4099
        %4296 = vmatpush.bf16.msra.mxu0 %v4098
        %4297 = vmatpush.bf16.msra.mxu0 %v4097
        %4298 = vmatpush.bf16.msra.mxu0 %v4096
        %4299 = vmatpush.bf16.msra.mxu0 %v4095
        %4300 = vmatpush.bf16.msra.mxu0 %v4094
        %4301 = vmatpush.bf16.msra.mxu0 %v4093
        %4302 = vmatmul.bf16.gmra.mxu0 %v3693
        %v4303 = vpop.f32.mrf.mxu0
        %v4304 = vadd.f32 %v4215, %v4303
        %v4305 = vpop.f32.mrf.mxu0
        %v4306 = vadd.f32 %v4217, %v4305
        %4307 = vmatmul.bf16.gmra.mxu0 %v3697
        %v4308 = vpop.f32.mrf.mxu0
        %v4309 = vadd.f32 %v4220, %v4308
        %v4310 = vpop.f32.mrf.mxu0
        %v4311 = vadd.f32 %v4222, %v4310
        %4312 = vmatmul.bf16.gmra.mxu0 %v3701
        %v4313 = vpop.f32.mrf.mxu0
        %v4314 = vadd.f32 %v4225, %v4313
        %v4315 = vpop.f32.mrf.mxu0
        %v4316 = vadd.f32 %v4227, %v4315
        %4317 = vmatmul.bf16.gmra.mxu0 %v3705
        %v4318 = vpop.f32.mrf.mxu0
        %v4319 = vadd.f32 %v4230, %v4318
        %v4320 = vpop.f32.mrf.mxu0
        %v4321 = vadd.f32 %v4232, %v4320
        %4322 = vmatmul.bf16.gmra.mxu0 %v3709
        %v4323 = vpop.f32.mrf.mxu0
        %v4324 = vadd.f32 %v4235, %v4323
        %v4325 = vpop.f32.mrf.mxu0
        %v4326 = vadd.f32 %v4237, %v4325
        %4327 = vmatmul.bf16.gmra.mxu0 %v3713
        %v4328 = vpop.f32.mrf.mxu0
        %v4329 = vadd.f32 %v4240, %v4328
        %v4330 = vpop.f32.mrf.mxu0
        %v4331 = vadd.f32 %v4242, %v4330
        %4332 = vmatmul.bf16.gmra.mxu0 %v3717
        %v4333 = vpop.f32.mrf.mxu0
        %v4334 = vadd.f32 %v4245, %v4333
        %v4335 = vpop.f32.mrf.mxu0
        %v4336 = vadd.f32 %v4247, %v4335
        %4337 = vmatmul.bf16.gmra.mxu0 %v3721
        %v4338 = vpop.f32.mrf.mxu0
        %v4339 = vadd.f32 %v4250, %v4338
        %v4340 = vpop.f32.mrf.mxu0
        %v4341 = vadd.f32 %v4252, %v4340
        %4342 = vmatmul.bf16.gmra.mxu0 %v3725
        %v4343 = vpop.f32.mrf.mxu0
        %v4344 = vadd.f32 %v4255, %v4343
        %v4345 = vpop.f32.mrf.mxu0
        %v4346 = vadd.f32 %v4257, %v4345
        %4347 = vmatmul.bf16.gmra.mxu0 %v3729
        %v4348 = vpop.f32.mrf.mxu0
        %v4349 = vadd.f32 %v4260, %v4348
        %v4350 = vpop.f32.mrf.mxu0
        %v4351 = vadd.f32 %v4262, %v4350
        %4352 = vmatmul.bf16.gmra.mxu0 %v3733
        %v4353 = vpop.f32.mrf.mxu0
        %v4354 = vadd.f32 %v4265, %v4353
        %v4355 = vpop.f32.mrf.mxu0
        %v4356 = vadd.f32 %v4267, %v4355
        %4357 = vmatmul.bf16.gmra.mxu0 %v3737
        %v4358 = vpop.f32.mrf.mxu0
        %v4359 = vadd.f32 %v4270, %v4358
        %v4360 = vpop.f32.mrf.mxu0
        %v4361 = vadd.f32 %v4272, %v4360
        %4362 = vmatmul.bf16.gmra.mxu0 %v3741
        %v4363 = vpop.f32.mrf.mxu0
        %v4364 = vadd.f32 %v4275, %v4363
        %v4365 = vpop.f32.mrf.mxu0
        %v4366 = vadd.f32 %v4277, %v4365
        %4367 = vmatmul.bf16.gmra.mxu0 %v3745
        %v4368 = vpop.f32.mrf.mxu0
        %v4369 = vadd.f32 %v4280, %v4368
        %v4370 = vpop.f32.mrf.mxu0
        %v4371 = vadd.f32 %v4282, %v4370
        %4372 = vmatmul.bf16.gmra.mxu0 %v3749
        %v4373 = vpop.f32.mrf.mxu0
        %v4374 = vadd.f32 %v4285, %v4373
        %v4375 = vpop.f32.mrf.mxu0
        %v4376 = vadd.f32 %v4287, %v4375
        %4377 = vmatmul.bf16.gmra.mxu0 %v3753
        %v4378 = vpop.f32.mrf.mxu0
        %v4379 = vadd.f32 %v4290, %v4378
        %v4380 = vpop.f32.mrf.mxu0
        %v4381 = vadd.f32 %v4292, %v4380
        %4382 = vdwg.mxu0
        %4383 = vmatpush.bf16.msra.mxu0 %v4108
        %4384 = vmatpush.bf16.msra.mxu0 %v4107
        %4385 = vmatpush.bf16.msra.mxu0 %v4106
        %4386 = vmatpush.bf16.msra.mxu0 %v4105
        %4387 = vmatpush.bf16.msra.mxu0 %v4104
        %4388 = vmatpush.bf16.msra.mxu0 %v4103
        %4389 = vmatpush.bf16.msra.mxu0 %v4102
        %4390 = vmatpush.bf16.msra.mxu0 %v4101
        %4391 = vmatmul.bf16.gmra.mxu0 %v3757
        %v4392 = vpop.f32.mrf.mxu0
        %v4393 = vadd.f32 %v4304, %v4392
        %v4394 = vpop.f32.mrf.mxu0
        %v4395 = vadd.f32 %v4306, %v4394
        %4396 = vmatmul.bf16.gmra.mxu0 %v3761
        %v4397 = vpop.f32.mrf.mxu0
        %v4398 = vadd.f32 %v4309, %v4397
        %v4399 = vpop.f32.mrf.mxu0
        %v4400 = vadd.f32 %v4311, %v4399
        %4401 = vmatmul.bf16.gmra.mxu0 %v3765
        %v4402 = vpop.f32.mrf.mxu0
        %v4403 = vadd.f32 %v4314, %v4402
        %v4404 = vpop.f32.mrf.mxu0
        %v4405 = vadd.f32 %v4316, %v4404
        %4406 = vmatmul.bf16.gmra.mxu0 %v3769
        %v4407 = vpop.f32.mrf.mxu0
        %v4408 = vadd.f32 %v4319, %v4407
        %v4409 = vpop.f32.mrf.mxu0
        %v4410 = vadd.f32 %v4321, %v4409
        %4411 = vmatmul.bf16.gmra.mxu0 %v3773
        %v4412 = vpop.f32.mrf.mxu0
        %v4413 = vadd.f32 %v4324, %v4412
        %v4414 = vpop.f32.mrf.mxu0
        %v4415 = vadd.f32 %v4326, %v4414
        %4416 = vmatmul.bf16.gmra.mxu0 %v3777
        %v4417 = vpop.f32.mrf.mxu0
        %v4418 = vadd.f32 %v4329, %v4417
        %v4419 = vpop.f32.mrf.mxu0
        %v4420 = vadd.f32 %v4331, %v4419
        %4421 = vmatmul.bf16.gmra.mxu0 %v3781
        %v4422 = vpop.f32.mrf.mxu0
        %v4423 = vadd.f32 %v4334, %v4422
        %v4424 = vpop.f32.mrf.mxu0
        %v4425 = vadd.f32 %v4336, %v4424
        %4426 = vmatmul.bf16.gmra.mxu0 %v3785
        %v4427 = vpop.f32.mrf.mxu0
        %v4428 = vadd.f32 %v4339, %v4427
        %v4429 = vpop.f32.mrf.mxu0
        %v4430 = vadd.f32 %v4341, %v4429
        %4431 = vmatmul.bf16.gmra.mxu0 %v3789
        %v4432 = vpop.f32.mrf.mxu0
        %v4433 = vadd.f32 %v4344, %v4432
        %v4434 = vpop.f32.mrf.mxu0
        %v4435 = vadd.f32 %v4346, %v4434
        %4436 = vmatmul.bf16.gmra.mxu0 %v3793
        %v4437 = vpop.f32.mrf.mxu0
        %v4438 = vadd.f32 %v4349, %v4437
        %v4439 = vpop.f32.mrf.mxu0
        %v4440 = vadd.f32 %v4351, %v4439
        %4441 = vmatmul.bf16.gmra.mxu0 %v3797
        %v4442 = vpop.f32.mrf.mxu0
        %v4443 = vadd.f32 %v4354, %v4442
        %v4444 = vpop.f32.mrf.mxu0
        %v4445 = vadd.f32 %v4356, %v4444
        %4446 = vmatmul.bf16.gmra.mxu0 %v3801
        %v4447 = vpop.f32.mrf.mxu0
        %v4448 = vadd.f32 %v4359, %v4447
        %v4449 = vpop.f32.mrf.mxu0
        %v4450 = vadd.f32 %v4361, %v4449
        %4451 = vmatmul.bf16.gmra.mxu0 %v3805
        %v4452 = vpop.f32.mrf.mxu0
        %v4453 = vadd.f32 %v4364, %v4452
        %v4454 = vpop.f32.mrf.mxu0
        %v4455 = vadd.f32 %v4366, %v4454
        %4456 = vmatmul.bf16.gmra.mxu0 %v3809
        %v4457 = vpop.f32.mrf.mxu0
        %v4458 = vadd.f32 %v4369, %v4457
        %v4459 = vpop.f32.mrf.mxu0
        %v4460 = vadd.f32 %v4371, %v4459
        %4461 = vmatmul.bf16.gmra.mxu0 %v3813
        %v4462 = vpop.f32.mrf.mxu0
        %v4463 = vadd.f32 %v4374, %v4462
        %v4464 = vpop.f32.mrf.mxu0
        %v4465 = vadd.f32 %v4376, %v4464
        %4466 = vmatmul.bf16.gmra.mxu0 %v3817
        %v4467 = vpop.f32.mrf.mxu0
        %v4468 = vadd.f32 %v4379, %v4467
        %v4469 = vpop.f32.mrf.mxu0
        %v4470 = vadd.f32 %v4381, %v4469
        %4471 = vdwg.mxu0
        %4472 = vmatpush.bf16.msra.mxu0 %v4116
        %4473 = vmatpush.bf16.msra.mxu0 %v4115
        %4474 = vmatpush.bf16.msra.mxu0 %v4114
        %4475 = vmatpush.bf16.msra.mxu0 %v4113
        %4476 = vmatpush.bf16.msra.mxu0 %v4112
        %4477 = vmatpush.bf16.msra.mxu0 %v4111
        %4478 = vmatpush.bf16.msra.mxu0 %v4110
        %4479 = vmatpush.bf16.msra.mxu0 %v4109
        %4480 = vmatmul.bf16.gmra.mxu0 %v3820
        %v4481 = vpop.f32.mrf.mxu0
        %v4482 = vadd.f32 %v4393, %v4481
        %v4483 = vpop.f32.mrf.mxu0
        %v4484 = vadd.f32 %v4395, %v4483
        %4485 = vmatmul.bf16.gmra.mxu0 %v3823
        %v4486 = vpop.f32.mrf.mxu0
        %v4487 = vadd.f32 %v4398, %v4486
        %v4488 = vpop.f32.mrf.mxu0
        %v4489 = vadd.f32 %v4400, %v4488
        %4490 = vmatmul.bf16.gmra.mxu0 %v3826
        %v4491 = vpop.f32.mrf.mxu0
        %v4492 = vadd.f32 %v4403, %v4491
        %v4493 = vpop.f32.mrf.mxu0
        %v4494 = vadd.f32 %v4405, %v4493
        %4495 = vmatmul.bf16.gmra.mxu0 %v3829
        %v4496 = vpop.f32.mrf.mxu0
        %v4497 = vadd.f32 %v4408, %v4496
        %v4498 = vpop.f32.mrf.mxu0
        %v4499 = vadd.f32 %v4410, %v4498
        %4500 = vmatmul.bf16.gmra.mxu0 %v3832
        %v4501 = vpop.f32.mrf.mxu0
        %v4502 = vadd.f32 %v4413, %v4501
        %v4503 = vpop.f32.mrf.mxu0
        %v4504 = vadd.f32 %v4415, %v4503
        %4505 = vmatmul.bf16.gmra.mxu0 %v3835
        %v4506 = vpop.f32.mrf.mxu0
        %v4507 = vadd.f32 %v4418, %v4506
        %v4508 = vpop.f32.mrf.mxu0
        %v4509 = vadd.f32 %v4420, %v4508
        %4510 = vmatmul.bf16.gmra.mxu0 %v3838
        %v4511 = vpop.f32.mrf.mxu0
        %v4512 = vadd.f32 %v4423, %v4511
        %v4513 = vpop.f32.mrf.mxu0
        %v4514 = vadd.f32 %v4425, %v4513
        %4515 = vmatmul.bf16.gmra.mxu0 %v3841
        %v4516 = vpop.f32.mrf.mxu0
        %v4517 = vadd.f32 %v4428, %v4516
        %v4518 = vpop.f32.mrf.mxu0
        %v4519 = vadd.f32 %v4430, %v4518
        %4520 = vmatmul.bf16.gmra.mxu0 %v3844
        %v4521 = vpop.f32.mrf.mxu0
        %v4522 = vadd.f32 %v4433, %v4521
        %v4523 = vpop.f32.mrf.mxu0
        %v4524 = vadd.f32 %v4435, %v4523
        %4525 = vmatmul.bf16.gmra.mxu0 %v3847
        %v4526 = vpop.f32.mrf.mxu0
        %v4527 = vadd.f32 %v4438, %v4526
        %v4528 = vpop.f32.mrf.mxu0
        %v4529 = vadd.f32 %v4440, %v4528
        %4530 = vmatmul.bf16.gmra.mxu0 %v3850
        %v4531 = vpop.f32.mrf.mxu0
        %v4532 = vadd.f32 %v4443, %v4531
        %v4533 = vpop.f32.mrf.mxu0
        %v4534 = vadd.f32 %v4445, %v4533
        %4535 = vmatmul.bf16.gmra.mxu0 %v3853
        %v4536 = vpop.f32.mrf.mxu0
        %v4537 = vadd.f32 %v4448, %v4536
        %v4538 = vpop.f32.mrf.mxu0
        %v4539 = vadd.f32 %v4450, %v4538
        %4540 = vmatmul.bf16.gmra.mxu0 %v3856
        %v4541 = vpop.f32.mrf.mxu0
        %v4542 = vadd.f32 %v4453, %v4541
        %v4543 = vpop.f32.mrf.mxu0
        %v4544 = vadd.f32 %v4455, %v4543
        %4545 = vmatmul.bf16.gmra.mxu0 %v3859
        %v4546 = vpop.f32.mrf.mxu0
        %v4547 = vadd.f32 %v4458, %v4546
        %v4548 = vpop.f32.mrf.mxu0
        %v4549 = vadd.f32 %v4460, %v4548
        %4550 = vmatmul.bf16.gmra.mxu0 %v3863
        %v4551 = vpop.f32.mrf.mxu0
        %v4552 = vadd.f32 %v4463, %v4551
        %v4553 = vpop.f32.mrf.mxu0
        %v4554 = vadd.f32 %v4465, %v4553
        %4555 = vmatmul.bf16.gmra.mxu0 %v3867
        %v4556 = vpop.f32.mrf.mxu0
        %v4557 = vadd.f32 %v4468, %v4556
        %v4558 = vpop.f32.mrf.mxu0
        %v4559 = vadd.f32 %v4470, %v4558
        %4560 = vdwg.mxu0
        %4561 = vmatpush.bf16.msra.mxu0 0
        %4562 = vmatpush.bf16.msra.mxu0 0
        %4563 = vmatpush.bf16.msra.mxu0 0
        %4564 = vmatpush.bf16.msra.mxu0 0
        %4565 = vmatpush.bf16.msra.mxu0 %v4120
        %4566 = vmatpush.bf16.msra.mxu0 %v4119
        %4567 = vmatpush.bf16.msra.mxu0 %v4118
        %4568 = vmatpush.bf16.msra.mxu0 %v4117
        %4569 = vmatmul.bf16.gmra.mxu0 %v4158
        %v4570 = vpop.f32.mrf.mxu0
        %v4571 = vadd.f32 %v4482, %v4570
        %v4572 = vpop.f32.mrf.mxu0
        %v4573 = vadd.f32 %v4484, %v4572
        %4574 = vmatmul.bf16.gmra.mxu0 %v4161
        %v4575 = vpop.f32.mrf.mxu0
        %v4576 = vadd.f32 %v4487, %v4575
        %v4577 = vpop.f32.mrf.mxu0
        %v4578 = vadd.f32 %v4489, %v4577
        %4579 = vmatmul.bf16.gmra.mxu0 %v4164
        %v4580 = vpop.f32.mrf.mxu0
        %v4581 = vadd.f32 %v4492, %v4580
        %v4582 = vpop.f32.mrf.mxu0
        %v4583 = vadd.f32 %v4494, %v4582
        %4584 = vmatmul.bf16.gmra.mxu0 %v4167
        %v4585 = vpop.f32.mrf.mxu0
        %v4586 = vadd.f32 %v4497, %v4585
        %v4587 = vpop.f32.mrf.mxu0
        %v4588 = vadd.f32 %v4499, %v4587
        %4589 = vmatmul.bf16.gmra.mxu0 %v4170
        %v4590 = vpop.f32.mrf.mxu0
        %v4591 = vadd.f32 %v4502, %v4590
        %v4592 = vpop.f32.mrf.mxu0
        %v4593 = vadd.f32 %v4504, %v4592
        %4594 = vmatmul.bf16.gmra.mxu0 %v4173
        %v4595 = vpop.f32.mrf.mxu0
        %v4596 = vadd.f32 %v4507, %v4595
        %v4597 = vpop.f32.mrf.mxu0
        %v4598 = vadd.f32 %v4509, %v4597
        %4599 = vmatmul.bf16.gmra.mxu0 %v4176
        %v4600 = vpop.f32.mrf.mxu0
        %v4601 = vadd.f32 %v4512, %v4600
        %v4602 = vpop.f32.mrf.mxu0
        %v4603 = vadd.f32 %v4514, %v4602
        %4604 = vmatmul.bf16.gmra.mxu0 %v4179
        %v4605 = vpop.f32.mrf.mxu0
        %v4606 = vadd.f32 %v4517, %v4605
        %v4607 = vpop.f32.mrf.mxu0
        %v4608 = vadd.f32 %v4519, %v4607
        %4609 = vmatmul.bf16.gmra.mxu0 %v4182
        %v4610 = vpop.f32.mrf.mxu0
        %v4611 = vadd.f32 %v4522, %v4610
        %v4612 = vpop.f32.mrf.mxu0
        %v4613 = vadd.f32 %v4524, %v4612
        %4614 = vmatmul.bf16.gmra.mxu0 %v4185
        %v4615 = vpop.f32.mrf.mxu0
        %v4616 = vadd.f32 %v4527, %v4615
        %v4617 = vpop.f32.mrf.mxu0
        %v4618 = vadd.f32 %v4529, %v4617
        %4619 = vmatmul.bf16.gmra.mxu0 %v4188
        %v4620 = vpop.f32.mrf.mxu0
        %v4621 = vadd.f32 %v4532, %v4620
        %v4622 = vpop.f32.mrf.mxu0
        %v4623 = vadd.f32 %v4534, %v4622
        %4624 = vmatmul.bf16.gmra.mxu0 %v4191
        %v4625 = vpop.f32.mrf.mxu0
        %v4626 = vadd.f32 %v4537, %v4625
        %v4627 = vpop.f32.mrf.mxu0
        %v4628 = vadd.f32 %v4539, %v4627
        %4629 = vmatmul.bf16.gmra.mxu0 %v4194
        %v4630 = vpop.f32.mrf.mxu0
        %v4631 = vadd.f32 %v4542, %v4630
        %v4632 = vpop.f32.mrf.mxu0
        %v4633 = vadd.f32 %v4544, %v4632
        %4634 = vmatmul.bf16.gmra.mxu0 %v4197
        %v4635 = vpop.f32.mrf.mxu0
        %v4636 = vadd.f32 %v4547, %v4635
        %v4637 = vpop.f32.mrf.mxu0
        %v4638 = vadd.f32 %v4549, %v4637
        %4639 = vmatmul.bf16.gmra.mxu0 %v4200
        %v4640 = vpop.f32.mrf.mxu0
        %v4641 = vadd.f32 %v4552, %v4640
        %v4642 = vpop.f32.mrf.mxu0
        %v4643 = vadd.f32 %v4554, %v4642
        %4644 = vmatmul.bf16.gmra.mxu0 %v4203
        %v4645 = vpop.f32.mrf.mxu0
        %v4646 = vadd.f32 %v4557, %v4645
        %v4647 = vpop.f32.mrf.mxu0
        %v4648 = vadd.f32 %v4559, %v4647
        %4649 = vdwg.mxu0
        %v4650 = vpack.c.bf16 %v465, %v464
        %v4651 = vpack.c.bf16 %v467, %v466
        %v4652 = vpack.c.bf16 %v469, %v468
        %v4653 = vpack.c.bf16 %v471, %v470
        %v4654 = vpack.c.bf16 %v473, %v472
        %v4655 = vpack.c.bf16 %v475, %v474
        %v4656 = vpack.c.bf16 %v477, %v476
        %v4657 = vpack.c.bf16 %v479, %v478
        %v4658 = vpack.c.bf16 %v497, %v496
        %v4659 = vpack.c.bf16 %v499, %v498
        %v4660 = vpack.c.bf16 %v501, %v500
        %v4661 = vpack.c.bf16 %v503, %v502
        %v4662 = vpack.c.bf16 %v505, %v504
        %v4663 = vpack.c.bf16 %v507, %v506
        %v4664 = vpack.c.bf16 %v509, %v508
        %v4665 = vpack.c.bf16 %v511, %v510
        %v4666 = vld [vmem:[%s11] sm:$0xf]
        %v4667 = vld [vmem:[%s11 + $0x4] sm:$0xf]
        %v4668 = vld [vmem:[%s11 + $0x8] sm:$0xf]
        %v4669 = vld [vmem:[%s11 + $0xc] sm:$0xf]
        %v4670 = vld [vmem:[%s12] sm:$0x1]
        %v4672 = vperm.slane %v4670, 0
        %v4678 = vunpack.c.l.b16 %v4666
        %v4679 = vunpack.c.l.b16 %v4667
        %v4680 = vunpack.c.l.b16 %v4668
        %v4681 = vunpack.c.l.b16 %v4669
        %v4682 = vpack.c.b16 %v4679, %v4678
        %v4683 = vpack.c.b16 %v4681, %v4680
        %v4687 = vsel %vm512, %v4650, 0
        %v4690 = vsel %vm512, %v4651, 0
        %v4693 = vsel %vm512, %v4652, 0
        %v4696 = vsel %vm512, %v4653, 0
        %v4699 = vsel %vm512, %v4654, 0
        %v4702 = vsel %vm512, %v4655, 0
        %v4705 = vsel %vm512, %v4656, 0
        %v4708 = vsel %vm512, %v4657, 0
        %v4711 = vsel %vm512, %v4658, 0
        %v4714 = vsel %vm512, %v4659, 0
        %v4717 = vsel %vm512, %v4660, 0
        %v4720 = vsel %vm512, %v4661, 0
        %v4723 = vsel %vm512, %v4662, 0
        %v4726 = vsel %vm512, %v4663, 0
        %v4729 = vsel %vm512, %v4664, 0
        %v4732 = vsel %vm512, %v4665, 0
        %4734 = vmatpush.bf16.msra.mxu0 0
        %4735 = vmatpush.bf16.msra.mxu0 0
        %4736 = vmatpush.bf16.msra.mxu0 0
        %4737 = vmatpush.bf16.msra.mxu0 0
        %4738 = vmatpush.bf16.msra.mxu0 0
        %4739 = vmatpush.bf16.msra.mxu0 0
        %4740 = vmatpush.bf16.msra.mxu0 %v4683
        %4741 = vmatpush.bf16.msra.mxu0 %v4682
        %4742 = vmatmul.bf16.gmra.mxu0 %v4687
        %v4743 = vpop.f32.mrf.mxu0
        %v4744 = vadd.f32 %v4672, %v4743
        %v4745 = vpop.f32.mrf.mxu0
        %v4746 = vadd.f32 %v4672, %v4745
        %4747 = vmatmul.bf16.gmra.mxu0 %v4690
        %v4748 = vpop.f32.mrf.mxu0
        %v4749 = vadd.f32 %v4672, %v4748
        %v4750 = vpop.f32.mrf.mxu0
        %v4751 = vadd.f32 %v4672, %v4750
        %4752 = vmatmul.bf16.gmra.mxu0 %v4693
        %v4753 = vpop.f32.mrf.mxu0
        %v4754 = vadd.f32 %v4672, %v4753
        %v4755 = vpop.f32.mrf.mxu0
        %v4756 = vadd.f32 %v4672, %v4755
        %4757 = vmatmul.bf16.gmra.mxu0 %v4696
        %v4758 = vpop.f32.mrf.mxu0
        %v4759 = vadd.f32 %v4672, %v4758
        %v4760 = vpop.f32.mrf.mxu0
        %v4761 = vadd.f32 %v4672, %v4760
        %4762 = vmatmul.bf16.gmra.mxu0 %v4699
        %v4763 = vpop.f32.mrf.mxu0
        %v4764 = vadd.f32 %v4672, %v4763
        %v4765 = vpop.f32.mrf.mxu0
        %v4766 = vadd.f32 %v4672, %v4765
        %4767 = vmatmul.bf16.gmra.mxu0 %v4702
        %v4768 = vpop.f32.mrf.mxu0
        %v4769 = vadd.f32 %v4672, %v4768
        %v4770 = vpop.f32.mrf.mxu0
        %v4771 = vadd.f32 %v4672, %v4770
        %4772 = vmatmul.bf16.gmra.mxu0 %v4705
        %v4773 = vpop.f32.mrf.mxu0
        %v4774 = vadd.f32 %v4672, %v4773
        %v4775 = vpop.f32.mrf.mxu0
        %v4776 = vadd.f32 %v4672, %v4775
        %4777 = vmatmul.bf16.gmra.mxu0 %v4708
        %v4778 = vpop.f32.mrf.mxu0
        %v4779 = vadd.f32 %v4672, %v4778
        %v4780 = vpop.f32.mrf.mxu0
        %v4781 = vadd.f32 %v4672, %v4780
        %4782 = vmatmul.bf16.gmra.mxu0 %v4711
        %v4783 = vpop.f32.mrf.mxu0
        %v4784 = vadd.f32 %v4672, %v4783
        %v4785 = vpop.f32.mrf.mxu0
        %v4786 = vadd.f32 %v4672, %v4785
        %4787 = vmatmul.bf16.gmra.mxu0 %v4714
        %v4788 = vpop.f32.mrf.mxu0
        %v4789 = vadd.f32 %v4672, %v4788
        %v4790 = vpop.f32.mrf.mxu0
        %v4791 = vadd.f32 %v4672, %v4790
        %4792 = vmatmul.bf16.gmra.mxu0 %v4717
        %v4793 = vpop.f32.mrf.mxu0
        %v4794 = vadd.f32 %v4672, %v4793
        %v4795 = vpop.f32.mrf.mxu0
        %v4796 = vadd.f32 %v4672, %v4795
        %4797 = vmatmul.bf16.gmra.mxu0 %v4720
        %v4798 = vpop.f32.mrf.mxu0
        %v4799 = vadd.f32 %v4672, %v4798
        %v4800 = vpop.f32.mrf.mxu0
        %v4801 = vadd.f32 %v4672, %v4800
        %4802 = vmatmul.bf16.gmra.mxu0 %v4723
        %v4803 = vpop.f32.mrf.mxu0
        %v4804 = vadd.f32 %v4672, %v4803
        %v4805 = vpop.f32.mrf.mxu0
        %v4806 = vadd.f32 %v4672, %v4805
        %4807 = vmatmul.bf16.gmra.mxu0 %v4726
        %v4808 = vpop.f32.mrf.mxu0
        %v4809 = vadd.f32 %v4672, %v4808
        %v4810 = vpop.f32.mrf.mxu0
        %v4811 = vadd.f32 %v4672, %v4810
        %4812 = vmatmul.bf16.gmra.mxu0 %v4729
        %v4813 = vpop.f32.mrf.mxu0
        %v4814 = vadd.f32 %v4672, %v4813
        %v4815 = vpop.f32.mrf.mxu0
        %v4816 = vadd.f32 %v4672, %v4815
        %4817 = vmatmul.bf16.gmra.mxu0 %v4732
        %v4818 = vpop.f32.mrf.mxu0
        %v4819 = vadd.f32 %v4672, %v4818
        %v4820 = vpop.f32.mrf.mxu0
        %v4821 = vadd.f32 %v4672, %v4820
        %4822 = vdwg.mxu0
        %v4823 = vadd.f32 %v4744, %v4571
        %v4824 = vadd.f32 %v4746, %v4573
        %v4825 = vadd.f32 %v4749, %v4576
        %v4826 = vadd.f32 %v4751, %v4578
        %v4827 = vadd.f32 %v4754, %v4581
        %v4828 = vadd.f32 %v4756, %v4583
        %v4829 = vadd.f32 %v4759, %v4586
        %v4830 = vadd.f32 %v4761, %v4588
        %v4831 = vadd.f32 %v4764, %v4591
        %v4832 = vadd.f32 %v4766, %v4593
        %v4833 = vadd.f32 %v4769, %v4596
        %v4834 = vadd.f32 %v4771, %v4598
        %v4835 = vadd.f32 %v4774, %v4601
        %v4836 = vadd.f32 %v4776, %v4603
        %v4837 = vadd.f32 %v4779, %v4606
        %v4838 = vadd.f32 %v4781, %v4608
        %v4839 = vadd.f32 %v4784, %v4611
        %v4840 = vadd.f32 %v4786, %v4613
        %v4841 = vadd.f32 %v4789, %v4616
        %v4842 = vadd.f32 %v4791, %v4618
        %v4843 = vadd.f32 %v4794, %v4621
        %v4844 = vadd.f32 %v4796, %v4623
        %v4845 = vadd.f32 %v4799, %v4626
        %v4846 = vadd.f32 %v4801, %v4628
        %v4847 = vadd.f32 %v4804, %v4631
        %v4848 = vadd.f32 %v4806, %v4633
        %v4849 = vadd.f32 %v4809, %v4636
        %v4850 = vadd.f32 %v4811, %v4638
        %v4851 = vadd.f32 %v4814, %v4641
        %v4852 = vadd.f32 %v4816, %v4643
        %v4853 = vadd.f32 %v4819, %v4646
        %v4854 = vadd.f32 %v4821, %v4648
        %v4855 = vld [vmem:[%s10] sm:$0x1]
        %v4857 = vperm.slane %v4855, 0
        %v4859 = vadd.f32 %v4823, %v4857
        %v4860 = vadd.f32 %v4824, %v4857
        %v4861 = vadd.f32 %v4825, %v4857
        %v4862 = vadd.f32 %v4826, %v4857
        %v4863 = vadd.f32 %v4827, %v4857
        %v4864 = vadd.f32 %v4828, %v4857
        %v4865 = vadd.f32 %v4829, %v4857
        %v4866 = vadd.f32 %v4830, %v4857
        %v4867 = vadd.f32 %v4831, %v4857
        %v4868 = vadd.f32 %v4832, %v4857
        %v4869 = vadd.f32 %v4833, %v4857
        %v4870 = vadd.f32 %v4834, %v4857
        %v4871 = vadd.f32 %v4835, %v4857
        %v4872 = vadd.f32 %v4836, %v4857
        %v4873 = vadd.f32 %v4837, %v4857
        %v4874 = vadd.f32 %v4838, %v4857
        %v4875 = vadd.f32 %v4839, %v4857
        %v4876 = vadd.f32 %v4840, %v4857
        %v4877 = vadd.f32 %v4841, %v4857
        %v4878 = vadd.f32 %v4842, %v4857
        %v4879 = vadd.f32 %v4843, %v4857
        %v4880 = vadd.f32 %v4844, %v4857
        %v4881 = vadd.f32 %v4845, %v4857
        %v4882 = vadd.f32 %v4846, %v4857
        %v4883 = vadd.f32 %v4847, %v4857
        %v4884 = vadd.f32 %v4848, %v4857
        %v4885 = vadd.f32 %v4849, %v4857
        %v4886 = vadd.f32 %v4850, %v4857
        %v4887 = vadd.f32 %v4851, %v4857
        %v4888 = vadd.f32 %v4852, %v4857
        %v4889 = vadd.f32 %v4853, %v4857
        %v4890 = vadd.f32 %v4854, %v4857
        %4891 = vxpose.xlu0.b32.start [1/16] %v4859, 128
        %4892 = vxpose.xlu0.b32.cont [2/16] %v4860, 128
        %4893 = vxpose.xlu0.b32.cont [3/16] %v4861, 128
        %4894 = vxpose.xlu0.b32.cont [4/16] %v4862, 128
        %4895 = vxpose.xlu0.b32.cont [5/16] %v4863, 128
        %4896 = vxpose.xlu0.b32.cont [6/16] %v4864, 128
        %4897 = vxpose.xlu0.b32.cont [7/16] %v4865, 128
        %4898 = vxpose.xlu0.b32.cont [8/16] %v4866, 128
        %4899 = vxpose.xlu0.b32.cont [9/16] %v4867, 128
        %4900 = vxpose.xlu0.b32.cont [10/16] %v4868, 128
        %4901 = vxpose.xlu0.b32.cont [11/16] %v4869, 128
        %4902 = vxpose.xlu0.b32.cont [12/16] %v4870, 128
        %4903 = vxpose.xlu0.b32.cont [13/16] %v4871, 128
        %4904 = vxpose.xlu0.b32.cont [14/16] %v4872, 128
        %4905 = vxpose.xlu0.b32.cont [15/16] %v4873, 128
        %4906 = vxpose.xlu0.b32.end [16/16] %v4874, 128
        %v4907 = vpop.trf.xlu0
        %v4908 = vpop.trf.xlu0
        %v4909 = vpop.trf.xlu0
        %v4910 = vpop.trf.xlu0
        %v4911 = vpop.trf.xlu0
        %v4912 = vpop.trf.xlu0
        %v4913 = vpop.trf.xlu0
        %v4914 = vpop.trf.xlu0
        %v4915 = vpop.trf.xlu0
        %v4916 = vpop.trf.xlu0
        %v4917 = vpop.trf.xlu0
        %v4918 = vpop.trf.xlu0
        %v4919 = vpop.trf.xlu0
        %v4920 = vpop.trf.xlu0
        %v4921 = vpop.trf.xlu0
        %v4922 = vpop.trf.xlu0
        %4923 = vxpose.xlu0.b32.start [1/16] %v4875, 128
        %4924 = vxpose.xlu0.b32.cont [2/16] %v4876, 128
        %4925 = vxpose.xlu0.b32.cont [3/16] %v4877, 128
        %4926 = vxpose.xlu0.b32.cont [4/16] %v4878, 128
        %4927 = vxpose.xlu0.b32.cont [5/16] %v4879, 128
        %4928 = vxpose.xlu0.b32.cont [6/16] %v4880, 128
        %4929 = vxpose.xlu0.b32.cont [7/16] %v4881, 128
        %4930 = vxpose.xlu0.b32.cont [8/16] %v4882, 128
        %4931 = vxpose.xlu0.b32.cont [9/16] %v4883, 128
        %4932 = vxpose.xlu0.b32.cont [10/16] %v4884, 128
        %4933 = vxpose.xlu0.b32.cont [11/16] %v4885, 128
        %4934 = vxpose.xlu0.b32.cont [12/16] %v4886, 128
        %4935 = vxpose.xlu0.b32.cont [13/16] %v4887, 128
        %4936 = vxpose.xlu0.b32.cont [14/16] %v4888, 128
        %4937 = vxpose.xlu0.b32.cont [15/16] %v4889, 128
        %4938 = vxpose.xlu0.b32.end [16/16] %v4890, 128
        %v4939 = vpop.trf.xlu0
        %v4940 = vpop.trf.xlu0
        %v4941 = vpop.trf.xlu0
        %v4942 = vpop.trf.xlu0
        %v4943 = vpop.trf.xlu0
        %v4944 = vpop.trf.xlu0
        %v4945 = vpop.trf.xlu0
        %v4946 = vpop.trf.xlu0
        %v4947 = vpop.trf.xlu0
        %v4948 = vpop.trf.xlu0
        %v4949 = vpop.trf.xlu0
        %v4950 = vpop.trf.xlu0
        %v4951 = vpop.trf.xlu0
        %v4952 = vpop.trf.xlu0
        %v4953 = vpop.trf.xlu0
        %v4954 = vpop.trf.xlu0
        %4955 = vst [vmem:[%s433] sm:$0xff] %v4907
        %4956 = vst [vmem:[%s433 + $0x8] sm:$0xff] %v4939
        %4957 = vst [vmem:[%s433 + $0x10] sm:$0xff] %v4908
        %4958 = vst [vmem:[%s433 + $0x18] sm:$0xff] %v4940
        %4959 = vst [vmem:[%s433 + $0x20] sm:$0xff] %v4909
        %4960 = vst [vmem:[%s433 + $0x28] sm:$0xff] %v4941
        %4961 = vst [vmem:[%s433 + $0x30] sm:$0xff] %v4910
        %4962 = vst [vmem:[%s433 + $0x38] sm:$0xff] %v4942
        %4963 = vst [vmem:[%s433 + $0x40] sm:$0xff] %v4911
        %4964 = vst [vmem:[%s433 + $0x48] sm:$0xff] %v4943
        %4965 = vst [vmem:[%s433 + $0x50] sm:$0xff] %v4912
        %4966 = vst [vmem:[%s433 + $0x58] sm:$0xff] %v4944
        %4967 = vst [vmem:[%s433 + $0x60] sm:$0xff] %v4913
        %4968 = vst [vmem:[%s433 + $0x68] sm:$0xff] %v4945
        %4969 = vst [vmem:[%s433 + $0x70] sm:$0xff] %v4914
        %4970 = vst [vmem:[%s433 + $0x78] sm:$0xff] %v4946
        %s4971 = sand.u32 %s313, 1
        %s4972 = scalar_lea.sflag [#allocation4], %s4971
        %s4973 = sand.u32 %s313, 1
        %s4974 = smul.addr %s4973, 128
        %s4975 = scalar_lea.vmem [#allocation3], %s4974
        // Predicated region
        $region73: #{tpu_custom_call.1} parent=71 // pred_check
          %p4976 = pneg %p323
        $region74: #{tpu_custom_call.1} parent=71 // pred_check_branch
          %4978 = sbr.rel (%p4976) target = $region76
        $region75: #{tpu_custom_call.1} parent=71 // pred_region
          %4980 = vsyncadd %s4972, 0
          %s4981 = smul.addr %s27, 16
          %s4982 = smul.addr %s4981, 8
          %s4983 = scalar_lea.hbm %s13, %s4982
          %s4984 = sshll.u32 %s4975, 4
          %s4985 = int_to_ptr.vmem [resolvable:$true] %s4984
          %s4986 = sshll.u32 %s4983, 4
          %s4987 = int_to_ptr.hbm [resolvable:$true] %s4986
          %4992 = dma.vmem_to_hbm [thread:$0]  %s4985, 2048, %s4987, %s4972, 256, 256, 16
        $region76: #{tpu_custom_call.1} parent=71 // pred_fallthru
          _
      $region72: #{tpu_custom_call.1} parent=5 // pred_fallthru
        _
      %p4993 = scmp.le.s32.totalorder 2, %s22
      // Predicated region
      $region77: #{tpu_custom_call.1} parent=5 // pred_check
        %p4994 = pneg %p4993
      $region78: #{tpu_custom_call.1} parent=5 // pred_check_branch
        %4996 = sbr.rel (%p4994) target = $region80
      $region79: #{tpu_custom_call.1} parent=5 // pred_region
        %s4997 = ssub.s32 %s22, 2
        // Predicated region
        $region81: #{tpu_custom_call.1} parent=79 // pred_check
          %p4998 = pneg %p329
        $region82: #{tpu_custom_call.1} parent=79 // pred_check_branch
          %5000 = sbr.rel (%p4998) target = $region84
        $region83: #{tpu_custom_call.1} parent=79 // pred_region
          %s5001 = sand.u32 %s314, 1
          %s5002 = scalar_lea.sflag [#allocation4], %s5001
          %s5003 = sand.u32 %s314, 1
          %s5004 = smul.addr %s5003, 128
          %s5005 = scalar_lea.vmem [#allocation3], %s5004
          %5007 = dma.done %s5002, 2048
        $region84: #{tpu_custom_call.1} parent=79 // pred_fallthru
          _
      $region80: #{tpu_custom_call.1} parent=5 // pred_fallthru
        _
    $region6: #{tpu_custom_call.1} parent=1 // loop_footer
      %s26 = sadd.s32 1, %s22
    $region7: #{tpu_custom_call.1} parent=1 // loop_footer_branch
      %21 = sbr.rel target = $region3
    $region8: #{tpu_custom_call.1} parent=1 // loop_exit
      _
    %5008 = vsyncpa [#allocation4], 1
    %s5009 = scalar_lea.sflag [#allocation4], 1
    %5010 = vsyncpa %s5009, 1

</llo_original>
